<compile_context>
chip_gen: v6e
topology: v6e:2x2x1
jax: 0.10.0
libtpu: 0.0.40
codegen_flags: <defaults>
</compile_context>

<pallas_src>
import functools

import jax
import jax.numpy as jnp
from jax import lax
from jax.experimental import pallas as pl
from jax.experimental.pallas import tpu as pltpu


def _round_up(x, m):
    return ((x + m - 1) // m) * m


def _apply_act(y, act):
    if act == "relu":
        return jnp.maximum(y, 0.0)
    if act == "lrelu":
        return jnp.where(y >= 0.0, y, 0.2 * y)
    if act == "tanh":
        return jnp.tanh(y)
    if act == "sigmoid":
        return jax.nn.sigmoid(y)
    # TODO(synk): 'softmax' (channel softmax) needs a padded-channel validity
    # mask in this layout; not implemented.
    return y  # None / "none" -> identity


# -----------------------------------------------------------------------------
# Fused per-layer kernel:
#   prev layer's BN affine + activation (epilogue fusion, pads re-zeroed)
#   -> in-kernel im2col (9 lane-shifted taps, no HBM im2col matrix)
#   -> single K = 9*Cin bf16 matmul on the MXU (f32 accumulation)
#   -> per-image [sum, sumsq] stats for THIS layer's BatchNorm
#   -> bf16 conv output stored back in the same padded flat layout (pads zero)
# -----------------------------------------------------------------------------
def _fused_conv_stats_kernel(x_ref, w_ref, scale_ref, shift_ref, c_ref, stats_ref,
                             *, prev_act, img_w, hw, pad0, lp, cout):
    # x_ref     : (1, Cin, Lp)  bf16   previous conv output (pre-norm), padded flat layout
    # w_ref     : (Cout, 9*Cin) bf16   this layer's weights, K order (kh*3+kw)*Cin + ci
    # scale_ref : (Cin, 1) f32 ; shift_ref : (Cin, 1) f32   previous layer's BN affine
    # c_ref     : (1, Cout, Lp) bf16   this layer's conv output (pads zeroed)
    # stats_ref : (1, Cout, 2)  f32    per-image [sum, sumsq] over the valid HW pixels

    # ---- fused epilogue of the previous layer (f32 math) ----
    x = x_ref[0].astype(jnp.float32)                      # (Cin, Lp)
    y = x * scale_ref[...] + shift_ref[...]
    y = _apply_act(y, prev_act)
    lane = lax.broadcasted_iota(jnp.int32, (1, lp), 1)
    valid = (lane >= pad0) & (lane < pad0 + hw)
    y = jnp.where(valid, y, 0.0)                          # re-zero the padding halo

    # ---- in-kernel im2col: 9 static lane-shifted taps -> one (9*Cin, HW) panel ----
    col = lax.broadcasted_iota(jnp.int32, (1, hw), 1) % img_w   # column of each output pixel
    taps = []
    for kh in range(3):
        for kw in range(3):
            s = pad0 + (kh - 1) * img_w + (kw - 1)        # static lane offset (>= 0, <= Lp-HW)
            t = y[:, s:s + hw]                            # (Cin, HW): lane rotate + copy
            if kw == 0:
                t = jnp.where(col == 0, 0.0, t)           # left image edge
            elif kw == 2:
                t = jnp.where(col == img_w - 1, 0.0, t)   # right image edge
            taps.append(t)
    a = jnp.concatenate(taps, axis=0).astype(jnp.bfloat16)  # (9*Cin, HW), bf16 for the MXU

    # ---- single big-K matmul (MXU), f32 accumulation ----
    c = jnp.dot(w_ref[...], a, preferred_element_type=jnp.float32)   # (Cout, HW)

    # ---- per-image BN statistics for THIS layer (written once per image) ----
    s1 = jnp.sum(c, axis=1, keepdims=True)
    s2 = jnp.sum(c * c, axis=1, keepdims=True)
    stats_ref[0] = jnp.concatenate([s1, s2], axis=1)       # (Cout, 2)

    # ---- lane-dense full-block store of the bf16 conv output (pads zeroed) ----
    cb = c.astype(c_ref.dtype)
    zl = jnp.zeros((cout, pad0), c_ref.dtype)
    zr = jnp.zeros((cout, lp - pad0 - hw), c_ref.dtype)
    c_ref[0] = jnp.concatenate([zl, cb, zr], axis=1)


def _fused_conv_layer(x_p, w_mat, prev_scale, prev_shift, *, prev_act, img_w, hw, pad0, lp):
    n, cin, lp_in = x_p.shape
    cout, k = w_mat.shape
    assert lp_in == lp and k == 9 * cin
    kernel = functools.partial(_fused_conv_stats_kernel, prev_act=prev_act,
                               img_w=img_w, hw=hw, pad0=pad0, lp=lp, cout=cout)
    return pl.pallas_call(
        kernel,
        out_shape=(jax.ShapeDtypeStruct((n, cout, lp), jnp.bfloat16),
                   jax.ShapeDtypeStruct((n, cout, 2), jnp.float32)),
        grid=(n,),
        in_specs=[
            pl.BlockSpec((1, cin, lp), lambda i: (i, 0, 0)),      # one image per step
            pl.BlockSpec((cout, 9 * cin), lambda i: (0, 0)),       # weights stay resident
            pl.BlockSpec((cin, 1), lambda i: (0, 0)),
            pl.BlockSpec((cin, 1), lambda i: (0, 0)),
        ],
        out_specs=(
            pl.BlockSpec((1, cout, lp), lambda i: (i, 0, 0)),
            pl.BlockSpec((1, cout, 2), lambda i: (i, 0, 0)),
        ),
        compiler_params=pltpu.CompilerParams(dimension_semantics=("parallel",)),
    )(x_p, w_mat, prev_scale, prev_shift)


# -----------------------------------------------------------------------------
# Final epilogue: last layer's BN affine + activation, unpadded f32 output
# -----------------------------------------------------------------------------
def _epilogue_kernel(c_ref, scale_ref, shift_ref, o_ref, *, act, pad0, hw):
    c = c_ref[0].astype(jnp.float32)                       # (Cout, Lp)
    y = _apply_act(c * scale_ref[...] + shift_ref[...], act)
    o_ref[0] = y[:, pad0:pad0 + hw].astype(o_ref.dtype)    # aligned slice, full-block store


def _epilogue_layer(c_p, scale, shift, *, act, pad0, hw):
    n, cout, lp = c_p.shape
    kernel = functools.partial(_epilogue_kernel, act=act, pad0=pad0, hw=hw)
    return pl.pallas_call(
        kernel,
        out_shape=jax.ShapeDtypeStruct((n, cout, hw), jnp.float32),
        grid=(n,),
        in_specs=[
            pl.BlockSpec((1, cout, lp), lambda i: (i, 0, 0)),
            pl.BlockSpec((cout, 1), lambda i: (0, 0)),
            pl.BlockSpec((cout, 1), lambda i: (0, 0)),
        ],
        out_specs=pl.BlockSpec((1, cout, hw), lambda i: (i, 0, 0)),
        compiler_params=pltpu.CompilerParams(dimension_semantics=("parallel",)),
    )(c_p, scale, shift)


# -----------------------------------------------------------------------------
# Plain-JAX glue (tiny): BN scale/shift from global stats, layout / weight prep
# -----------------------------------------------------------------------------
def _bn_affine(stats, gamma, beta, count, eps=1e-5):
    s1 = jnp.sum(stats[..., 0], axis=0)                    # (Cout,)
    s2 = jnp.sum(stats[..., 1], axis=0)
    mean = s1 / count
    var = jnp.maximum(s2 / count - mean * mean, 0.0)       # clamp: E[x^2]-E[x]^2 cancellation
    scale = gamma * lax.rsqrt(var + eps)
    shift = beta - mean * scale
    return (scale.reshape(-1, 1).astype(jnp.float32),
            shift.reshape(-1, 1).astype(jnp.float32))


def attention_net_forward(x, params, *, norm="BN", activation="relu"):
    """x: (N, in_channels, H, W) f32 -> (N, out_channels, H, W) f32.
    BatchNorm uses training-mode batch statistics (fresh nn.BatchNorm2d forward)."""
    n, cin, h, w = x.shape
    hw = h * w
    pad0 = _round_up(w + 1, 128)                  # >= W+1 zero halo, lane-aligned valid block
    lp = pad0 + _round_up(hw + w + 1, 128)        # trailing halo >= W+1, Lp multiple of 128
    cin_p = _round_up(cin, 8)

    # Whole-image-per-grid-step schedule; per-chip VMEM guard.
    # TODO(synk): for large images add row tiling (halo via manual DMA) + a second
    # 'parallel' spatial axis so v7x's second TensorCore is used when N == 1.
    max_c = max([_round_up(p[0].shape[0], 8) for p in params] + [cin_p])
    per_step = (4 * max_c * lp * 2                # double-buffered bf16 in/out blocks
                + max_c * 9 * max_c * 2           # resident weight block
                + 9 * max_c * hw * 6              # im2col panel (f32 build + bf16 copy)
                + 4 * max_c * lp * 4)             # f32 temporaries
    try:
        vmem_budget = pltpu.get_tpu_info().vmem_capacity_bytes // 4
    except Exception:
        vmem_budget = 16 * 1024 * 1024            # conservative (v5e scoped default)
    assert per_step < vmem_budget, "image too large for whole-image tiles; needs row tiling"

    # Input -> padded flat layout (N, Cin_p, Lp), bf16, zeros in halo / padded channels.
    xp = jnp.zeros((n, cin_p, lp), jnp.bfloat16)
    xp = xp.at[:, :cin, pad0:pad0 + hw].set(x.reshape(n, cin, hw).astype(jnp.bfloat16))

    cur = xp
    prev_scale = jnp.ones((cin_p, 1), jnp.float32)   # layer-1 input: no preceding norm/act
    prev_shift = jnp.zeros((cin_p, 1), jnp.float32)
    prev_act = "none"
    count = jnp.float32(n * hw)

    for (wt, gamma, beta) in params:
        cout, cin_l = wt.shape[0], wt.shape[1]
        cin_lp = _round_up(cin_l, 8)
        cout_p = _round_up(cout, 8)                  # Cout=3 padded to 8 (unmasked stores)
        assert cin_lp == cur.shape[1]

        # (Cout, Cin, 3, 3) -> (Cout_p, 9*Cin_p), K order (kh*3+kw)*Cin_p + ci, zero-padded.
        wp = jnp.zeros((cout_p, cin_lp, 3, 3), jnp.float32).at[:cout, :cin_l].set(wt)
        w_mat = wp.transpose(0, 2, 3, 1).reshape(cout_p, 9 * cin_lp).astype(jnp.bfloat16)

        cur, stats = _fused_conv_layer(cur, w_mat, prev_scale, prev_shift,
                                       prev_act=prev_act, img_w=w, hw=hw, pad0=pad0, lp=lp)

        if norm == "BN":
            gamma_p = jnp.ones((cout_p,), jnp.float32).at[:cout].set(gamma)
            beta_p = jnp.zeros((cout_p,), jnp.float32).at[:cout].set(beta)
            prev_scale, prev_shift = _bn_affine(stats, gamma_p, beta_p, count)
        else:
            # norm is None -> Identity.  TODO(synk): 'IN' / 'GN' norm variants not implemented.
            prev_scale = jnp.ones((cout_p, 1), jnp.float32)
            prev_shift = jnp.zeros((cout_p, 1), jnp.float32)
        prev_act = activation

    y = _epilogue_layer(cur, prev_scale, prev_shift, act=prev_act, pad0=pad0, hw=hw)
    out_channels = params[-1][0].shape[0]
    return y.reshape(n, -1, h, w)[:, :out_channels]


# -----------------------------------------------------------------------------
# Pure-JAX f32 reference (training-mode BN) and deterministic parameter init
# -----------------------------------------------------------------------------
def _reference_forward(x, params, eps=1e-5):
    for (wt, gamma, beta) in params:
        c = lax.conv_general_dilated(x, wt, (1, 1), ((1, 1), (1, 1)),
                                     dimension_numbers=("NCHW", "OIHW", "NCHW"))
        mean = c.mean(axis=(0, 2, 3), keepdims=True)
        var = c.var(axis=(0, 2, 3), keepdims=True)
        xhat = (c - mean) * lax.rsqrt(var + eps)
        x = jnp.maximum(gamma[None, :, None, None] * xhat + beta[None, :, None, None], 0.0)
    return x


def init_attention_params(key, in_channels=4, out_channels=3, ngf=8):
    specs = [(in_channels, ngf), (ngf, ngf * 2), (ngf * 2, ngf), (ngf, out_channels)]
    params = []
    for (cin, cout) in specs:
        key, k1, k2 = jax.random.split(key, 3)
        # DCGAN-style weights_init: conv ~ N(0, 0.02), BN gamma ~ N(1, 0.02), beta = 0
        w = 0.02 * jax.random.normal(k1, (cout, cin, 3, 3), jnp.float32)
        gamma = 1.0 + 0.02 * jax.random.normal(k2, (cout,), jnp.float32)
        beta = jnp.zeros((cout,), jnp.float32)
        params.append((w, gamma, beta))
    return params


if __name__ == "__main__":
    key = jax.random.PRNGKey(0)
    kx, kp = jax.random.split(key)

    N, Cin, H, W = 2, 4, 16, 16
    ngf, out_channels = 8, 3
    x = jax.random.normal(kx, (N, Cin, H, W), jnp.float32)
    params = init_attention_params(kp, in_channels=Cin, out_channels=out_channels, ngf=ngf)

    fwd = jax.jit(lambda xx, pp: attention_net_forward(xx, pp, norm="BN", activation="relu"))
    y = jax.block_until_ready(fwd(x, params))

    assert y.shape == (N, out_channels, H, W), y.shape
    assert bool(jnp.all(jnp.isfinite(y)))
    assert bool(jnp.all(y >= 0.0))          # final ReLU

    # bf16 weights/activations (f32 accumulation + f32 BN math) -> small deviation vs f32 ref
    y_ref = _reference_forward(x, params)
    rel = jnp.sqrt(jnp.sum((y - y_ref) ** 2)) / (jnp.sqrt(jnp.sum(y_ref ** 2)) + 1e-12)
    assert float(rel) < 0.05, float(rel)

    print("KERNEL_OK")
</pallas_src>

<mosaic_0001>
module attributes {stable_mosaic.version = 11 : i64} {
  func.func @_fused_conv_stats_kernel(%arg0: i32, %arg1: memref<1x8x512xbf16, #tpu.memory_space<vmem>>, %arg2: memref<16x72xbf16, #tpu.memory_space<vmem>>, %arg3: memref<8x1xf32, #tpu.memory_space<vmem>>, %arg4: memref<8x1xf32, #tpu.memory_space<vmem>>, %arg5: memref<1x16x512xbf16, #tpu.memory_space<vmem>>, %arg6: memref<1x16x2xf32, #tpu.memory_space<vmem>>) attributes {dimension_semantics = [#tpu.dimension_semantics<parallel>], iteration_bounds = array<i64: 2>, scalar_prefetch = 0 : i64, scratch_operands = 0 : i64, tpu.core_type = #tpu.core_type<tc>, window_params = [{transform_indices = @transform_0, window_bounds = array<i64: 1, 8, 512>}, {pipeline_mode = #tpu.pipeline_mode<synchronous>, transform_indices = @transform_1, window_bounds = array<i64: 16, 72>}, {pipeline_mode = #tpu.pipeline_mode<synchronous>, transform_indices = @transform_2, window_bounds = array<i64: 8, 1>}, {pipeline_mode = #tpu.pipeline_mode<synchronous>, transform_indices = @transform_3, window_bounds = array<i64: 8, 1>}, {transform_indices = @transform_4, window_bounds = array<i64: 1, 16, 512>}, {transform_indices = @transform_5, window_bounds = array<i64: 1, 16, 2>}]} {
    %c0 = arith.constant 0 : index
    %c0_0 = arith.constant 0 : index
    %c0_1 = arith.constant 0 : index
    %0 = vector.load %arg1[%c0, %c0_0, %c0_1] : memref<1x8x512xbf16, #tpu.memory_space<vmem>>, vector<1x8x512xbf16>
    %1 = vector.shape_cast %0 : vector<1x8x512xbf16> to vector<8x512xbf16>
    %2 = arith.extf %1 : vector<8x512xbf16> to vector<8x512xf32>
    %c0_2 = arith.constant 0 : index
    %c0_3 = arith.constant 0 : index
    %3 = vector.load %arg3[%c0_2, %c0_3] : memref<8x1xf32, #tpu.memory_space<vmem>>, vector<8x1xf32>
    %4 = vector.broadcast %3 : vector<8x1xf32> to vector<8x512xf32>
    %5 = arith.mulf %2, %4 : vector<8x512xf32>
    %c0_4 = arith.constant 0 : index
    %c0_5 = arith.constant 0 : index
    %6 = vector.load %arg4[%c0_4, %c0_5] : memref<8x1xf32, #tpu.memory_space<vmem>>, vector<8x1xf32>
    %7 = vector.broadcast %6 : vector<8x1xf32> to vector<8x512xf32>
    %8 = arith.addf %5, %7 : vector<8x512xf32>
    %cst = arith.constant 0.000000e+00 : f32
    %9 = vector.broadcast %cst : f32 to vector<8x512xf32>
    %10 = arith.maximumf %8, %9 : vector<8x512xf32>
    %11 = tpu.iota {dimensions = array<i32: 1>} : vector<1x512xi32>
    %c128_i32 = arith.constant 128 : i32
    %12 = vector.broadcast %c128_i32 : i32 to vector<1x512xi32>
    %13 = arith.cmpi sge, %11, %12 : vector<1x512xi32>
    %c384_i32 = arith.constant 384 : i32
    %14 = vector.broadcast %c384_i32 : i32 to vector<1x512xi32>
    %15 = arith.cmpi slt, %11, %14 : vector<1x512xi32>
    %16 = arith.andi %13, %15 : vector<1x512xi1>
    %cst_6 = arith.constant 0.000000e+00 : f32
    %17 = vector.shape_cast %16 : vector<1x512xi1> to vector<1x512xi1>
    %18 = vector.broadcast %17 : vector<1x512xi1> to vector<8x512xi1>
    %19 = vector.broadcast %cst_6 : f32 to vector<8x512xf32>
    %20 = arith.select %18, %10, %19 : vector<8x512xi1>, vector<8x512xf32>
    %21 = tpu.iota {dimensions = array<i32: 1>} : vector<1x256xi32>
    %c16_i32 = arith.constant 16 : i32
    %c0_i32 = arith.constant 0 : i32
    %22 = arith.cmpi eq, %c16_i32, %c0_i32 : i32
    %c1_i32 = arith.constant 1 : i32
    %23 = arith.select %22, %c1_i32, %c16_i32 : i32
    %24 = vector.broadcast %23 : i32 to vector<1x256xi32>
    %25 = arith.remsi %21, %24 : vector<1x256xi32>
    %c0_i32_7 = arith.constant 0 : i32
    %26 = vector.broadcast %c0_i32_7 : i32 to vector<1x256xi32>
    %27 = arith.cmpi ne, %25, %26 : vector<1x256xi32>
    %c0_i32_8 = arith.constant 0 : i32
    %28 = vector.broadcast %c0_i32_8 : i32 to vector<1x256xi32>
    %29 = arith.cmpi slt, %25, %28 : vector<1x256xi32>
    %c0_i32_9 = arith.constant 0 : i32
    %30 = arith.cmpi slt, %23, %c0_i32_9 : i32
    %31 = vector.broadcast %30 : i1 to vector<1x256xi1>
    %32 = vector.broadcast %31 : vector<1x256xi1> to vector<1x256xi1>
    %33 = arith.xori %29, %32 : vector<1x256xi1>
    %34 = arith.andi %33, %27 : vector<1x256xi1>
    %35 = vector.broadcast %23 : i32 to vector<1x256xi32>
    %36 = arith.addi %25, %35 : vector<1x256xi32>
    %37 = arith.select %34, %36, %25 : vector<1x256xi1>, vector<1x256xi32>
    %38 = vector.extract_strided_slice %20 {offsets = [0, 111], sizes = [8, 256], strides = [1, 1]} : vector<8x512xf32> to vector<8x256xf32>
    %c0_i32_10 = arith.constant 0 : i32
    %39 = vector.broadcast %c0_i32_10 : i32 to vector<1x256xi32>
    %40 = arith.cmpi eq, %37, %39 : vector<1x256xi32>
    %cst_11 = arith.constant 0.000000e+00 : f32
    %41 = vector.shape_cast %40 : vector<1x256xi1> to vector<1x256xi1>
    %42 = vector.broadcast %41 : vector<1x256xi1> to vector<8x256xi1>
    %43 = vector.broadcast %cst_11 : f32 to vector<8x256xf32>
    %44 = arith.select %42, %43, %38 : vector<8x256xi1>, vector<8x256xf32>
    %45 = vector.extract_strided_slice %20 {offsets = [0, 112], sizes = [8, 256], strides = [1, 1]} : vector<8x512xf32> to vector<8x256xf32>
    %46 = vector.extract_strided_slice %20 {offsets = [0, 113], sizes = [8, 256], strides = [1, 1]} : vector<8x512xf32> to vector<8x256xf32>
    %c15_i32 = arith.constant 15 : i32
    %47 = vector.broadcast %c15_i32 : i32 to vector<1x256xi32>
    %48 = arith.cmpi eq, %37, %47 : vector<1x256xi32>
    %cst_12 = arith.constant 0.000000e+00 : f32
    %49 = vector.shape_cast %48 : vector<1x256xi1> to vector<1x256xi1>
    %50 = vector.broadcast %49 : vector<1x256xi1> to vector<8x256xi1>
    %51 = vector.broadcast %cst_12 : f32 to vector<8x256xf32>
    %52 = arith.select %50, %51, %46 : vector<8x256xi1>, vector<8x256xf32>
    %53 = vector.extract_strided_slice %20 {offsets = [0, 127], sizes = [8, 256], strides = [1, 1]} : vector<8x512xf32> to vector<8x256xf32>
    %c0_i32_13 = arith.constant 0 : i32
    %54 = vector.broadcast %c0_i32_13 : i32 to vector<1x256xi32>
    %55 = arith.cmpi eq, %37, %54 : vector<1x256xi32>
    %cst_14 = arith.constant 0.000000e+00 : f32
    %56 = vector.shape_cast %55 : vector<1x256xi1> to vector<1x256xi1>
    %57 = vector.broadcast %56 : vector<1x256xi1> to vector<8x256xi1>
    %58 = vector.broadcast %cst_14 : f32 to vector<8x256xf32>
    %59 = arith.select %57, %58, %53 : vector<8x256xi1>, vector<8x256xf32>
    %60 = vector.extract_strided_slice %20 {offsets = [0, 128], sizes = [8, 256], strides = [1, 1]} : vector<8x512xf32> to vector<8x256xf32>
    %61 = vector.extract_strided_slice %20 {offsets = [0, 129], sizes = [8, 256], strides = [1, 1]} : vector<8x512xf32> to vector<8x256xf32>
    %c15_i32_15 = arith.constant 15 : i32
    %62 = vector.broadcast %c15_i32_15 : i32 to vector<1x256xi32>
    %63 = arith.cmpi eq, %37, %62 : vector<1x256xi32>
    %cst_16 = arith.constant 0.000000e+00 : f32
    %64 = vector.shape_cast %63 : vector<1x256xi1> to vector<1x256xi1>
    %65 = vector.broadcast %64 : vector<1x256xi1> to vector<8x256xi1>
    %66 = vector.broadcast %cst_16 : f32 to vector<8x256xf32>
    %67 = arith.select %65, %66, %61 : vector<8x256xi1>, vector<8x256xf32>
    %68 = vector.extract_strided_slice %20 {offsets = [0, 143], sizes = [8, 256], strides = [1, 1]} : vector<8x512xf32> to vector<8x256xf32>
    %c0_i32_17 = arith.constant 0 : i32
    %69 = vector.broadcast %c0_i32_17 : i32 to vector<1x256xi32>
    %70 = arith.cmpi eq, %37, %69 : vector<1x256xi32>
    %cst_18 = arith.constant 0.000000e+00 : f32
    %71 = vector.shape_cast %70 : vector<1x256xi1> to vector<1x256xi1>
    %72 = vector.broadcast %71 : vector<1x256xi1> to vector<8x256xi1>
    %73 = vector.broadcast %cst_18 : f32 to vector<8x256xf32>
    %74 = arith.select %72, %73, %68 : vector<8x256xi1>, vector<8x256xf32>
    %75 = vector.extract_strided_slice %20 {offsets = [0, 144], sizes = [8, 256], strides = [1, 1]} : vector<8x512xf32> to vector<8x256xf32>
    %76 = vector.extract_strided_slice %20 {offsets = [0, 145], sizes = [8, 256], strides = [1, 1]} : vector<8x512xf32> to vector<8x256xf32>
    %c15_i32_19 = arith.constant 15 : i32
    %77 = vector.broadcast %c15_i32_19 : i32 to vector<1x256xi32>
    %78 = arith.cmpi eq, %37, %77 : vector<1x256xi32>
    %cst_20 = arith.constant 0.000000e+00 : f32
    %79 = vector.shape_cast %78 : vector<1x256xi1> to vector<1x256xi1>
    %80 = vector.broadcast %79 : vector<1x256xi1> to vector<8x256xi1>
    %81 = vector.broadcast %cst_20 : f32 to vector<8x256xf32>
    %82 = arith.select %80, %81, %76 : vector<8x256xi1>, vector<8x256xf32>
    %83 = tpu.concatenate %44, %45, %52, %59, %60, %67, %74, %75, %82 in 0 : vector<8x256xf32>, vector<8x256xf32>, vector<8x256xf32>, vector<8x256xf32>, vector<8x256xf32>, vector<8x256xf32>, vector<8x256xf32>, vector<8x256xf32>, vector<8x256xf32> -> vector<72x256xf32>
    %84 = arith.truncf %83 : vector<72x256xf32> to vector<72x256xbf16>
    %c0_21 = arith.constant 0 : index
    %c0_22 = arith.constant 0 : index
    %85 = vector.load %arg2[%c0_21, %c0_22] : memref<16x72xbf16, #tpu.memory_space<vmem>>, vector<16x72xbf16>
    %cst_23 = arith.constant dense<0.000000e+00> : vector<16x256xf32>
    %86 = tpu.matmul %85, %84, %cst_23 {dimension_numbers = #tpu.dot_dimension_numbers<[1], [0], [0], [1], [0, 0, 1, 1], [], []>} : vector<16x72xbf16>, vector<72x256xbf16>, vector<16x256xf32> -> vector<16x256xf32>
    %cst_24 = arith.constant dense<0.000000e+00> : vector<16xf32>
    %87 = vector.multi_reduction <add>, %86, %cst_24 [1] : vector<16x256xf32> to vector<16xf32>
    %88 = vector.shape_cast %87 : vector<16xf32> to vector<16x1xf32>
    %89 = arith.mulf %86, %86 : vector<16x256xf32>
    %cst_25 = arith.constant dense<0.000000e+00> : vector<16xf32>
    %90 = vector.multi_reduction <add>, %89, %cst_25 [1] : vector<16x256xf32> to vector<16xf32>
    %91 = vector.shape_cast %90 : vector<16xf32> to vector<16x1xf32>
    %92 = tpu.concatenate %88, %91 in 1 : vector<16x1xf32>, vector<16x1xf32> -> vector<16x2xf32>
    %c0_26 = arith.constant 0 : index
    %c0_27 = arith.constant 0 : index
    %c0_28 = arith.constant 0 : index
    %93 = vector.load %arg6[%c0_26, %c0_27, %c0_28] : memref<1x16x2xf32, #tpu.memory_space<vmem>>, vector<1x16x2xf32>
    %94 = vector.shape_cast %93 : vector<1x16x2xf32> to vector<16x2xf32>
    %95 = vector.shape_cast %92 : vector<16x2xf32> to vector<1x16x2xf32>
    tpu.vector_store %arg6[%c0_26, %c0_27, %c0_28], %95 {strides = array<i32>} : memref<1x16x2xf32, #tpu.memory_space<vmem>>, vector<1x16x2xf32>,
    %96 = arith.truncf %86 : vector<16x256xf32> to vector<16x256xbf16>
    %cst_29 = arith.constant 0.000000e+00 : bf16
    %97 = vector.broadcast %cst_29 : bf16 to vector<16x128xbf16>
    %cst_30 = arith.constant 0.000000e+00 : bf16
    %98 = vector.broadcast %cst_30 : bf16 to vector<16x128xbf16>
    %99 = tpu.concatenate %97, %96, %98 in 1 : vector<16x128xbf16>, vector<16x256xbf16>, vector<16x128xbf16> -> vector<16x512xbf16>
    %c0_31 = arith.constant 0 : index
    %c0_32 = arith.constant 0 : index
    %c0_33 = arith.constant 0 : index
    %100 = vector.load %arg5[%c0_31, %c0_32, %c0_33] : memref<1x16x512xbf16, #tpu.memory_space<vmem>>, vector<1x16x512xbf16>
    %101 = vector.shape_cast %100 : vector<1x16x512xbf16> to vector<16x512xbf16>
    %102 = vector.shape_cast %99 : vector<16x512xbf16> to vector<1x16x512xbf16>
    tpu.vector_store %arg5[%c0_31, %c0_32, %c0_33], %102 {strides = array<i32>} : memref<1x16x512xbf16, #tpu.memory_space<vmem>>, vector<1x16x512xbf16>,
    return
  }
  func.func @transform_0(%arg0: i32) -> (i32, i32, i32) {
    %c0_i32 = arith.constant 0 : i32
    %c0_i32_0 = arith.constant 0 : i32
    %c0_i32_1 = arith.constant 0 : i32
    return %arg0, %c0_i32, %c0_i32_0 : i32, i32, i32
  }
  func.func @transform_1(%arg0: i32) -> (i32, i32) {
    %c0_i32 = arith.constant 0 : i32
    %c0_i32_0 = arith.constant 0 : i32
    %c0_i32_1 = arith.constant 0 : i32
    return %c0_i32, %c0_i32_0 : i32, i32
  }
  func.func @transform_2(%arg0: i32) -> (i32, i32) {
    %c0_i32 = arith.constant 0 : i32
    %c0_i32_0 = arith.constant 0 : i32
    %c0_i32_1 = arith.constant 0 : i32
    return %c0_i32, %c0_i32_0 : i32, i32
  }
  func.func @transform_3(%arg0: i32) -> (i32, i32) {
    %c0_i32 = arith.constant 0 : i32
    %c0_i32_0 = arith.constant 0 : i32
    %c0_i32_1 = arith.constant 0 : i32
    return %c0_i32, %c0_i32_0 : i32, i32
  }
  func.func @transform_4(%arg0: i32) -> (i32, i32, i32) {
    %c0_i32 = arith.constant 0 : i32
    %c0_i32_0 = arith.constant 0 : i32
    %c0_i32_1 = arith.constant 0 : i32
    return %arg0, %c0_i32, %c0_i32_0 : i32, i32, i32
  }
  func.func @transform_5(%arg0: i32) -> (i32, i32, i32) {
    %c0_i32 = arith.constant 0 : i32
    %c0_i32_0 = arith.constant 0 : i32
    %c0_i32_1 = arith.constant 0 : i32
    return %arg0, %c0_i32, %c0_i32_0 : i32, i32, i32
  }
}

module attributes {stable_mosaic.version = 11 : i64} {
  func.func @_fused_conv_stats_kernel(%arg0: i32, %arg1: memref<1x8x512xbf16, #tpu.memory_space<vmem>>, %arg2: memref<8x72xbf16, #tpu.memory_space<vmem>>, %arg3: memref<8x1xf32, #tpu.memory_space<vmem>>, %arg4: memref<8x1xf32, #tpu.memory_space<vmem>>, %arg5: memref<1x8x512xbf16, #tpu.memory_space<vmem>>, %arg6: memref<1x8x2xf32, #tpu.memory_space<vmem>>) attributes {dimension_semantics = [#tpu.dimension_semantics<parallel>], iteration_bounds = array<i64: 2>, scalar_prefetch = 0 : i64, scratch_operands = 0 : i64, tpu.core_type = #tpu.core_type<tc>, window_params = [{transform_indices = @transform_0, window_bounds = array<i64: 1, 8, 512>}, {pipeline_mode = #tpu.pipeline_mode<synchronous>, transform_indices = @transform_1, window_bounds = array<i64: 8, 72>}, {pipeline_mode = #tpu.pipeline_mode<synchronous>, transform_indices = @transform_2, window_bounds = array<i64: 8, 1>}, {pipeline_mode = #tpu.pipeline_mode<synchronous>, transform_indices = @transform_3, window_bounds = array<i64: 8, 1>}, {transform_indices = @transform_4, window_bounds = array<i64: 1, 8, 512>}, {transform_indices = @transform_5, window_bounds = array<i64: 1, 8, 2>}]} {
    %c0 = arith.constant 0 : index
    %c0_0 = arith.constant 0 : index
    %c0_1 = arith.constant 0 : index
    %0 = vector.load %arg1[%c0, %c0_0, %c0_1] : memref<1x8x512xbf16, #tpu.memory_space<vmem>>, vector<1x8x512xbf16>
    %1 = vector.shape_cast %0 : vector<1x8x512xbf16> to vector<8x512xbf16>
    %2 = arith.extf %1 : vector<8x512xbf16> to vector<8x512xf32>
    %c0_2 = arith.constant 0 : index
    %c0_3 = arith.constant 0 : index
    %3 = vector.load %arg3[%c0_2, %c0_3] : memref<8x1xf32, #tpu.memory_space<vmem>>, vector<8x1xf32>
    %4 = vector.broadcast %3 : vector<8x1xf32> to vector<8x512xf32>
    %5 = arith.mulf %2, %4 : vector<8x512xf32>
    %c0_4 = arith.constant 0 : index
    %c0_5 = arith.constant 0 : index
    %6 = vector.load %arg4[%c0_4, %c0_5] : memref<8x1xf32, #tpu.memory_space<vmem>>, vector<8x1xf32>
    %7 = vector.broadcast %6 : vector<8x1xf32> to vector<8x512xf32>
    %8 = arith.addf %5, %7 : vector<8x512xf32>
    %9 = tpu.iota {dimensions = array<i32: 1>} : vector<1x512xi32>
    %c128_i32 = arith.constant 128 : i32
    %10 = vector.broadcast %c128_i32 : i32 to vector<1x512xi32>
    %11 = arith.cmpi sge, %9, %10 : vector<1x512xi32>
    %c384_i32 = arith.constant 384 : i32
    %12 = vector.broadcast %c384_i32 : i32 to vector<1x512xi32>
    %13 = arith.cmpi slt, %9, %12 : vector<1x512xi32>
    %14 = arith.andi %11, %13 : vector<1x512xi1>
    %cst = arith.constant 0.000000e+00 : f32
    %15 = vector.shape_cast %14 : vector<1x512xi1> to vector<1x512xi1>
    %16 = vector.broadcast %15 : vector<1x512xi1> to vector<8x512xi1>
    %17 = vector.broadcast %cst : f32 to vector<8x512xf32>
    %18 = arith.select %16, %8, %17 : vector<8x512xi1>, vector<8x512xf32>
    %19 = tpu.iota {dimensions = array<i32: 1>} : vector<1x256xi32>
    %c16_i32 = arith.constant 16 : i32
    %c0_i32 = arith.constant 0 : i32
    %20 = arith.cmpi eq, %c16_i32, %c0_i32 : i32
    %c1_i32 = arith.constant 1 : i32
    %21 = arith.select %20, %c1_i32, %c16_i32 : i32
    %22 = vector.broadcast %21 : i32 to vector<1x256xi32>
    %23 = arith.remsi %19, %22 : vector<1x256xi32>
    %c0_i32_6 = arith.constant 0 : i32
    %24 = vector.broadcast %c0_i32_6 : i32 to vector<1x256xi32>
    %25 = arith.cmpi ne, %23, %24 : vector<1x256xi32>
    %c0_i32_7 = arith.constant 0 : i32
    %26 = vector.broadcast %c0_i32_7 : i32 to vector<1x256xi32>
    %27 = arith.cmpi slt, %23, %26 : vector<1x256xi32>
    %c0_i32_8 = arith.constant 0 : i32
    %28 = arith.cmpi slt, %21, %c0_i32_8 : i32
    %29 = vector.broadcast %28 : i1 to vector<1x256xi1>
    %30 = vector.broadcast %29 : vector<1x256xi1> to vector<1x256xi1>
    %31 = arith.xori %27, %30 : vector<1x256xi1>
    %32 = arith.andi %31, %25 : vector<1x256xi1>
    %33 = vector.broadcast %21 : i32 to vector<1x256xi32>
    %34 = arith.addi %23, %33 : vector<1x256xi32>
    %35 = arith.select %32, %34, %23 : vector<1x256xi1>, vector<1x256xi32>
    %36 = vector.extract_strided_slice %18 {offsets = [0, 111], sizes = [8, 256], strides = [1, 1]} : vector<8x512xf32> to vector<8x256xf32>
    %c0_i32_9 = arith.constant 0 : i32
    %37 = vector.broadcast %c0_i32_9 : i32 to vector<1x256xi32>
    %38 = arith.cmpi eq, %35, %37 : vector<1x256xi32>
    %cst_10 = arith.constant 0.000000e+00 : f32
    %39 = vector.shape_cast %38 : vector<1x256xi1> to vector<1x256xi1>
    %40 = vector.broadcast %39 : vector<1x256xi1> to vector<8x256xi1>
    %41 = vector.broadcast %cst_10 : f32 to vector<8x256xf32>
    %42 = arith.select %40, %41, %36 : vector<8x256xi1>, vector<8x256xf32>
    %43 = vector.extract_strided_slice %18 {offsets = [0, 112], sizes = [8, 256], strides = [1, 1]} : vector<8x512xf32> to vector<8x256xf32>
    %44 = vector.extract_strided_slice %18 {offsets = [0, 113], sizes = [8, 256], strides = [1, 1]} : vector<8x512xf32> to vector<8x256xf32>
    %c15_i32 = arith.constant 15 : i32
    %45 = vector.broadcast %c15_i32 : i32 to vector<1x256xi32>
    %46 = arith.cmpi eq, %35, %45 : vector<1x256xi32>
    %cst_11 = arith.constant 0.000000e+00 : f32
    %47 = vector.shape_cast %46 : vector<1x256xi1> to vector<1x256xi1>
    %48 = vector.broadcast %47 : vector<1x256xi1> to vector<8x256xi1>
    %49 = vector.broadcast %cst_11 : f32 to vector<8x256xf32>
    %50 = arith.select %48, %49, %44 : vector<8x256xi1>, vector<8x256xf32>
    %51 = vector.extract_strided_slice %18 {offsets = [0, 127], sizes = [8, 256], strides = [1, 1]} : vector<8x512xf32> to vector<8x256xf32>
    %c0_i32_12 = arith.constant 0 : i32
    %52 = vector.broadcast %c0_i32_12 : i32 to vector<1x256xi32>
    %53 = arith.cmpi eq, %35, %52 : vector<1x256xi32>
    %cst_13 = arith.constant 0.000000e+00 : f32
    %54 = vector.shape_cast %53 : vector<1x256xi1> to vector<1x256xi1>
    %55 = vector.broadcast %54 : vector<1x256xi1> to vector<8x256xi1>
    %56 = vector.broadcast %cst_13 : f32 to vector<8x256xf32>
    %57 = arith.select %55, %56, %51 : vector<8x256xi1>, vector<8x256xf32>
    %58 = vector.extract_strided_slice %18 {offsets = [0, 128], sizes = [8, 256], strides = [1, 1]} : vector<8x512xf32> to vector<8x256xf32>
    %59 = vector.extract_strided_slice %18 {offsets = [0, 129], sizes = [8, 256], strides = [1, 1]} : vector<8x512xf32> to vector<8x256xf32>
    %c15_i32_14 = arith.constant 15 : i32
    %60 = vector.broadcast %c15_i32_14 : i32 to vector<1x256xi32>
    %61 = arith.cmpi eq, %35, %60 : vector<1x256xi32>
    %cst_15 = arith.constant 0.000000e+00 : f32
    %62 = vector.shape_cast %61 : vector<1x256xi1> to vector<1x256xi1>
    %63 = vector.broadcast %62 : vector<1x256xi1> to vector<8x256xi1>
    %64 = vector.broadcast %cst_15 : f32 to vector<8x256xf32>
    %65 = arith.select %63, %64, %59 : vector<8x256xi1>, vector<8x256xf32>
    %66 = vector.extract_strided_slice %18 {offsets = [0, 143], sizes = [8, 256], strides = [1, 1]} : vector<8x512xf32> to vector<8x256xf32>
    %c0_i32_16 = arith.constant 0 : i32
    %67 = vector.broadcast %c0_i32_16 : i32 to vector<1x256xi32>
    %68 = arith.cmpi eq, %35, %67 : vector<1x256xi32>
    %cst_17 = arith.constant 0.000000e+00 : f32
    %69 = vector.shape_cast %68 : vector<1x256xi1> to vector<1x256xi1>
    %70 = vector.broadcast %69 : vector<1x256xi1> to vector<8x256xi1>
    %71 = vector.broadcast %cst_17 : f32 to vector<8x256xf32>
    %72 = arith.select %70, %71, %66 : vector<8x256xi1>, vector<8x256xf32>
    %73 = vector.extract_strided_slice %18 {offsets = [0, 144], sizes = [8, 256], strides = [1, 1]} : vector<8x512xf32> to vector<8x256xf32>
    %74 = vector.extract_strided_slice %18 {offsets = [0, 145], sizes = [8, 256], strides = [1, 1]} : vector<8x512xf32> to vector<8x256xf32>
    %c15_i32_18 = arith.constant 15 : i32
    %75 = vector.broadcast %c15_i32_18 : i32 to vector<1x256xi32>
    %76 = arith.cmpi eq, %35, %75 : vector<1x256xi32>
    %cst_19 = arith.constant 0.000000e+00 : f32
    %77 = vector.shape_cast %76 : vector<1x256xi1> to vector<1x256xi1>
    %78 = vector.broadcast %77 : vector<1x256xi1> to vector<8x256xi1>
    %79 = vector.broadcast %cst_19 : f32 to vector<8x256xf32>
    %80 = arith.select %78, %79, %74 : vector<8x256xi1>, vector<8x256xf32>
    %81 = tpu.concatenate %42, %43, %50, %57, %58, %65, %72, %73, %80 in 0 : vector<8x256xf32>, vector<8x256xf32>, vector<8x256xf32>, vector<8x256xf32>, vector<8x256xf32>, vector<8x256xf32>, vector<8x256xf32>, vector<8x256xf32>, vector<8x256xf32> -> vector<72x256xf32>
    %82 = arith.truncf %81 : vector<72x256xf32> to vector<72x256xbf16>
    %c0_20 = arith.constant 0 : index
    %c0_21 = arith.constant 0 : index
    %83 = vector.load %arg2[%c0_20, %c0_21] : memref<8x72xbf16, #tpu.memory_space<vmem>>, vector<8x72xbf16>
    %cst_22 = arith.constant dense<0.000000e+00> : vector<8x256xf32>
    %84 = tpu.matmul %83, %82, %cst_22 {dimension_numbers = #tpu.dot_dimension_numbers<[1], [0], [0], [1], [0, 0, 1, 1], [], []>} : vector<8x72xbf16>, vector<72x256xbf16>, vector<8x256xf32> -> vector<8x256xf32>
    %cst_23 = arith.constant dense<0.000000e+00> : vector<8xf32>
    %85 = vector.multi_reduction <add>, %84, %cst_23 [1] : vector<8x256xf32> to vector<8xf32>
    %86 = vector.shape_cast %85 : vector<8xf32> to vector<8x1xf32>
    %87 = arith.mulf %84, %84 : vector<8x256xf32>
    %cst_24 = arith.constant dense<0.000000e+00> : vector<8xf32>
    %88 = vector.multi_reduction <add>, %87, %cst_24 [1] : vector<8x256xf32> to vector<8xf32>
    %89 = vector.shape_cast %88 : vector<8xf32> to vector<8x1xf32>
    %90 = tpu.concatenate %86, %89 in 1 : vector<8x1xf32>, vector<8x1xf32> -> vector<8x2xf32>
    %c0_25 = arith.constant 0 : index
    %c0_26 = arith.constant 0 : index
    %c0_27 = arith.constant 0 : index
    %91 = vector.load %arg6[%c0_25, %c0_26, %c0_27] : memref<1x8x2xf32, #tpu.memory_space<vmem>>, vector<1x8x2xf32>
    %92 = vector.shape_cast %91 : vector<1x8x2xf32> to vector<8x2xf32>
    %93 = vector.shape_cast %90 : vector<8x2xf32> to vector<1x8x2xf32>
    tpu.vector_store %arg6[%c0_25, %c0_26, %c0_27], %93 {strides = array<i32>} : memref<1x8x2xf32, #tpu.memory_space<vmem>>, vector<1x8x2xf32>,
    %94 = arith.truncf %84 : vector<8x256xf32> to vector<8x256xbf16>
    %cst_28 = arith.constant 0.000000e+00 : bf16
    %95 = vector.broadcast %cst_28 : bf16 to vector<8x128xbf16>
    %cst_29 = arith.constant 0.000000e+00 : bf16
    %96 = vector.broadcast %cst_29 : bf16 to vector<8x128xbf16>
    %97 = tpu.concatenate %95, %94, %96 in 1 : vector<8x128xbf16>, vector<8x256xbf16>, vector<8x128xbf16> -> vector<8x512xbf16>
    %c0_30 = arith.constant 0 : index
    %c0_31 = arith.constant 0 : index
    %c0_32 = arith.constant 0 : index
    %98 = vector.load %arg5[%c0_30, %c0_31, %c0_32] : memref<1x8x512xbf16, #tpu.memory_space<vmem>>, vector<1x8x512xbf16>
    %99 = vector.shape_cast %98 : vector<1x8x512xbf16> to vector<8x512xbf16>
    %100 = vector.shape_cast %97 : vector<8x512xbf16> to vector<1x8x512xbf16>
    tpu.vector_store %arg5[%c0_30, %c0_31, %c0_32], %100 {strides = array<i32>} : memref<1x8x512xbf16, #tpu.memory_space<vmem>>, vector<1x8x512xbf16>,
    return
  }
  func.func @transform_0(%arg0: i32) -> (i32, i32, i32) {
    %c0_i32 = arith.constant 0 : i32
    %c0_i32_0 = arith.constant 0 : i32
    %c0_i32_1 = arith.constant 0 : i32
    return %arg0, %c0_i32, %c0_i32_0 : i32, i32, i32
  }
  func.func @transform_1(%arg0: i32) -> (i32, i32) {
    %c0_i32 = arith.constant 0 : i32
    %c0_i32_0 = arith.constant 0 : i32
    %c0_i32_1 = arith.constant 0 : i32
    return %c0_i32, %c0_i32_0 : i32, i32
  }
  func.func @transform_2(%arg0: i32) -> (i32, i32) {
    %c0_i32 = arith.constant 0 : i32
    %c0_i32_0 = arith.constant 0 : i32
    %c0_i32_1 = arith.constant 0 : i32
    return %c0_i32, %c0_i32_0 : i32, i32
  }
  func.func @transform_3(%arg0: i32) -> (i32, i32) {
    %c0_i32 = arith.constant 0 : i32
    %c0_i32_0 = arith.constant 0 : i32
    %c0_i32_1 = arith.constant 0 : i32
    return %c0_i32, %c0_i32_0 : i32, i32
  }
  func.func @transform_4(%arg0: i32) -> (i32, i32, i32) {
    %c0_i32 = arith.constant 0 : i32
    %c0_i32_0 = arith.constant 0 : i32
    %c0_i32_1 = arith.constant 0 : i32
    return %arg0, %c0_i32, %c0_i32_0 : i32, i32, i32
  }
  func.func @transform_5(%arg0: i32) -> (i32, i32, i32) {
    %c0_i32 = arith.constant 0 : i32
    %c0_i32_0 = arith.constant 0 : i32
    %c0_i32_1 = arith.constant 0 : i32
    return %arg0, %c0_i32, %c0_i32_0 : i32, i32, i32
  }
}

module attributes {stable_mosaic.version = 11 : i64} {
  func.func @_fused_conv_stats_kernel(%arg0: i32, %arg1: memref<1x16x512xbf16, #tpu.memory_space<vmem>>, %arg2: memref<8x144xbf16, #tpu.memory_space<vmem>>, %arg3: memref<16x1xf32, #tpu.memory_space<vmem>>, %arg4: memref<16x1xf32, #tpu.memory_space<vmem>>, %arg5: memref<1x8x512xbf16, #tpu.memory_space<vmem>>, %arg6: memref<1x8x2xf32, #tpu.memory_space<vmem>>) attributes {dimension_semantics = [#tpu.dimension_semantics<parallel>], iteration_bounds = array<i64: 2>, scalar_prefetch = 0 : i64, scratch_operands = 0 : i64, tpu.core_type = #tpu.core_type<tc>, window_params = [{transform_indices = @transform_0, window_bounds = array<i64: 1, 16, 512>}, {pipeline_mode = #tpu.pipeline_mode<synchronous>, transform_indices = @transform_1, window_bounds = array<i64: 8, 144>}, {pipeline_mode = #tpu.pipeline_mode<synchronous>, transform_indices = @transform_2, window_bounds = array<i64: 16, 1>}, {pipeline_mode = #tpu.pipeline_mode<synchronous>, transform_indices = @transform_3, window_bounds = array<i64: 16, 1>}, {transform_indices = @transform_4, window_bounds = array<i64: 1, 8, 512>}, {transform_indices = @transform_5, window_bounds = array<i64: 1, 8, 2>}]} {
    %c0 = arith.constant 0 : index
    %c0_0 = arith.constant 0 : index
    %c0_1 = arith.constant 0 : index
    %0 = vector.load %arg1[%c0, %c0_0, %c0_1] : memref<1x16x512xbf16, #tpu.memory_space<vmem>>, vector<1x16x512xbf16>
    %1 = vector.shape_cast %0 : vector<1x16x512xbf16> to vector<16x512xbf16>
    %2 = arith.extf %1 : vector<16x512xbf16> to vector<16x512xf32>
    %c0_2 = arith.constant 0 : index
    %c0_3 = arith.constant 0 : index
    %3 = vector.load %arg3[%c0_2, %c0_3] : memref<16x1xf32, #tpu.memory_space<vmem>>, vector<16x1xf32>
    %4 = vector.broadcast %3 : vector<16x1xf32> to vector<16x512xf32>
    %5 = arith.mulf %2, %4 : vector<16x512xf32>
    %c0_4 = arith.constant 0 : index
    %c0_5 = arith.constant 0 : index
    %6 = vector.load %arg4[%c0_4, %c0_5] : memref<16x1xf32, #tpu.memory_space<vmem>>, vector<16x1xf32>
    %7 = vector.broadcast %6 : vector<16x1xf32> to vector<16x512xf32>
    %8 = arith.addf %5, %7 : vector<16x512xf32>
    %cst = arith.constant 0.000000e+00 : f32
    %9 = vector.broadcast %cst : f32 to vector<16x512xf32>
    %10 = arith.maximumf %8, %9 : vector<16x512xf32>
    %11 = tpu.iota {dimensions = array<i32: 1>} : vector<1x512xi32>
    %c128_i32 = arith.constant 128 : i32
    %12 = vector.broadcast %c128_i32 : i32 to vector<1x512xi32>
    %13 = arith.cmpi sge, %11, %12 : vector<1x512xi32>
    %c384_i32 = arith.constant 384 : i32
    %14 = vector.broadcast %c384_i32 : i32 to vector<1x512xi32>
    %15 = arith.cmpi slt, %11, %14 : vector<1x512xi32>
    %16 = arith.andi %13, %15 : vector<1x512xi1>
    %cst_6 = arith.constant 0.000000e+00 : f32
    %17 = vector.shape_cast %16 : vector<1x512xi1> to vector<1x512xi1>
    %18 = vector.broadcast %17 : vector<1x512xi1> to vector<16x512xi1>
    %19 = vector.broadcast %cst_6 : f32 to vector<16x512xf32>
    %20 = arith.select %18, %10, %19 : vector<16x512xi1>, vector<16x512xf32>
    %21 = tpu.iota {dimensions = array<i32: 1>} : vector<1x256xi32>
    %c16_i32 = arith.constant 16 : i32
    %c0_i32 = arith.constant 0 : i32
    %22 = arith.cmpi eq, %c16_i32, %c0_i32 : i32
    %c1_i32 = arith.constant 1 : i32
    %23 = arith.select %22, %c1_i32, %c16_i32 : i32
    %24 = vector.broadcast %23 : i32 to vector<1x256xi32>
    %25 = arith.remsi %21, %24 : vector<1x256xi32>
    %c0_i32_7 = arith.constant 0 : i32
    %26 = vector.broadcast %c0_i32_7 : i32 to vector<1x256xi32>
    %27 = arith.cmpi ne, %25, %26 : vector<1x256xi32>
    %c0_i32_8 = arith.constant 0 : i32
    %28 = vector.broadcast %c0_i32_8 : i32 to vector<1x256xi32>
    %29 = arith.cmpi slt, %25, %28 : vector<1x256xi32>
    %c0_i32_9 = arith.constant 0 : i32
    %30 = arith.cmpi slt, %23, %c0_i32_9 : i32
    %31 = vector.broadcast %30 : i1 to vector<1x256xi1>
    %32 = vector.broadcast %31 : vector<1x256xi1> to vector<1x256xi1>
    %33 = arith.xori %29, %32 : vector<1x256xi1>
    %34 = arith.andi %33, %27 : vector<1x256xi1>
    %35 = vector.broadcast %23 : i32 to vector<1x256xi32>
    %36 = arith.addi %25, %35 : vector<1x256xi32>
    %37 = arith.select %34, %36, %25 : vector<1x256xi1>, vector<1x256xi32>
    %38 = vector.extract_strided_slice %20 {offsets = [0, 111], sizes = [16, 256], strides = [1, 1]} : vector<16x512xf32> to vector<16x256xf32>
    %c0_i32_10 = arith.constant 0 : i32
    %39 = vector.broadcast %c0_i32_10 : i32 to vector<1x256xi32>
    %40 = arith.cmpi eq, %37, %39 : vector<1x256xi32>
    %cst_11 = arith.constant 0.000000e+00 : f32
    %41 = vector.shape_cast %40 : vector<1x256xi1> to vector<1x256xi1>
    %42 = vector.broadcast %41 : vector<1x256xi1> to vector<16x256xi1>
    %43 = vector.broadcast %cst_11 : f32 to vector<16x256xf32>
    %44 = arith.select %42, %43, %38 : vector<16x256xi1>, vector<16x256xf32>
    %45 = vector.extract_strided_slice %20 {offsets = [0, 112], sizes = [16, 256], strides = [1, 1]} : vector<16x512xf32> to vector<16x256xf32>
    %46 = vector.extract_strided_slice %20 {offsets = [0, 113], sizes = [16, 256], strides = [1, 1]} : vector<16x512xf32> to vector<16x256xf32>
    %c15_i32 = arith.constant 15 : i32
    %47 = vector.broadcast %c15_i32 : i32 to vector<1x256xi32>
    %48 = arith.cmpi eq, %37, %47 : vector<1x256xi32>
    %cst_12 = arith.constant 0.000000e+00 : f32
    %49 = vector.shape_cast %48 : vector<1x256xi1> to vector<1x256xi1>
    %50 = vector.broadcast %49 : vector<1x256xi1> to vector<16x256xi1>
    %51 = vector.broadcast %cst_12 : f32 to vector<16x256xf32>
    %52 = arith.select %50, %51, %46 : vector<16x256xi1>, vector<16x256xf32>
    %53 = vector.extract_strided_slice %20 {offsets = [0, 127], sizes = [16, 256], strides = [1, 1]} : vector<16x512xf32> to vector<16x256xf32>
    %c0_i32_13 = arith.constant 0 : i32
    %54 = vector.broadcast %c0_i32_13 : i32 to vector<1x256xi32>
    %55 = arith.cmpi eq, %37, %54 : vector<1x256xi32>
    %cst_14 = arith.constant 0.000000e+00 : f32
    %56 = vector.shape_cast %55 : vector<1x256xi1> to vector<1x256xi1>
    %57 = vector.broadcast %56 : vector<1x256xi1> to vector<16x256xi1>
    %58 = vector.broadcast %cst_14 : f32 to vector<16x256xf32>
    %59 = arith.select %57, %58, %53 : vector<16x256xi1>, vector<16x256xf32>
    %60 = vector.extract_strided_slice %20 {offsets = [0, 128], sizes = [16, 256], strides = [1, 1]} : vector<16x512xf32> to vector<16x256xf32>
    %61 = vector.extract_strided_slice %20 {offsets = [0, 129], sizes = [16, 256], strides = [1, 1]} : vector<16x512xf32> to vector<16x256xf32>
    %c15_i32_15 = arith.constant 15 : i32
    %62 = vector.broadcast %c15_i32_15 : i32 to vector<1x256xi32>
    %63 = arith.cmpi eq, %37, %62 : vector<1x256xi32>
    %cst_16 = arith.constant 0.000000e+00 : f32
    %64 = vector.shape_cast %63 : vector<1x256xi1> to vector<1x256xi1>
    %65 = vector.broadcast %64 : vector<1x256xi1> to vector<16x256xi1>
    %66 = vector.broadcast %cst_16 : f32 to vector<16x256xf32>
    %67 = arith.select %65, %66, %61 : vector<16x256xi1>, vector<16x256xf32>
    %68 = vector.extract_strided_slice %20 {offsets = [0, 143], sizes = [16, 256], strides = [1, 1]} : vector<16x512xf32> to vector<16x256xf32>
    %c0_i32_17 = arith.constant 0 : i32
    %69 = vector.broadcast %c0_i32_17 : i32 to vector<1x256xi32>
    %70 = arith.cmpi eq, %37, %69 : vector<1x256xi32>
    %cst_18 = arith.constant 0.000000e+00 : f32
    %71 = vector.shape_cast %70 : vector<1x256xi1> to vector<1x256xi1>
    %72 = vector.broadcast %71 : vector<1x256xi1> to vector<16x256xi1>
    %73 = vector.broadcast %cst_18 : f32 to vector<16x256xf32>
    %74 = arith.select %72, %73, %68 : vector<16x256xi1>, vector<16x256xf32>
    %75 = vector.extract_strided_slice %20 {offsets = [0, 144], sizes = [16, 256], strides = [1, 1]} : vector<16x512xf32> to vector<16x256xf32>
    %76 = vector.extract_strided_slice %20 {offsets = [0, 145], sizes = [16, 256], strides = [1, 1]} : vector<16x512xf32> to vector<16x256xf32>
    %c15_i32_19 = arith.constant 15 : i32
    %77 = vector.broadcast %c15_i32_19 : i32 to vector<1x256xi32>
    %78 = arith.cmpi eq, %37, %77 : vector<1x256xi32>
    %cst_20 = arith.constant 0.000000e+00 : f32
    %79 = vector.shape_cast %78 : vector<1x256xi1> to vector<1x256xi1>
    %80 = vector.broadcast %79 : vector<1x256xi1> to vector<16x256xi1>
    %81 = vector.broadcast %cst_20 : f32 to vector<16x256xf32>
    %82 = arith.select %80, %81, %76 : vector<16x256xi1>, vector<16x256xf32>
    %83 = tpu.concatenate %44, %45, %52, %59, %60, %67, %74, %75, %82 in 0 : vector<16x256xf32>, vector<16x256xf32>, vector<16x256xf32>, vector<16x256xf32>, vector<16x256xf32>, vector<16x256xf32>, vector<16x256xf32>, vector<16x256xf32>, vector<16x256xf32> -> vector<144x256xf32>
    %84 = arith.truncf %83 : vector<144x256xf32> to vector<144x256xbf16>
    %c0_21 = arith.constant 0 : index
    %c0_22 = arith.constant 0 : index
    %85 = vector.load %arg2[%c0_21, %c0_22] : memref<8x144xbf16, #tpu.memory_space<vmem>>, vector<8x144xbf16>
    %cst_23 = arith.constant dense<0.000000e+00> : vector<8x256xf32>
    %86 = tpu.matmul %85, %84, %cst_23 {dimension_numbers = #tpu.dot_dimension_numbers<[1], [0], [0], [1], [0, 0, 1, 1], [], []>} : vector<8x144xbf16>, vector<144x256xbf16>, vector<8x256xf32> -> vector<8x256xf32>
    %cst_24 = arith.constant dense<0.000000e+00> : vector<8xf32>
    %87 = vector.multi_reduction <add>, %86, %cst_24 [1] : vector<8x256xf32> to vector<8xf32>
    %88 = vector.shape_cast %87 : vector<8xf32> to vector<8x1xf32>
    %89 = arith.mulf %86, %86 : vector<8x256xf32>
    %cst_25 = arith.constant dense<0.000000e+00> : vector<8xf32>
    %90 = vector.multi_reduction <add>, %89, %cst_25 [1] : vector<8x256xf32> to vector<8xf32>
    %91 = vector.shape_cast %90 : vector<8xf32> to vector<8x1xf32>
    %92 = tpu.concatenate %88, %91 in 1 : vector<8x1xf32>, vector<8x1xf32> -> vector<8x2xf32>
    %c0_26 = arith.constant 0 : index
    %c0_27 = arith.constant 0 : index
    %c0_28 = arith.constant 0 : index
    %93 = vector.load %arg6[%c0_26, %c0_27, %c0_28] : memref<1x8x2xf32, #tpu.memory_space<vmem>>, vector<1x8x2xf32>
    %94 = vector.shape_cast %93 : vector<1x8x2xf32> to vector<8x2xf32>
    %95 = vector.shape_cast %92 : vector<8x2xf32> to vector<1x8x2xf32>
    tpu.vector_store %arg6[%c0_26, %c0_27, %c0_28], %95 {strides = array<i32>} : memref<1x8x2xf32, #tpu.memory_space<vmem>>, vector<1x8x2xf32>,
    %96 = arith.truncf %86 : vector<8x256xf32> to vector<8x256xbf16>
    %cst_29 = arith.constant 0.000000e+00 : bf16
    %97 = vector.broadcast %cst_29 : bf16 to vector<8x128xbf16>
    %cst_30 = arith.constant 0.000000e+00 : bf16
    %98 = vector.broadcast %cst_30 : bf16 to vector<8x128xbf16>
    %99 = tpu.concatenate %97, %96, %98 in 1 : vector<8x128xbf16>, vector<8x256xbf16>, vector<8x128xbf16> -> vector<8x512xbf16>
    %c0_31 = arith.constant 0 : index
    %c0_32 = arith.constant 0 : index
    %c0_33 = arith.constant 0 : index
    %100 = vector.load %arg5[%c0_31, %c0_32, %c0_33] : memref<1x8x512xbf16, #tpu.memory_space<vmem>>, vector<1x8x512xbf16>
    %101 = vector.shape_cast %100 : vector<1x8x512xbf16> to vector<8x512xbf16>
    %102 = vector.shape_cast %99 : vector<8x512xbf16> to vector<1x8x512xbf16>
    tpu.vector_store %arg5[%c0_31, %c0_32, %c0_33], %102 {strides = array<i32>} : memref<1x8x512xbf16, #tpu.memory_space<vmem>>, vector<1x8x512xbf16>,
    return
  }
  func.func @transform_0(%arg0: i32) -> (i32, i32, i32) {
    %c0_i32 = arith.constant 0 : i32
    %c0_i32_0 = arith.constant 0 : i32
    %c0_i32_1 = arith.constant 0 : i32
    return %arg0, %c0_i32, %c0_i32_0 : i32, i32, i32
  }
  func.func @transform_1(%arg0: i32) -> (i32, i32) {
    %c0_i32 = arith.constant 0 : i32
    %c0_i32_0 = arith.constant 0 : i32
    %c0_i32_1 = arith.constant 0 : i32
    return %c0_i32, %c0_i32_0 : i32, i32
  }
  func.func @transform_2(%arg0: i32) -> (i32, i32) {
    %c0_i32 = arith.constant 0 : i32
    %c0_i32_0 = arith.constant 0 : i32
    %c0_i32_1 = arith.constant 0 : i32
    return %c0_i32, %c0_i32_0 : i32, i32
  }
  func.func @transform_3(%arg0: i32) -> (i32, i32) {
    %c0_i32 = arith.constant 0 : i32
    %c0_i32_0 = arith.constant 0 : i32
    %c0_i32_1 = arith.constant 0 : i32
    return %c0_i32, %c0_i32_0 : i32, i32
  }
  func.func @transform_4(%arg0: i32) -> (i32, i32, i32) {
    %c0_i32 = arith.constant 0 : i32
    %c0_i32_0 = arith.constant 0 : i32
    %c0_i32_1 = arith.constant 0 : i32
    return %arg0, %c0_i32, %c0_i32_0 : i32, i32, i32
  }
  func.func @transform_5(%arg0: i32) -> (i32, i32, i32) {
    %c0_i32 = arith.constant 0 : i32
    %c0_i32_0 = arith.constant 0 : i32
    %c0_i32_1 = arith.constant 0 : i32
    return %arg0, %c0_i32, %c0_i32_0 : i32, i32, i32
  }
}

module attributes {stable_mosaic.version = 11 : i64} {
  func.func @_fused_conv_stats_kernel(%arg0: i32, %arg1: memref<1x8x512xbf16, #tpu.memory_space<vmem>>, %arg2: memref<8x72xbf16, #tpu.memory_space<vmem>>, %arg3: memref<8x1xf32, #tpu.memory_space<vmem>>, %arg4: memref<8x1xf32, #tpu.memory_space<vmem>>, %arg5: memref<1x8x512xbf16, #tpu.memory_space<vmem>>, %arg6: memref<1x8x2xf32, #tpu.memory_space<vmem>>) attributes {dimension_semantics = [#tpu.dimension_semantics<parallel>], iteration_bounds = array<i64: 2>, scalar_prefetch = 0 : i64, scratch_operands = 0 : i64, tpu.core_type = #tpu.core_type<tc>, window_params = [{transform_indices = @transform_0, window_bounds = array<i64: 1, 8, 512>}, {pipeline_mode = #tpu.pipeline_mode<synchronous>, transform_indices = @transform_1, window_bounds = array<i64: 8, 72>}, {pipeline_mode = #tpu.pipeline_mode<synchronous>, transform_indices = @transform_2, window_bounds = array<i64: 8, 1>}, {pipeline_mode = #tpu.pipeline_mode<synchronous>, transform_indices = @transform_3, window_bounds = array<i64: 8, 1>}, {transform_indices = @transform_4, window_bounds = array<i64: 1, 8, 512>}, {transform_indices = @transform_5, window_bounds = array<i64: 1, 8, 2>}]} {
    %c0 = arith.constant 0 : index
    %c0_0 = arith.constant 0 : index
    %c0_1 = arith.constant 0 : index
    %0 = vector.load %arg1[%c0, %c0_0, %c0_1] : memref<1x8x512xbf16, #tpu.memory_space<vmem>>, vector<1x8x512xbf16>
    %1 = vector.shape_cast %0 : vector<1x8x512xbf16> to vector<8x512xbf16>
    %2 = arith.extf %1 : vector<8x512xbf16> to vector<8x512xf32>
    %c0_2 = arith.constant 0 : index
    %c0_3 = arith.constant 0 : index
    %3 = vector.load %arg3[%c0_2, %c0_3] : memref<8x1xf32, #tpu.memory_space<vmem>>, vector<8x1xf32>
    %4 = vector.broadcast %3 : vector<8x1xf32> to vector<8x512xf32>
    %5 = arith.mulf %2, %4 : vector<8x512xf32>
    %c0_4 = arith.constant 0 : index
    %c0_5 = arith.constant 0 : index
    %6 = vector.load %arg4[%c0_4, %c0_5] : memref<8x1xf32, #tpu.memory_space<vmem>>, vector<8x1xf32>
    %7 = vector.broadcast %6 : vector<8x1xf32> to vector<8x512xf32>
    %8 = arith.addf %5, %7 : vector<8x512xf32>
    %cst = arith.constant 0.000000e+00 : f32
    %9 = vector.broadcast %cst : f32 to vector<8x512xf32>
    %10 = arith.maximumf %8, %9 : vector<8x512xf32>
    %11 = tpu.iota {dimensions = array<i32: 1>} : vector<1x512xi32>
    %c128_i32 = arith.constant 128 : i32
    %12 = vector.broadcast %c128_i32 : i32 to vector<1x512xi32>
    %13 = arith.cmpi sge, %11, %12 : vector<1x512xi32>
    %c384_i32 = arith.constant 384 : i32
    %14 = vector.broadcast %c384_i32 : i32 to vector<1x512xi32>
    %15 = arith.cmpi slt, %11, %14 : vector<1x512xi32>
    %16 = arith.andi %13, %15 : vector<1x512xi1>
    %cst_6 = arith.constant 0.000000e+00 : f32
    %17 = vector.shape_cast %16 : vector<1x512xi1> to vector<1x512xi1>
    %18 = vector.broadcast %17 : vector<1x512xi1> to vector<8x512xi1>
    %19 = vector.broadcast %cst_6 : f32 to vector<8x512xf32>
    %20 = arith.select %18, %10, %19 : vector<8x512xi1>, vector<8x512xf32>
    %21 = tpu.iota {dimensions = array<i32: 1>} : vector<1x256xi32>
    %c16_i32 = arith.constant 16 : i32
    %c0_i32 = arith.constant 0 : i32
    %22 = arith.cmpi eq, %c16_i32, %c0_i32 : i32
    %c1_i32 = arith.constant 1 : i32
    %23 = arith.select %22, %c1_i32, %c16_i32 : i32
    %24 = vector.broadcast %23 : i32 to vector<1x256xi32>
    %25 = arith.remsi %21, %24 : vector<1x256xi32>
    %c0_i32_7 = arith.constant 0 : i32
    %26 = vector.broadcast %c0_i32_7 : i32 to vector<1x256xi32>
    %27 = arith.cmpi ne, %25, %26 : vector<1x256xi32>
    %c0_i32_8 = arith.constant 0 : i32
    %28 = vector.broadcast %c0_i32_8 : i32 to vector<1x256xi32>
    %29 = arith.cmpi slt, %25, %28 : vector<1x256xi32>
    %c0_i32_9 = arith.constant 0 : i32
    %30 = arith.cmpi slt, %23, %c0_i32_9 : i32
    %31 = vector.broadcast %30 : i1 to vector<1x256xi1>
    %32 = vector.broadcast %31 : vector<1x256xi1> to vector<1x256xi1>
    %33 = arith.xori %29, %32 : vector<1x256xi1>
    %34 = arith.andi %33, %27 : vector<1x256xi1>
    %35 = vector.broadcast %23 : i32 to vector<1x256xi32>
    %36 = arith.addi %25, %35 : vector<1x256xi32>
    %37 = arith.select %34, %36, %25 : vector<1x256xi1>, vector<1x256xi32>
    %38 = vector.extract_strided_slice %20 {offsets = [0, 111], sizes = [8, 256], strides = [1, 1]} : vector<8x512xf32> to vector<8x256xf32>
    %c0_i32_10 = arith.constant 0 : i32
    %39 = vector.broadcast %c0_i32_10 : i32 to vector<1x256xi32>
    %40 = arith.cmpi eq, %37, %39 : vector<1x256xi32>
    %cst_11 = arith.constant 0.000000e+00 : f32
    %41 = vector.shape_cast %40 : vector<1x256xi1> to vector<1x256xi1>
    %42 = vector.broadcast %41 : vector<1x256xi1> to vector<8x256xi1>
    %43 = vector.broadcast %cst_11 : f32 to vector<8x256xf32>
    %44 = arith.select %42, %43, %38 : vector<8x256xi1>, vector<8x256xf32>
    %45 = vector.extract_strided_slice %20 {offsets = [0, 112], sizes = [8, 256], strides = [1, 1]} : vector<8x512xf32> to vector<8x256xf32>
    %46 = vector.extract_strided_slice %20 {offsets = [0, 113], sizes = [8, 256], strides = [1, 1]} : vector<8x512xf32> to vector<8x256xf32>
    %c15_i32 = arith.constant 15 : i32
    %47 = vector.broadcast %c15_i32 : i32 to vector<1x256xi32>
    %48 = arith.cmpi eq, %37, %47 : vector<1x256xi32>
    %cst_12 = arith.constant 0.000000e+00 : f32
    %49 = vector.shape_cast %48 : vector<1x256xi1> to vector<1x256xi1>
    %50 = vector.broadcast %49 : vector<1x256xi1> to vector<8x256xi1>
    %51 = vector.broadcast %cst_12 : f32 to vector<8x256xf32>
    %52 = arith.select %50, %51, %46 : vector<8x256xi1>, vector<8x256xf32>
    %53 = vector.extract_strided_slice %20 {offsets = [0, 127], sizes = [8, 256], strides = [1, 1]} : vector<8x512xf32> to vector<8x256xf32>
    %c0_i32_13 = arith.constant 0 : i32
    %54 = vector.broadcast %c0_i32_13 : i32 to vector<1x256xi32>
    %55 = arith.cmpi eq, %37, %54 : vector<1x256xi32>
    %cst_14 = arith.constant 0.000000e+00 : f32
    %56 = vector.shape_cast %55 : vector<1x256xi1> to vector<1x256xi1>
    %57 = vector.broadcast %56 : vector<1x256xi1> to vector<8x256xi1>
    %58 = vector.broadcast %cst_14 : f32 to vector<8x256xf32>
    %59 = arith.select %57, %58, %53 : vector<8x256xi1>, vector<8x256xf32>
    %60 = vector.extract_strided_slice %20 {offsets = [0, 128], sizes = [8, 256], strides = [1, 1]} : vector<8x512xf32> to vector<8x256xf32>
    %61 = vector.extract_strided_slice %20 {offsets = [0, 129], sizes = [8, 256], strides = [1, 1]} : vector<8x512xf32> to vector<8x256xf32>
    %c15_i32_15 = arith.constant 15 : i32
    %62 = vector.broadcast %c15_i32_15 : i32 to vector<1x256xi32>
    %63 = arith.cmpi eq, %37, %62 : vector<1x256xi32>
    %cst_16 = arith.constant 0.000000e+00 : f32
    %64 = vector.shape_cast %63 : vector<1x256xi1> to vector<1x256xi1>
    %65 = vector.broadcast %64 : vector<1x256xi1> to vector<8x256xi1>
    %66 = vector.broadcast %cst_16 : f32 to vector<8x256xf32>
    %67 = arith.select %65, %66, %61 : vector<8x256xi1>, vector<8x256xf32>
    %68 = vector.extract_strided_slice %20 {offsets = [0, 143], sizes = [8, 256], strides = [1, 1]} : vector<8x512xf32> to vector<8x256xf32>
    %c0_i32_17 = arith.constant 0 : i32
    %69 = vector.broadcast %c0_i32_17 : i32 to vector<1x256xi32>
    %70 = arith.cmpi eq, %37, %69 : vector<1x256xi32>
    %cst_18 = arith.constant 0.000000e+00 : f32
    %71 = vector.shape_cast %70 : vector<1x256xi1> to vector<1x256xi1>
    %72 = vector.broadcast %71 : vector<1x256xi1> to vector<8x256xi1>
    %73 = vector.broadcast %cst_18 : f32 to vector<8x256xf32>
    %74 = arith.select %72, %73, %68 : vector<8x256xi1>, vector<8x256xf32>
    %75 = vector.extract_strided_slice %20 {offsets = [0, 144], sizes = [8, 256], strides = [1, 1]} : vector<8x512xf32> to vector<8x256xf32>
    %76 = vector.extract_strided_slice %20 {offsets = [0, 145], sizes = [8, 256], strides = [1, 1]} : vector<8x512xf32> to vector<8x256xf32>
    %c15_i32_19 = arith.constant 15 : i32
    %77 = vector.broadcast %c15_i32_19 : i32 to vector<1x256xi32>
    %78 = arith.cmpi eq, %37, %77 : vector<1x256xi32>
    %cst_20 = arith.constant 0.000000e+00 : f32
    %79 = vector.shape_cast %78 : vector<1x256xi1> to vector<1x256xi1>
    %80 = vector.broadcast %79 : vector<1x256xi1> to vector<8x256xi1>
    %81 = vector.broadcast %cst_20 : f32 to vector<8x256xf32>
    %82 = arith.select %80, %81, %76 : vector<8x256xi1>, vector<8x256xf32>
    %83 = tpu.concatenate %44, %45, %52, %59, %60, %67, %74, %75, %82 in 0 : vector<8x256xf32>, vector<8x256xf32>, vector<8x256xf32>, vector<8x256xf32>, vector<8x256xf32>, vector<8x256xf32>, vector<8x256xf32>, vector<8x256xf32>, vector<8x256xf32> -> vector<72x256xf32>
    %84 = arith.truncf %83 : vector<72x256xf32> to vector<72x256xbf16>
    %c0_21 = arith.constant 0 : index
    %c0_22 = arith.constant 0 : index
    %85 = vector.load %arg2[%c0_21, %c0_22] : memref<8x72xbf16, #tpu.memory_space<vmem>>, vector<8x72xbf16>
    %cst_23 = arith.constant dense<0.000000e+00> : vector<8x256xf32>
    %86 = tpu.matmul %85, %84, %cst_23 {dimension_numbers = #tpu.dot_dimension_numbers<[1], [0], [0], [1], [0, 0, 1, 1], [], []>} : vector<8x72xbf16>, vector<72x256xbf16>, vector<8x256xf32> -> vector<8x256xf32>
    %cst_24 = arith.constant dense<0.000000e+00> : vector<8xf32>
    %87 = vector.multi_reduction <add>, %86, %cst_24 [1] : vector<8x256xf32> to vector<8xf32>
    %88 = vector.shape_cast %87 : vector<8xf32> to vector<8x1xf32>
    %89 = arith.mulf %86, %86 : vector<8x256xf32>
    %cst_25 = arith.constant dense<0.000000e+00> : vector<8xf32>
    %90 = vector.multi_reduction <add>, %89, %cst_25 [1] : vector<8x256xf32> to vector<8xf32>
    %91 = vector.shape_cast %90 : vector<8xf32> to vector<8x1xf32>
    %92 = tpu.concatenate %88, %91 in 1 : vector<8x1xf32>, vector<8x1xf32> -> vector<8x2xf32>
    %c0_26 = arith.constant 0 : index
    %c0_27 = arith.constant 0 : index
    %c0_28 = arith.constant 0 : index
    %93 = vector.load %arg6[%c0_26, %c0_27, %c0_28] : memref<1x8x2xf32, #tpu.memory_space<vmem>>, vector<1x8x2xf32>
    %94 = vector.shape_cast %93 : vector<1x8x2xf32> to vector<8x2xf32>
    %95 = vector.shape_cast %92 : vector<8x2xf32> to vector<1x8x2xf32>
    tpu.vector_store %arg6[%c0_26, %c0_27, %c0_28], %95 {strides = array<i32>} : memref<1x8x2xf32, #tpu.memory_space<vmem>>, vector<1x8x2xf32>,
    %96 = arith.truncf %86 : vector<8x256xf32> to vector<8x256xbf16>
    %cst_29 = arith.constant 0.000000e+00 : bf16
    %97 = vector.broadcast %cst_29 : bf16 to vector<8x128xbf16>
    %cst_30 = arith.constant 0.000000e+00 : bf16
    %98 = vector.broadcast %cst_30 : bf16 to vector<8x128xbf16>
    %99 = tpu.concatenate %97, %96, %98 in 1 : vector<8x128xbf16>, vector<8x256xbf16>, vector<8x128xbf16> -> vector<8x512xbf16>
    %c0_31 = arith.constant 0 : index
    %c0_32 = arith.constant 0 : index
    %c0_33 = arith.constant 0 : index
    %100 = vector.load %arg5[%c0_31, %c0_32, %c0_33] : memref<1x8x512xbf16, #tpu.memory_space<vmem>>, vector<1x8x512xbf16>
    %101 = vector.shape_cast %100 : vector<1x8x512xbf16> to vector<8x512xbf16>
    %102 = vector.shape_cast %99 : vector<8x512xbf16> to vector<1x8x512xbf16>
    tpu.vector_store %arg5[%c0_31, %c0_32, %c0_33], %102 {strides = array<i32>} : memref<1x8x512xbf16, #tpu.memory_space<vmem>>, vector<1x8x512xbf16>,
    return
  }
  func.func @transform_0(%arg0: i32) -> (i32, i32, i32) {
    %c0_i32 = arith.constant 0 : i32
    %c0_i32_0 = arith.constant 0 : i32
    %c0_i32_1 = arith.constant 0 : i32
    return %arg0, %c0_i32, %c0_i32_0 : i32, i32, i32
  }
  func.func @transform_1(%arg0: i32) -> (i32, i32) {
    %c0_i32 = arith.constant 0 : i32
    %c0_i32_0 = arith.constant 0 : i32
    %c0_i32_1 = arith.constant 0 : i32
    return %c0_i32, %c0_i32_0 : i32, i32
  }
  func.func @transform_2(%arg0: i32) -> (i32, i32) {
    %c0_i32 = arith.constant 0 : i32
    %c0_i32_0 = arith.constant 0 : i32
    %c0_i32_1 = arith.constant 0 : i32
    return %c0_i32, %c0_i32_0 : i32, i32
  }
  func.func @transform_3(%arg0: i32) -> (i32, i32) {
    %c0_i32 = arith.constant 0 : i32
    %c0_i32_0 = arith.constant 0 : i32
    %c0_i32_1 = arith.constant 0 : i32
    return %c0_i32, %c0_i32_0 : i32, i32
  }
  func.func @transform_4(%arg0: i32) -> (i32, i32, i32) {
    %c0_i32 = arith.constant 0 : i32
    %c0_i32_0 = arith.constant 0 : i32
    %c0_i32_1 = arith.constant 0 : i32
    return %arg0, %c0_i32, %c0_i32_0 : i32, i32, i32
  }
  func.func @transform_5(%arg0: i32) -> (i32, i32, i32) {
    %c0_i32 = arith.constant 0 : i32
    %c0_i32_0 = arith.constant 0 : i32
    %c0_i32_1 = arith.constant 0 : i32
    return %arg0, %c0_i32, %c0_i32_0 : i32, i32, i32
  }
}

module attributes {stable_mosaic.version = 11 : i64} {
  func.func @_epilogue_kernel(%arg0: i32, %arg1: memref<1x8x512xbf16, #tpu.memory_space<vmem>>, %arg2: memref<8x1xf32, #tpu.memory_space<vmem>>, %arg3: memref<8x1xf32, #tpu.memory_space<vmem>>, %arg4: memref<1x8x256xf32, #tpu.memory_space<vmem>>) attributes {dimension_semantics = [#tpu.dimension_semantics<parallel>], iteration_bounds = array<i64: 2>, scalar_prefetch = 0 : i64, scratch_operands = 0 : i64, tpu.core_type = #tpu.core_type<tc>, window_params = [{transform_indices = @transform_0, window_bounds = array<i64: 1, 8, 512>}, {pipeline_mode = #tpu.pipeline_mode<synchronous>, transform_indices = @transform_1, window_bounds = array<i64: 8, 1>}, {pipeline_mode = #tpu.pipeline_mode<synchronous>, transform_indices = @transform_2, window_bounds = array<i64: 8, 1>}, {transform_indices = @transform_3, window_bounds = array<i64: 1, 8, 256>}]} {
    %c0 = arith.constant 0 : index
    %c0_0 = arith.constant 0 : index
    %c0_1 = arith.constant 0 : index
    %0 = vector.load %arg1[%c0, %c0_0, %c0_1] : memref<1x8x512xbf16, #tpu.memory_space<vmem>>, vector<1x8x512xbf16>
    %1 = vector.shape_cast %0 : vector<1x8x512xbf16> to vector<8x512xbf16>
    %2 = arith.extf %1 : vector<8x512xbf16> to vector<8x512xf32>
    %c0_2 = arith.constant 0 : index
    %c0_3 = arith.constant 0 : index
    %3 = vector.load %arg2[%c0_2, %c0_3] : memref<8x1xf32, #tpu.memory_space<vmem>>, vector<8x1xf32>
    %4 = vector.broadcast %3 : vector<8x1xf32> to vector<8x512xf32>
    %5 = arith.mulf %2, %4 : vector<8x512xf32>
    %c0_4 = arith.constant 0 : index
    %c0_5 = arith.constant 0 : index
    %6 = vector.load %arg3[%c0_4, %c0_5] : memref<8x1xf32, #tpu.memory_space<vmem>>, vector<8x1xf32>
    %7 = vector.broadcast %6 : vector<8x1xf32> to vector<8x512xf32>
    %8 = arith.addf %5, %7 : vector<8x512xf32>
    %cst = arith.constant 0.000000e+00 : f32
    %9 = vector.broadcast %cst : f32 to vector<8x512xf32>
    %10 = arith.maximumf %8, %9 : vector<8x512xf32>
    %11 = vector.extract_strided_slice %10 {offsets = [0, 128], sizes = [8, 256], strides = [1, 1]} : vector<8x512xf32> to vector<8x256xf32>
    %c0_6 = arith.constant 0 : index
    %c0_7 = arith.constant 0 : index
    %c0_8 = arith.constant 0 : index
    %12 = vector.load %arg4[%c0_6, %c0_7, %c0_8] : memref<1x8x256xf32, #tpu.memory_space<vmem>>, vector<1x8x256xf32>
    %13 = vector.shape_cast %12 : vector<1x8x256xf32> to vector<8x256xf32>
    %14 = vector.shape_cast %11 : vector<8x256xf32> to vector<1x8x256xf32>
    tpu.vector_store %arg4[%c0_6, %c0_7, %c0_8], %14 {strides = array<i32>} : memref<1x8x256xf32, #tpu.memory_space<vmem>>, vector<1x8x256xf32>,
    return
  }
  func.func @transform_0(%arg0: i32) -> (i32, i32, i32) {
    %c0_i32 = arith.constant 0 : i32
    %c0_i32_0 = arith.constant 0 : i32
    %c0_i32_1 = arith.constant 0 : i32
    return %arg0, %c0_i32, %c0_i32_0 : i32, i32, i32
  }
  func.func @transform_1(%arg0: i32) -> (i32, i32) {
    %c0_i32 = arith.constant 0 : i32
    %c0_i32_0 = arith.constant 0 : i32
    %c0_i32_1 = arith.constant 0 : i32
    return %c0_i32, %c0_i32_0 : i32, i32
  }
  func.func @transform_2(%arg0: i32) -> (i32, i32) {
    %c0_i32 = arith.constant 0 : i32
    %c0_i32_0 = arith.constant 0 : i32
    %c0_i32_1 = arith.constant 0 : i32
    return %c0_i32, %c0_i32_0 : i32, i32
  }
  func.func @transform_3(%arg0: i32) -> (i32, i32, i32) {
    %c0_i32 = arith.constant 0 : i32
    %c0_i32_0 = arith.constant 0 : i32
    %c0_i32_1 = arith.constant 0 : i32
    return %arg0, %c0_i32, %c0_i32_0 : i32, i32, i32
  }
}

</mosaic_0001>

<llo_original>
// kernel: _lambda_.6
$region0: #{_lambda_.6}
  #allocation0 [shape = 'u32[]', space=smem, size = 0x4, offset = 0x4, fixed_abs, tag = 'smem constant byte address 0x4 - core index']
  #allocation1 [shape = 'u32[144,128]{1,0:T(1,128)}', space=vmem, size = 0x12000, scoped, tag = 'internal scratch']
  %s0 = inlined_call_operand.vmem [shape: bf16[2,8,512], index: 0, kind: input, shape index: {}]
  %s1 = inlined_call_operand.vmem [shape: bf16[16,72], index: 1, kind: input, shape index: {}]
  %s2 = inlined_call_operand.vmem [shape: f32[8,1], index: 2, kind: input, shape index: {}]
  %s3 = inlined_call_operand.vmem [shape: f32[8,1], index: 3, kind: input, shape index: {}]
  %s4 = inlined_call_operand.vmem [shape: bf16[2,16,512], index: 4, kind: output, shape index: {0}]
  %s5 = inlined_call_operand.vmem [shape: f32[2,16,2], index: 5, kind: output, shape index: {1}]
  %6 = xla_tuple %s4, %s5
  %s7 = sld [smem:[#allocation0]]
  $region57: #{_lambda_.6} parent=0
    _
  %s9 = ssub.s32 1, %s7
  %s10 = scalar_select 0, %s9, %s7
  loop: start=0, step=1, limit=4
  $region2: #{_lambda_.6} parent=0 // loop_pre_header
    _
  $region3: #{_lambda_.6} parent=0 // loop_header
    %s12 = sphi 0, %s16
    %p13 = scmp.ge.s32.totalorder %s12, 4
    %s22 = sphi 0, %s24
    %s25 = sphi 0, %s22
    %s26 = sphi 0, %s25
    %s42 = sphi 0, %s26
    %s46 = sphi 0, %s46
    %s48 = sphi 0, %s46
    %s49 = sphi 0, %s48
    %s63 = sphi 0, %s49
    %s67 = sphi 0, %s67
    %s69 = sphi 0, %s67
    %s70 = sphi 0, %s69
    %s84 = sphi 0, %s70
    %s88 = sphi 0, %s88
    %s90 = sphi 0, %s88
    %s91 = sphi 0, %s90
    %s105 = sphi 0, %s91
    %s111 = sphi 0, %s113
    %s114 = sphi 0, %s111
    %s115 = sphi 0, %s114
    %s131 = sphi 0, %s115
    %s137 = sphi 0, %s139
    %s140 = sphi 0, %s137
    %s141 = sphi 0, %s140
    %s157 = sphi 0, %s141
  $region4: #{_lambda_.6} parent=0 // loop_header_branch
    %15 = sbr.rel (%p13) target = $region8
  $region5: #{_lambda_.6} parent=0 // loop_body
    %s17 = ssub.s32 %s12, 1
    %s18 = ssub.s32 %s12, 2
    %s19 = sadd.s32 %s12, 1
    %s20 = ssub.s32 %s12, %s19
    %p21 = scmp.eq.s32.totalorder %s20, 0
    %s23 = sadd.s32 %s22, 1
    %s24 = scalar_select %p21, %s22, %s23
    %p27 = pneg %p21
    %p28 = scmp.eq.s32.totalorder %s12, 1
    %p29 = por %p27, %p28
    %p30 = scmp.ne.s32.totalorder %s22, %s25
    %p31 = scmp.eq.s32.totalorder %s12, 0
    %p32 = por %p30, %p31
    %p33 = scmp.ne.s32.totalorder %s22, %s25
    %p34 = scmp.eq.s32.totalorder %s17, 1
    %p35 = por %p33, %p34
    %p36 = scmp.ne.s32.totalorder %s25, %s26
    %p37 = scmp.eq.s32.totalorder %s17, 0
    %p38 = por %p36, %p37
    %p39 = scmp.ne.s32.totalorder %s25, %s26
    %p40 = scmp.eq.s32.totalorder %s18, 1
    %p41 = por %p39, %p40
    %p43 = scmp.ne.s32.totalorder %s26, %s42
    %p44 = scmp.eq.s32.totalorder %s18, 0
    %p45 = por %p43, %p44
    %s47 = sadd.s32 %s46, 1
    %p50 = scmp.eq.s32.totalorder %s12, 1
    %p51 = scmp.ne.s32.totalorder %s46, %s48
    %p52 = scmp.eq.s32.totalorder %s12, 0
    %p53 = por %p51, %p52
    %p54 = scmp.ne.s32.totalorder %s46, %s48
    %p55 = scmp.eq.s32.totalorder %s17, 1
    %p56 = por %p54, %p55
    %p57 = scmp.ne.s32.totalorder %s48, %s49
    %p58 = scmp.eq.s32.totalorder %s17, 0
    %p59 = por %p57, %p58
    %p60 = scmp.ne.s32.totalorder %s48, %s49
    %p61 = scmp.eq.s32.totalorder %s18, 1
    %p62 = por %p60, %p61
    %p64 = scmp.ne.s32.totalorder %s49, %s63
    %p65 = scmp.eq.s32.totalorder %s18, 0
    %p66 = por %p64, %p65
    %s68 = sadd.s32 %s67, 1
    %p71 = scmp.eq.s32.totalorder %s12, 1
    %p72 = scmp.ne.s32.totalorder %s67, %s69
    %p73 = scmp.eq.s32.totalorder %s12, 0
    %p74 = por %p72, %p73
    %p75 = scmp.ne.s32.totalorder %s67, %s69
    %p76 = scmp.eq.s32.totalorder %s17, 1
    %p77 = por %p75, %p76
    %p78 = scmp.ne.s32.totalorder %s69, %s70
    %p79 = scmp.eq.s32.totalorder %s17, 0
    %p80 = por %p78, %p79
    %p81 = scmp.ne.s32.totalorder %s69, %s70
    %p82 = scmp.eq.s32.totalorder %s18, 1
    %p83 = por %p81, %p82
    %p85 = scmp.ne.s32.totalorder %s70, %s84
    %p86 = scmp.eq.s32.totalorder %s18, 0
    %p87 = por %p85, %p86
    %s89 = sadd.s32 %s88, 1
    %p92 = scmp.eq.s32.totalorder %s12, 1
    %p93 = scmp.ne.s32.totalorder %s88, %s90
    %p94 = scmp.eq.s32.totalorder %s12, 0
    %p95 = por %p93, %p94
    %p96 = scmp.ne.s32.totalorder %s88, %s90
    %p97 = scmp.eq.s32.totalorder %s17, 1
    %p98 = por %p96, %p97
    %p99 = scmp.ne.s32.totalorder %s90, %s91
    %p100 = scmp.eq.s32.totalorder %s17, 0
    %p101 = por %p99, %p100
    %p102 = scmp.ne.s32.totalorder %s90, %s91
    %p103 = scmp.eq.s32.totalorder %s18, 1
    %p104 = por %p102, %p103
    %p106 = scmp.ne.s32.totalorder %s91, %s105
    %p107 = scmp.eq.s32.totalorder %s18, 0
    %p108 = por %p106, %p107
    %s109 = ssub.s32 %s12, %s19
    %p110 = scmp.eq.s32.totalorder %s109, 0
    %s112 = sadd.s32 %s111, 1
    %s113 = scalar_select %p110, %s111, %s112
    %p116 = pneg %p110
    %p117 = scmp.eq.s32.totalorder %s12, 1
    %p118 = por %p116, %p117
    %p119 = scmp.ne.s32.totalorder %s111, %s114
    %p120 = scmp.eq.s32.totalorder %s12, 0
    %p121 = por %p119, %p120
    %p122 = scmp.ne.s32.totalorder %s111, %s114
    %p123 = scmp.eq.s32.totalorder %s17, 1
    %p124 = por %p122, %p123
    %p125 = scmp.ne.s32.totalorder %s114, %s115
    %p126 = scmp.eq.s32.totalorder %s17, 0
    %p127 = por %p125, %p126
    %p128 = scmp.ne.s32.totalorder %s114, %s115
    %p129 = scmp.eq.s32.totalorder %s18, 1
    %p130 = por %p128, %p129
    %p132 = scmp.ne.s32.totalorder %s115, %s131
    %p133 = scmp.eq.s32.totalorder %s18, 0
    %p134 = por %p132, %p133
    %s135 = ssub.s32 %s12, %s19
    %p136 = scmp.eq.s32.totalorder %s135, 0
    %s138 = sadd.s32 %s137, 1
    %s139 = scalar_select %p136, %s137, %s138
    %p142 = pneg %p136
    %p143 = scmp.eq.s32.totalorder %s12, 1
    %p144 = por %p142, %p143
    %p145 = scmp.ne.s32.totalorder %s137, %s140
    %p146 = scmp.eq.s32.totalorder %s12, 0
    %p147 = por %p145, %p146
    %p148 = scmp.ne.s32.totalorder %s137, %s140
    %p149 = scmp.eq.s32.totalorder %s17, 1
    %p150 = por %p148, %p149
    %p151 = scmp.ne.s32.totalorder %s140, %s141
    %p152 = scmp.eq.s32.totalorder %s17, 0
    %p153 = por %p151, %p152
    %p154 = scmp.ne.s32.totalorder %s140, %s141
    %p155 = scmp.eq.s32.totalorder %s18, 1
    %p156 = por %p154, %p155
    %p158 = scmp.ne.s32.totalorder %s141, %s157
    %p159 = scmp.eq.s32.totalorder %s18, 0
    %p160 = por %p158, %p159
    %p161 = scmp.le.s32.totalorder 1, %s12
    %p162 = scmp.lt.s32.totalorder %s12, 3
    %p163 = pnand %p161, %p162
    %p164 = pneg %p163
    // Predicated region
    $region9: #{_lambda_.6} parent=5 // pred_check
      _
    $region10: #{_lambda_.6} parent=5 // pred_check_branch
      %166 = sbr.rel (%p163) target = $region12
    $region11: #{_lambda_.6} parent=5 // pred_region
      %s167 = ssub.s32 %s12, 1
      // Predicated region
      $region13: #{_lambda_.6} parent=11 // pred_check
        %p168 = pneg %p59
      $region14: #{_lambda_.6} parent=11 // pred_check_branch
        %170 = sbr.rel (%p168) target = $region16
      $region15: #{_lambda_.6} parent=11 // pred_region
        _
      $region16: #{_lambda_.6} parent=11 // pred_fallthru
        _
      // Predicated region
      $region17: #{_lambda_.6} parent=11 // pred_check
        %p171 = pneg %p80
      $region18: #{_lambda_.6} parent=11 // pred_check_branch
        %173 = sbr.rel (%p171) target = $region20
      $region19: #{_lambda_.6} parent=11 // pred_region
        _
      $region20: #{_lambda_.6} parent=11 // pred_fallthru
        _
      // Predicated region
      $region21: #{_lambda_.6} parent=11 // pred_check
        %p174 = pneg %p101
      $region22: #{_lambda_.6} parent=11 // pred_check_branch
        %176 = sbr.rel (%p174) target = $region24
      $region23: #{_lambda_.6} parent=11 // pred_region
        _
      $region24: #{_lambda_.6} parent=11 // pred_fallthru
        _
    $region12: #{_lambda_.6} parent=5 // pred_fallthru
      _
    %p177 = scmp.lt.s32.totalorder %s12, 2
    // Predicated region
    $region25: #{_lambda_.6} parent=5 // pred_check
      %p178 = pneg %p177
    $region26: #{_lambda_.6} parent=5 // pred_check_branch
      %180 = sbr.rel (%p178) target = $region28
    $region27: #{_lambda_.6} parent=5 // pred_region
      // Predicated region
      $region29: #{_lambda_.6} parent=27 // pred_check
        %p181 = pneg %p32
      $region30: #{_lambda_.6} parent=27 // pred_check_branch
        %183 = sbr.rel (%p181) target = $region32
      $region31: #{_lambda_.6} parent=27 // pred_region
        %p184 = scmp.lt.s32.totalorder %s12, 1
        %s185 = scalar_select %p184, %s12, 1
        %s186 = smul.addr %s185, 4
        %s187 = smul.addr %s186, 4
        %s188 = scalar_lea.vmem %s0, %s187
      $region32: #{_lambda_.6} parent=27 // pred_fallthru
        _
    $region28: #{_lambda_.6} parent=5 // pred_fallthru
      _
    %p189 = scmp.le.s32.totalorder 1, %s12
    %p190 = scmp.lt.s32.totalorder %s12, 3
    %p191 = pnand %p189, %p190
    %p192 = pneg %p191
    // Predicated region
    $region33: #{_lambda_.6} parent=5 // pred_check
      _
    $region34: #{_lambda_.6} parent=5 // pred_check_branch
      %194 = sbr.rel (%p191) target = $region36
    $region35: #{_lambda_.6} parent=5 // pred_region
      %s195 = ssub.s32 %s12, 1
      %p196 = scmp.lt.s32.totalorder %s17, 1
      %s197 = scalar_select %p196, %s17, 1
      %s198 = smul.addr %s197, 4
      %s199 = smul.addr %s198, 4
      %s200 = scalar_lea.vmem %s0, %s199
      %p201 = pneg %p38
      %p202 = pneg %p35
      %p203 = pneg %p59
      %p204 = pneg %p56
      %p205 = pneg %p80
      %p206 = pneg %p77
      %p207 = pneg %p101
      %p208 = pneg %p98
      %p209 = pneg %p127
      %p210 = pneg %p124
      %p211 = scmp.lt.s32.totalorder %s17, 1
      %s212 = scalar_select %p211, %s17, 1
      %s213 = smul.addr %s212, 8
      %s214 = smul.addr %s213, 4
      %s215 = scalar_lea.vmem %s4, %s214
      %p216 = pneg %p153
      %p217 = pneg %p150
      %p218 = scmp.lt.s32.totalorder %s17, 1
      %s219 = scalar_select %p218, %s17, 1
      %s220 = smul.addr %s219, 2
      %s221 = smul.addr %s220, 8
      %s222 = scalar_lea.vmem %s5, %s221
      %p223 = scmp.lt.s32.totalorder %s17, 1
      %s224 = scalar_select %p223, %s17, 1
      %s225 = smul.addr %s224, 4
      %s226 = smul.addr %s225, 4
      %s227 = scalar_lea.vmem %s0, %s226
      %p228 = scmp.lt.s32.totalorder %s17, 1
      %s229 = scalar_select %p228, %s17, 1
      %s230 = smul.addr %s229, 8
      %s231 = smul.addr %s230, 4
      %s232 = scalar_lea.vmem %s4, %s231
      %p233 = scmp.lt.s32.totalorder %s17, 1
      %s234 = scalar_select %p233, %s17, 1
      %s235 = smul.addr %s234, 2
      %s236 = smul.addr %s235, 8
      %s237 = scalar_lea.vmem %s5, %s236
      %v239 = vld [vmem:[%s227] sm:$0xff]
      %v240 = vld [vmem:[%s227 + $0x8] sm:$0xff]
      %v241 = vunpack.c.l.bf16 %v239
      %v242 = vunpack.c.h.bf16 %v239
      %v243 = vunpack.c.l.bf16 %v240
      %v244 = vunpack.c.h.bf16 %v240
      %v245 = vld [vmem:[%s2] sm:$0xff]
      %247 = vset.pattern.permute.xlu0 0
      %248 = vperm.xlu0 %247, %v245
      %v249 = vpop.permute.xlu0 %248
      %v251 = vmul.f32 %v241, %v249
      %v252 = vmul.f32 %v242, %v249
      %v253 = vmul.f32 %v243, %v249
      %v254 = vmul.f32 %v244, %v249
      %v255 = vld [vmem:[%s3] sm:$0xff]
      %257 = vset.pattern.permute.xlu0 0
      %258 = vperm.xlu0 %257, %v255
      %v259 = vpop.permute.xlu0 %258
      %v261 = vadd.f32 %v251, %v259
      %v262 = vadd.f32 %v252, %v259
      %v263 = vadd.f32 %v253, %v259
      %v264 = vadd.f32 %v254, %v259
      %v265 = vmax.f32 %v261, 0.0
      %v266 = vmax.f32 %v262, 0.0
      %v267 = vmax.f32 %v263, 0.0
      %v268 = vmax.f32 %v264, 0.0
      %v269 = vlaneseq
      %v270 = vand.u32 %v269, 127
      %v271 = vadd.s32 %v270, 128
      %v272 = vadd.s32 %v270, 256
      %v273 = vadd.s32 %v270, 384
      %vm274 = vcmp.ge.s32.totalorder %v270, 128
      %vm275 = vcmp.ge.s32.totalorder %v271, 128
      %vm276 = vcmp.ge.s32.totalorder %v272, 128
      %vm277 = vcmp.ge.s32.totalorder %v273, 128
      %vm278 = vcmp.lt.s32.totalorder %v270, 384
      %vm279 = vcmp.lt.s32.totalorder %v271, 384
      %vm280 = vcmp.lt.s32.totalorder %v272, 384
      %vm281 = vcmp.lt.s32.totalorder %v273, 384
      %vm282 = vmand %vm274, %vm278
      %vm283 = vmand %vm275, %vm279
      %vm284 = vmand %vm276, %vm280
      %vm285 = vmand %vm277, %vm281
      %v286 = vsel %vm282, 1, 0
      %v287 = vsel %vm283, 1, 0
      %v288 = vsel %vm284, 1, 0
      %v289 = vsel %vm285, 1, 0
      %vm290 = vcmp.eq.s32.totalorder %v286, 1
      %vm291 = vcmp.eq.s32.totalorder %v287, 1
      %vm292 = vcmp.eq.s32.totalorder %v288, 1
      %vm293 = vcmp.eq.s32.totalorder %v289, 1
      %v294 = vsel %vm290, %v265, 0.0
      %v295 = vsel %vm291, %v266, 0.0
      %v296 = vsel %vm292, %v267, 0.0
      %v297 = vsel %vm293, %v268, 0.0
      %vm298 = vcmp.lt.s32.totalorder %v270, 0
      %v299 = vsub.s32 0, %v270
      %v300 = vsel %vm298, %v299, %v270
      %v301 = vshrl.u32 %v300, 4
      %v302 = vand.u32 %v300, 15
      %v303 = vsub.s32 0, %v302
      %v304 = vsel %vm298, %v303, %v302
      %vm305 = vcmp.lt.s32.totalorder %v271, 0
      %v306 = vsub.s32 0, %v271
      %v307 = vsel %vm305, %v306, %v271
      %v308 = vshrl.u32 %v307, 4
      %v309 = vand.u32 %v307, 15
      %v310 = vsub.s32 0, %v309
      %v311 = vsel %vm305, %v310, %v309
      %vm312 = vcmp.ne.s32.totalorder %v304, 0
      %vm313 = vcmp.ne.s32.totalorder %v311, 0
      %vm314 = vcmp.lt.s32.totalorder %v304, 0
      %vm315 = vcmp.lt.s32.totalorder %v311, 0
      %vm316 = vmand %vm314, %vm312
      %vm317 = vmand %vm315, %vm313
      %v318 = vadd.s32 %v304, 16
      %v319 = vadd.s32 %v311, 16
      %v320 = vsel %vm316, %v318, %v304
      %v321 = vsel %vm317, %v319, %v311
      %vm322 = vcmp.eq.s32.totalorder %v320, 0
      %vm323 = vcmp.eq.s32.totalorder %v321, 0
      %v324 = vsel %vm322, 1, 0
      %v325 = vsel %vm323, 1, 0
      %vm326 = vcmp.eq.s32.totalorder %v324, 1
      %vm327 = vcmp.eq.s32.totalorder %v325, 1
      %331 = vrot.lane.b32.xlu0 %v294, 17
      %v332 = vpop.permute.xlu0 %331
      %333 = vrot.lane.b32.xlu0 %v295, 17
      %v334 = vpop.permute.xlu0 %333
      %335 = vrot.lane.b32.xlu0 %v296, 17
      %v336 = vpop.permute.xlu0 %335
      %vm337 = vcmask 138240
      %v338 = vsel %vm337, %v332, %v334
      %v339 = vsel %vm337, %v334, %v336
      %v342 = vsel %vm326, 0.0, %v338
      %v343 = vsel %vm327, 0.0, %v339
      %vm344 = vcmp.eq.s32.totalorder %v320, 15
      %vm345 = vcmp.eq.s32.totalorder %v321, 15
      %v346 = vsel %vm344, 1, 0
      %v347 = vsel %vm345, 1, 0
      %vm348 = vcmp.eq.s32.totalorder %v346, 1
      %vm349 = vcmp.eq.s32.totalorder %v347, 1
      %350 = vrot.lane.b32.xlu0 %v294, 15
      %v351 = vpop.permute.xlu0 %350
      %352 = vrot.lane.b32.xlu0 %v295, 15
      %v353 = vpop.permute.xlu0 %352
      %354 = vrot.lane.b32.xlu0 %v296, 15
      %v355 = vpop.permute.xlu0 %354
      %vm356 = vcmask 121856
      %v357 = vsel %vm356, %v351, %v353
      %v358 = vsel %vm356, %v353, %v355
      %v361 = vsel %vm348, 0.0, %v357
      %v362 = vsel %vm349, 0.0, %v358
      %363 = vrot.lane.b32.xlu0 %v294, 1
      %v364 = vpop.permute.xlu0 %363
      %365 = vrot.lane.b32.xlu0 %v295, 1
      %v366 = vpop.permute.xlu0 %365
      %367 = vrot.lane.b32.xlu0 %v296, 1
      %v368 = vpop.permute.xlu0 %367
      %vm369 = vcmask 7168
      %v370 = vsel %vm369, %v364, %v366
      %v371 = vsel %vm369, %v366, %v368
      %v374 = vsel %vm326, 0.0, %v370
      %v375 = vsel %vm327, 0.0, %v371
      %377 = vrot.lane.b32.xlu0 %v295, 127
      %v378 = vpop.permute.xlu0 %377
      %379 = vrot.lane.b32.xlu0 %v296, 127
      %v380 = vpop.permute.xlu0 %379
      %381 = vrot.lane.b32.xlu0 %v297, 127
      %v382 = vpop.permute.xlu0 %381
      %vm383 = vcmask 1039360
      %v384 = vsel %vm383, %v378, %v380
      %v385 = vsel %vm383, %v380, %v382
      %v388 = vsel %vm348, 0.0, %v384
      %v389 = vsel %vm349, 0.0, %v385
      %390 = vrot.lane.b32.xlu0 %v295, 113
      %v391 = vpop.permute.xlu0 %390
      %392 = vrot.lane.b32.xlu0 %v296, 113
      %v393 = vpop.permute.xlu0 %392
      %394 = vrot.lane.b32.xlu0 %v297, 113
      %v395 = vpop.permute.xlu0 %394
      %vm396 = vcmask 924672
      %v397 = vsel %vm396, %v391, %v393
      %v398 = vsel %vm396, %v393, %v395
      %v401 = vsel %vm326, 0.0, %v397
      %v402 = vsel %vm327, 0.0, %v398
      %403 = vrot.lane.b32.xlu0 %v295, 111
      %v404 = vpop.permute.xlu0 %403
      %405 = vrot.lane.b32.xlu0 %v296, 111
      %v406 = vpop.permute.xlu0 %405
      %407 = vrot.lane.b32.xlu0 %v297, 111
      %v408 = vpop.permute.xlu0 %407
      %vm409 = vcmask 908288
      %v410 = vsel %vm409, %v404, %v406
      %v411 = vsel %vm409, %v406, %v408
      %v414 = vsel %vm348, 0.0, %v410
      %v415 = vsel %vm349, 0.0, %v411
      %416 = vrot.lane.b32.xlu0 %v294, 16
      %v417 = vpop.permute.xlu0 %416
      %418 = vrot.lane.b32.xlu0 %v295, 16
      %v419 = vpop.permute.xlu0 %418
      %420 = vrot.lane.b32.xlu0 %v296, 16
      %v421 = vpop.permute.xlu0 %420
      %vm422 = vcmask 130048
      %v423 = vsel %vm422, %v417, %v419
      %v424 = vsel %vm422, %v419, %v421
      %427 = vrot.lane.b32.xlu0 %v295, 112
      %v428 = vpop.permute.xlu0 %427
      %429 = vrot.lane.b32.xlu0 %v296, 112
      %v430 = vpop.permute.xlu0 %429
      %431 = vrot.lane.b32.xlu0 %v297, 112
      %v432 = vpop.permute.xlu0 %431
      %vm433 = vcmask 916480
      %v434 = vsel %vm433, %v428, %v430
      %v435 = vsel %vm433, %v430, %v432
      %v438 = vpack.c.bf16 %v423, %v342
      %v439 = vpack.c.bf16 %v424, %v343
      %v440 = vpack.c.bf16 %v374, %v361
      %v441 = vpack.c.bf16 %v375, %v362
      %v442 = vpack.c.bf16 %v388, %v295
      %v443 = vpack.c.bf16 %v389, %v296
      %v444 = vpack.c.bf16 %v434, %v401
      %v445 = vpack.c.bf16 %v435, %v402
      %v446 = vpack.c.bf16 %v414, %v414
      %v447 = vpack.c.bf16 %v415, %v415
      %v448 = vld [vmem:[%s1] sm:$0xf]
      %v449 = vld [vmem:[%s1 + $0x4] sm:$0xf]
      %v452 = vunpack.c.l.b16 %v448
      %v453 = vunpack.c.l.b16 %v449
      %v454 = vpack.c.b16 %v453, %v452
      %vm455 = vcmask 588800
      %v457 = vsel %vm455, %v454, 0
      %vm459 = vcmask 1043456
      %v461 = vsel %vm459, %v446, 0
      %v464 = vsel %vm459, %v447, 0
      %466 = vmatprep.subr.bf16.mxu0 0
      %467 = vmatpush1.bf16.msra.mxu0 0
      %468 = vmatprep.subr.bf16.mxu0 0
      %469 = vmatpush1.bf16.msra.mxu0 0
      %470 = vmatprep.subr.bf16.mxu0 0
      %471 = vmatpush1.bf16.msra.mxu0 0
      %472 = vmatprep.subr.bf16.mxu0 %v464
      %473 = vmatpush1.bf16.msra.mxu0 %v461
      %474 = vmatprep.subr.bf16.mxu0 %v445
      %475 = vmatpush1.bf16.msra.mxu0 %v444
      %476 = vmatprep.subr.bf16.mxu0 %v443
      %477 = vmatpush1.bf16.msra.mxu0 %v442
      %478 = vmatprep.subr.bf16.mxu0 %v441
      %479 = vmatpush1.bf16.msra.mxu0 %v440
      %480 = vmatprep.subr.bf16.mxu0 %v439
      %481 = vmatpush1.bf16.msra.mxu0 %v438
      %482 = vmatprep.subr.bf16.mxu0 0
      %483 = vmatpush2.bf16.msra.mxu0 0
      %484 = vmatprep.subr.bf16.mxu0 0
      %485 = vmatpush2.bf16.msra.mxu0 0
      %486 = vmatprep.subr.bf16.mxu0 0
      %487 = vmatpush2.bf16.msra.mxu0 0
      %488 = vmatprep.subr.bf16.mxu0 0
      %489 = vmatpush2.bf16.msra.mxu0 0
      %490 = vmatprep.subr.bf16.mxu0 0
      %491 = vmatpush2.bf16.msra.mxu0 0
      %492 = vmatprep.subr.bf16.mxu0 0
      %493 = vmatpush2.bf16.msra.mxu0 0
      %494 = vmatprep.subr.bf16.mxu0 0
      %495 = vmatpush2.bf16.msra.mxu0 0
      %496 = vmatprep.subr.bf16.mxu0 0
      %497 = vmatpush2.bf16.msra.mxu0 0
      %498 = vmatprep.mubr.bf16.mxu0 0
      %499 = vmatmul.mubr.bf16.gmra.mxu0 %v457
      %v500 = vpop.f32.mrf.mxu0
      %v501 = vadd.f32 0.0, %v500
      %v502 = vpop.f32.mrf.mxu0
      %v503 = vadd.f32 0.0, %v502
      %v504 = vpop.f32.mrf.mxu0
      %v505 = vadd.f32 0.0, %v504
      %v506 = vpop.f32.mrf.mxu0
      %v507 = vadd.f32 0.0, %v506
      %508 = vdwg.mxu0
      %v509 = vadd.f32 %v501, %v503
      %510 = vadd.xlane.f32.xlu0 %v509
      %v511 = vpop.xlane.xlu0 %510
      %v512 = vadd.f32 %v505, %v507
      %513 = vadd.xlane.f32.xlu0 %v512
      %v514 = vpop.xlane.xlu0 %513
      %v515 = vmul.f32 %v501, %v501
      %v516 = vmul.f32 %v503, %v503
      %v517 = vmul.f32 %v505, %v505
      %v518 = vmul.f32 %v507, %v507
      %v519 = vadd.f32 %v515, %v516
      %520 = vadd.xlane.f32.xlu0 %v519
      %v521 = vpop.xlane.xlu0 %520
      %v522 = vadd.f32 %v517, %v518
      %523 = vadd.xlane.f32.xlu0 %v522
      %v524 = vpop.xlane.xlu0 %523
      %v525 = vsel %vm369, %v511, %v521
      %v526 = vsel %vm369, %v514, %v524
      %vm527 = vcmask 15360
      %528 = vst.msk [vmem:[%s237] sm:$0xff] %vm527, %v525
      %529 = vst.msk [vmem:[%s237 + $0x8] sm:$0xff] %vm527, %v526
      %v530 = vpack.c.bf16 %v505, %v501
      %v531 = vpack.c.bf16 %v507, %v503
      %v535 = vunpack.c.l.b16 0
      %v536 = vunpack.c.l.b16 %v530
      %v537 = vunpack.c.l.b16 %v531
      %v538 = vunpack.c.h.b16 0
      %v539 = vunpack.c.h.b16 %v530
      %v540 = vunpack.c.h.b16 %v531
      %v541 = vpack.c.b16 %v536, %v535
      %v542 = vpack.c.b16 %v535, %v537
      %v543 = vpack.c.b16 %v539, %v538
      %v544 = vpack.c.b16 %v538, %v540
      %549 = vst [vmem:[%s232] sm:$0xff] %v541
      %550 = vst [vmem:[%s232 + $0x8] sm:$0xff] %v542
      %551 = vst [vmem:[%s232 + $0x10] sm:$0xff] %v543
      %552 = vst [vmem:[%s232 + $0x18] sm:$0xff] %v544
      %p553 = scmp.lt.s32.totalorder %s17, 1
      %s554 = scalar_select %p553, %s17, 1
      %s555 = smul.addr %s554, 8
      %s556 = smul.addr %s555, 4
      %s557 = scalar_lea.vmem %s4, %s556
      %p558 = scmp.lt.s32.totalorder %s17, 1
      %s559 = scalar_select %p558, %s17, 1
      %s560 = smul.addr %s559, 2
      %s561 = smul.addr %s560, 8
      %s562 = scalar_lea.vmem %s5, %s561
      // Predicated region
      $region37: #{_lambda_.6} parent=35 // pred_check
        %p563 = pneg %p124
      $region38: #{_lambda_.6} parent=35 // pred_check_branch
        %565 = sbr.rel (%p563) target = $region40
      $region39: #{_lambda_.6} parent=35 // pred_region
        _
      $region40: #{_lambda_.6} parent=35 // pred_fallthru
        _
      // Predicated region
      $region41: #{_lambda_.6} parent=35 // pred_check
        %p566 = pneg %p150
      $region42: #{_lambda_.6} parent=35 // pred_check_branch
        %568 = sbr.rel (%p566) target = $region44
      $region43: #{_lambda_.6} parent=35 // pred_region
        _
      $region44: #{_lambda_.6} parent=35 // pred_fallthru
        _
    $region36: #{_lambda_.6} parent=5 // pred_fallthru
      _
    %p569 = scmp.le.s32.totalorder 2, %s12
    // Predicated region
    $region45: #{_lambda_.6} parent=5 // pred_check
      %p570 = pneg %p569
    $region46: #{_lambda_.6} parent=5 // pred_check_branch
      %572 = sbr.rel (%p570) target = $region48
    $region47: #{_lambda_.6} parent=5 // pred_region
      %s573 = ssub.s32 %s12, 2
      // Predicated region
      $region49: #{_lambda_.6} parent=47 // pred_check
        %p574 = pneg %p130
      $region50: #{_lambda_.6} parent=47 // pred_check_branch
        %576 = sbr.rel (%p574) target = $region52
      $region51: #{_lambda_.6} parent=47 // pred_region
        %p577 = scmp.lt.s32.totalorder %s18, 1
        %s578 = scalar_select %p577, %s18, 1
        %s579 = smul.addr %s578, 8
        %s580 = smul.addr %s579, 4
        %s581 = scalar_lea.vmem %s4, %s580
      $region52: #{_lambda_.6} parent=47 // pred_fallthru
        _
      // Predicated region
      $region53: #{_lambda_.6} parent=47 // pred_check
        %p582 = pneg %p156
      $region54: #{_lambda_.6} parent=47 // pred_check_branch
        %584 = sbr.rel (%p582) target = $region56
      $region55: #{_lambda_.6} parent=47 // pred_region
        %p585 = scmp.lt.s32.totalorder %s18, 1
        %s586 = scalar_select %p585, %s18, 1
        %s587 = smul.addr %s586, 2
        %s588 = smul.addr %s587, 8
        %s589 = scalar_lea.vmem %s5, %s588
      $region56: #{_lambda_.6} parent=47 // pred_fallthru
        _
    $region48: #{_lambda_.6} parent=5 // pred_fallthru
      _
  $region6: #{_lambda_.6} parent=0 // loop_footer
    %s16 = sadd.s32 1, %s12
  $region7: #{_lambda_.6} parent=0 // loop_footer_branch
    %11 = sbr.rel target = $region3
  $region8: #{_lambda_.6} parent=0 // loop_exit
    _

// kernel: _lambda_.5
$region0: #{_lambda_.5}
  #allocation0 [shape = 'u32[]', space=smem, size = 0x4, offset = 0x4, fixed_abs, tag = 'smem constant byte address 0x4 - core index']
  #allocation1 [shape = 'u32[144,128]{1,0:T(1,128)}', space=vmem, size = 0x12000, scoped, tag = 'internal scratch']
  %s0 = inlined_call_operand.vmem [shape: bf16[2,8,512], index: 0, kind: input, shape index: {}]
  %s1 = inlined_call_operand.vmem [shape: bf16[8,72], index: 1, kind: input, shape index: {}]
  %s2 = inlined_call_operand.vmem [shape: f32[8,1], index: 2, kind: input, shape index: {}]
  %s3 = inlined_call_operand.vmem [shape: f32[8,1], index: 3, kind: input, shape index: {}]
  %s4 = inlined_call_operand.vmem [shape: bf16[2,8,512], index: 4, kind: output, shape index: {0}]
  %s5 = inlined_call_operand.vmem [shape: f32[2,8,2], index: 5, kind: output, shape index: {1}]
  %6 = xla_tuple %s4, %s5
  %s7 = sld [smem:[#allocation0]]
  $region57: #{_lambda_.5} parent=0
    _
  %s9 = ssub.s32 1, %s7
  %s10 = scalar_select 0, %s9, %s7
  loop: start=0, step=1, limit=4
  $region2: #{_lambda_.5} parent=0 // loop_pre_header
    _
  $region3: #{_lambda_.5} parent=0 // loop_header
    %s12 = sphi 0, %s16
    %p13 = scmp.ge.s32.totalorder %s12, 4
    %s22 = sphi 0, %s24
    %s25 = sphi 0, %s22
    %s26 = sphi 0, %s25
    %s42 = sphi 0, %s26
    %s46 = sphi 0, %s46
    %s48 = sphi 0, %s46
    %s49 = sphi 0, %s48
    %s63 = sphi 0, %s49
    %s67 = sphi 0, %s67
    %s69 = sphi 0, %s67
    %s70 = sphi 0, %s69
    %s84 = sphi 0, %s70
    %s88 = sphi 0, %s88
    %s90 = sphi 0, %s88
    %s91 = sphi 0, %s90
    %s105 = sphi 0, %s91
    %s111 = sphi 0, %s113
    %s114 = sphi 0, %s111
    %s115 = sphi 0, %s114
    %s131 = sphi 0, %s115
    %s137 = sphi 0, %s139
    %s140 = sphi 0, %s137
    %s141 = sphi 0, %s140
    %s157 = sphi 0, %s141
  $region4: #{_lambda_.5} parent=0 // loop_header_branch
    %15 = sbr.rel (%p13) target = $region8
  $region5: #{_lambda_.5} parent=0 // loop_body
    %s17 = ssub.s32 %s12, 1
    %s18 = ssub.s32 %s12, 2
    %s19 = sadd.s32 %s12, 1
    %s20 = ssub.s32 %s12, %s19
    %p21 = scmp.eq.s32.totalorder %s20, 0
    %s23 = sadd.s32 %s22, 1
    %s24 = scalar_select %p21, %s22, %s23
    %p27 = pneg %p21
    %p28 = scmp.eq.s32.totalorder %s12, 1
    %p29 = por %p27, %p28
    %p30 = scmp.ne.s32.totalorder %s22, %s25
    %p31 = scmp.eq.s32.totalorder %s12, 0
    %p32 = por %p30, %p31
    %p33 = scmp.ne.s32.totalorder %s22, %s25
    %p34 = scmp.eq.s32.totalorder %s17, 1
    %p35 = por %p33, %p34
    %p36 = scmp.ne.s32.totalorder %s25, %s26
    %p37 = scmp.eq.s32.totalorder %s17, 0
    %p38 = por %p36, %p37
    %p39 = scmp.ne.s32.totalorder %s25, %s26
    %p40 = scmp.eq.s32.totalorder %s18, 1
    %p41 = por %p39, %p40
    %p43 = scmp.ne.s32.totalorder %s26, %s42
    %p44 = scmp.eq.s32.totalorder %s18, 0
    %p45 = por %p43, %p44
    %s47 = sadd.s32 %s46, 1
    %p50 = scmp.eq.s32.totalorder %s12, 1
    %p51 = scmp.ne.s32.totalorder %s46, %s48
    %p52 = scmp.eq.s32.totalorder %s12, 0
    %p53 = por %p51, %p52
    %p54 = scmp.ne.s32.totalorder %s46, %s48
    %p55 = scmp.eq.s32.totalorder %s17, 1
    %p56 = por %p54, %p55
    %p57 = scmp.ne.s32.totalorder %s48, %s49
    %p58 = scmp.eq.s32.totalorder %s17, 0
    %p59 = por %p57, %p58
    %p60 = scmp.ne.s32.totalorder %s48, %s49
    %p61 = scmp.eq.s32.totalorder %s18, 1
    %p62 = por %p60, %p61
    %p64 = scmp.ne.s32.totalorder %s49, %s63
    %p65 = scmp.eq.s32.totalorder %s18, 0
    %p66 = por %p64, %p65
    %s68 = sadd.s32 %s67, 1
    %p71 = scmp.eq.s32.totalorder %s12, 1
    %p72 = scmp.ne.s32.totalorder %s67, %s69
    %p73 = scmp.eq.s32.totalorder %s12, 0
    %p74 = por %p72, %p73
    %p75 = scmp.ne.s32.totalorder %s67, %s69
    %p76 = scmp.eq.s32.totalorder %s17, 1
    %p77 = por %p75, %p76
    %p78 = scmp.ne.s32.totalorder %s69, %s70
    %p79 = scmp.eq.s32.totalorder %s17, 0
    %p80 = por %p78, %p79
    %p81 = scmp.ne.s32.totalorder %s69, %s70
    %p82 = scmp.eq.s32.totalorder %s18, 1
    %p83 = por %p81, %p82
    %p85 = scmp.ne.s32.totalorder %s70, %s84
    %p86 = scmp.eq.s32.totalorder %s18, 0
    %p87 = por %p85, %p86
    %s89 = sadd.s32 %s88, 1
    %p92 = scmp.eq.s32.totalorder %s12, 1
    %p93 = scmp.ne.s32.totalorder %s88, %s90
    %p94 = scmp.eq.s32.totalorder %s12, 0
    %p95 = por %p93, %p94
    %p96 = scmp.ne.s32.totalorder %s88, %s90
    %p97 = scmp.eq.s32.totalorder %s17, 1
    %p98 = por %p96, %p97
    %p99 = scmp.ne.s32.totalorder %s90, %s91
    %p100 = scmp.eq.s32.totalorder %s17, 0
    %p101 = por %p99, %p100
    %p102 = scmp.ne.s32.totalorder %s90, %s91
    %p103 = scmp.eq.s32.totalorder %s18, 1
    %p104 = por %p102, %p103
    %p106 = scmp.ne.s32.totalorder %s91, %s105
    %p107 = scmp.eq.s32.totalorder %s18, 0
    %p108 = por %p106, %p107
    %s109 = ssub.s32 %s12, %s19
    %p110 = scmp.eq.s32.totalorder %s109, 0
    %s112 = sadd.s32 %s111, 1
    %s113 = scalar_select %p110, %s111, %s112
    %p116 = pneg %p110
    %p117 = scmp.eq.s32.totalorder %s12, 1
    %p118 = por %p116, %p117
    %p119 = scmp.ne.s32.totalorder %s111, %s114
    %p120 = scmp.eq.s32.totalorder %s12, 0
    %p121 = por %p119, %p120
    %p122 = scmp.ne.s32.totalorder %s111, %s114
    %p123 = scmp.eq.s32.totalorder %s17, 1
    %p124 = por %p122, %p123
    %p125 = scmp.ne.s32.totalorder %s114, %s115
    %p126 = scmp.eq.s32.totalorder %s17, 0
    %p127 = por %p125, %p126
    %p128 = scmp.ne.s32.totalorder %s114, %s115
    %p129 = scmp.eq.s32.totalorder %s18, 1
    %p130 = por %p128, %p129
    %p132 = scmp.ne.s32.totalorder %s115, %s131
    %p133 = scmp.eq.s32.totalorder %s18, 0
    %p134 = por %p132, %p133
    %s135 = ssub.s32 %s12, %s19
    %p136 = scmp.eq.s32.totalorder %s135, 0
    %s138 = sadd.s32 %s137, 1
    %s139 = scalar_select %p136, %s137, %s138
    %p142 = pneg %p136
    %p143 = scmp.eq.s32.totalorder %s12, 1
    %p144 = por %p142, %p143
    %p145 = scmp.ne.s32.totalorder %s137, %s140
    %p146 = scmp.eq.s32.totalorder %s12, 0
    %p147 = por %p145, %p146
    %p148 = scmp.ne.s32.totalorder %s137, %s140
    %p149 = scmp.eq.s32.totalorder %s17, 1
    %p150 = por %p148, %p149
    %p151 = scmp.ne.s32.totalorder %s140, %s141
    %p152 = scmp.eq.s32.totalorder %s17, 0
    %p153 = por %p151, %p152
    %p154 = scmp.ne.s32.totalorder %s140, %s141
    %p155 = scmp.eq.s32.totalorder %s18, 1
    %p156 = por %p154, %p155
    %p158 = scmp.ne.s32.totalorder %s141, %s157
    %p159 = scmp.eq.s32.totalorder %s18, 0
    %p160 = por %p158, %p159
    %p161 = scmp.le.s32.totalorder 1, %s12
    %p162 = scmp.lt.s32.totalorder %s12, 3
    %p163 = pnand %p161, %p162
    %p164 = pneg %p163
    // Predicated region
    $region9: #{_lambda_.5} parent=5 // pred_check
      _
    $region10: #{_lambda_.5} parent=5 // pred_check_branch
      %166 = sbr.rel (%p163) target = $region12
    $region11: #{_lambda_.5} parent=5 // pred_region
      %s167 = ssub.s32 %s12, 1
      // Predicated region
      $region13: #{_lambda_.5} parent=11 // pred_check
        %p168 = pneg %p59
      $region14: #{_lambda_.5} parent=11 // pred_check_branch
        %170 = sbr.rel (%p168) target = $region16
      $region15: #{_lambda_.5} parent=11 // pred_region
        _
      $region16: #{_lambda_.5} parent=11 // pred_fallthru
        _
      // Predicated region
      $region17: #{_lambda_.5} parent=11 // pred_check
        %p171 = pneg %p80
      $region18: #{_lambda_.5} parent=11 // pred_check_branch
        %173 = sbr.rel (%p171) target = $region20
      $region19: #{_lambda_.5} parent=11 // pred_region
        _
      $region20: #{_lambda_.5} parent=11 // pred_fallthru
        _
      // Predicated region
      $region21: #{_lambda_.5} parent=11 // pred_check
        %p174 = pneg %p101
      $region22: #{_lambda_.5} parent=11 // pred_check_branch
        %176 = sbr.rel (%p174) target = $region24
      $region23: #{_lambda_.5} parent=11 // pred_region
        _
      $region24: #{_lambda_.5} parent=11 // pred_fallthru
        _
    $region12: #{_lambda_.5} parent=5 // pred_fallthru
      _
    %p177 = scmp.lt.s32.totalorder %s12, 2
    // Predicated region
    $region25: #{_lambda_.5} parent=5 // pred_check
      %p178 = pneg %p177
    $region26: #{_lambda_.5} parent=5 // pred_check_branch
      %180 = sbr.rel (%p178) target = $region28
    $region27: #{_lambda_.5} parent=5 // pred_region
      // Predicated region
      $region29: #{_lambda_.5} parent=27 // pred_check
        %p181 = pneg %p32
      $region30: #{_lambda_.5} parent=27 // pred_check_branch
        %183 = sbr.rel (%p181) target = $region32
      $region31: #{_lambda_.5} parent=27 // pred_region
        %p184 = scmp.lt.s32.totalorder %s12, 1
        %s185 = scalar_select %p184, %s12, 1
        %s186 = smul.addr %s185, 4
        %s187 = smul.addr %s186, 4
        %s188 = scalar_lea.vmem %s0, %s187
      $region32: #{_lambda_.5} parent=27 // pred_fallthru
        _
    $region28: #{_lambda_.5} parent=5 // pred_fallthru
      _
    %p189 = scmp.le.s32.totalorder 1, %s12
    %p190 = scmp.lt.s32.totalorder %s12, 3
    %p191 = pnand %p189, %p190
    %p192 = pneg %p191
    // Predicated region
    $region33: #{_lambda_.5} parent=5 // pred_check
      _
    $region34: #{_lambda_.5} parent=5 // pred_check_branch
      %194 = sbr.rel (%p191) target = $region36
    $region35: #{_lambda_.5} parent=5 // pred_region
      %s195 = ssub.s32 %s12, 1
      %p196 = scmp.lt.s32.totalorder %s17, 1
      %s197 = scalar_select %p196, %s17, 1
      %s198 = smul.addr %s197, 4
      %s199 = smul.addr %s198, 4
      %s200 = scalar_lea.vmem %s0, %s199
      %p201 = pneg %p38
      %p202 = pneg %p35
      %p203 = pneg %p59
      %p204 = pneg %p56
      %p205 = pneg %p80
      %p206 = pneg %p77
      %p207 = pneg %p101
      %p208 = pneg %p98
      %p209 = pneg %p127
      %p210 = pneg %p124
      %p211 = scmp.lt.s32.totalorder %s17, 1
      %s212 = scalar_select %p211, %s17, 1
      %s213 = smul.addr %s212, 4
      %s214 = smul.addr %s213, 4
      %s215 = scalar_lea.vmem %s4, %s214
      %p216 = pneg %p153
      %p217 = pneg %p150
      %p218 = scmp.lt.s32.totalorder %s17, 1
      %s219 = scalar_select %p218, %s17, 1
      %s220 = smul.addr %s219, 8
      %s221 = scalar_lea.vmem %s5, %s220
      %p222 = scmp.lt.s32.totalorder %s17, 1
      %s223 = scalar_select %p222, %s17, 1
      %s224 = smul.addr %s223, 4
      %s225 = smul.addr %s224, 4
      %s226 = scalar_lea.vmem %s0, %s225
      %p227 = scmp.lt.s32.totalorder %s17, 1
      %s228 = scalar_select %p227, %s17, 1
      %s229 = smul.addr %s228, 4
      %s230 = smul.addr %s229, 4
      %s231 = scalar_lea.vmem %s4, %s230
      %p232 = scmp.lt.s32.totalorder %s17, 1
      %s233 = scalar_select %p232, %s17, 1
      %s234 = smul.addr %s233, 8
      %s235 = scalar_lea.vmem %s5, %s234
      %v237 = vld [vmem:[%s226] sm:$0xff]
      %v238 = vld [vmem:[%s226 + $0x8] sm:$0xff]
      %v239 = vunpack.c.l.bf16 %v237
      %v240 = vunpack.c.h.bf16 %v237
      %v241 = vunpack.c.l.bf16 %v238
      %v242 = vunpack.c.h.bf16 %v238
      %v243 = vld [vmem:[%s2] sm:$0xff]
      %245 = vset.pattern.permute.xlu0 0
      %246 = vperm.xlu0 %245, %v243
      %v247 = vpop.permute.xlu0 %246
      %v249 = vmul.f32 %v239, %v247
      %v250 = vmul.f32 %v240, %v247
      %v251 = vmul.f32 %v241, %v247
      %v252 = vmul.f32 %v242, %v247
      %v253 = vld [vmem:[%s3] sm:$0xff]
      %255 = vset.pattern.permute.xlu0 0
      %256 = vperm.xlu0 %255, %v253
      %v257 = vpop.permute.xlu0 %256
      %v259 = vadd.f32 %v249, %v257
      %v260 = vadd.f32 %v250, %v257
      %v261 = vadd.f32 %v251, %v257
      %v262 = vadd.f32 %v252, %v257
      %v263 = vlaneseq
      %v264 = vand.u32 %v263, 127
      %v265 = vadd.s32 %v264, 128
      %v266 = vadd.s32 %v264, 256
      %v267 = vadd.s32 %v264, 384
      %vm268 = vcmp.ge.s32.totalorder %v264, 128
      %vm269 = vcmp.ge.s32.totalorder %v265, 128
      %vm270 = vcmp.ge.s32.totalorder %v266, 128
      %vm271 = vcmp.ge.s32.totalorder %v267, 128
      %vm272 = vcmp.lt.s32.totalorder %v264, 384
      %vm273 = vcmp.lt.s32.totalorder %v265, 384
      %vm274 = vcmp.lt.s32.totalorder %v266, 384
      %vm275 = vcmp.lt.s32.totalorder %v267, 384
      %vm276 = vmand %vm268, %vm272
      %vm277 = vmand %vm269, %vm273
      %vm278 = vmand %vm270, %vm274
      %vm279 = vmand %vm271, %vm275
      %v280 = vsel %vm276, 1, 0
      %v281 = vsel %vm277, 1, 0
      %v282 = vsel %vm278, 1, 0
      %v283 = vsel %vm279, 1, 0
      %vm284 = vcmp.eq.s32.totalorder %v280, 1
      %vm285 = vcmp.eq.s32.totalorder %v281, 1
      %vm286 = vcmp.eq.s32.totalorder %v282, 1
      %vm287 = vcmp.eq.s32.totalorder %v283, 1
      %v288 = vsel %vm284, %v259, 0.0
      %v289 = vsel %vm285, %v260, 0.0
      %v290 = vsel %vm286, %v261, 0.0
      %v291 = vsel %vm287, %v262, 0.0
      %vm292 = vcmp.lt.s32.totalorder %v264, 0
      %v293 = vsub.s32 0, %v264
      %v294 = vsel %vm292, %v293, %v264
      %v295 = vshrl.u32 %v294, 4
      %v296 = vand.u32 %v294, 15
      %v297 = vsub.s32 0, %v296
      %v298 = vsel %vm292, %v297, %v296
      %vm299 = vcmp.lt.s32.totalorder %v265, 0
      %v300 = vsub.s32 0, %v265
      %v301 = vsel %vm299, %v300, %v265
      %v302 = vshrl.u32 %v301, 4
      %v303 = vand.u32 %v301, 15
      %v304 = vsub.s32 0, %v303
      %v305 = vsel %vm299, %v304, %v303
      %vm306 = vcmp.ne.s32.totalorder %v298, 0
      %vm307 = vcmp.ne.s32.totalorder %v305, 0
      %vm308 = vcmp.lt.s32.totalorder %v298, 0
      %vm309 = vcmp.lt.s32.totalorder %v305, 0
      %vm310 = vmand %vm308, %vm306
      %vm311 = vmand %vm309, %vm307
      %v312 = vadd.s32 %v298, 16
      %v313 = vadd.s32 %v305, 16
      %v314 = vsel %vm310, %v312, %v298
      %v315 = vsel %vm311, %v313, %v305
      %vm316 = vcmp.eq.s32.totalorder %v314, 0
      %vm317 = vcmp.eq.s32.totalorder %v315, 0
      %v318 = vsel %vm316, 1, 0
      %v319 = vsel %vm317, 1, 0
      %vm320 = vcmp.eq.s32.totalorder %v318, 1
      %vm321 = vcmp.eq.s32.totalorder %v319, 1
      %325 = vrot.lane.b32.xlu0 %v288, 17
      %v326 = vpop.permute.xlu0 %325
      %327 = vrot.lane.b32.xlu0 %v289, 17
      %v328 = vpop.permute.xlu0 %327
      %329 = vrot.lane.b32.xlu0 %v290, 17
      %v330 = vpop.permute.xlu0 %329
      %vm331 = vcmask 138240
      %v332 = vsel %vm331, %v326, %v328
      %v333 = vsel %vm331, %v328, %v330
      %v336 = vsel %vm320, 0.0, %v332
      %v337 = vsel %vm321, 0.0, %v333
      %vm338 = vcmp.eq.s32.totalorder %v314, 15
      %vm339 = vcmp.eq.s32.totalorder %v315, 15
      %v340 = vsel %vm338, 1, 0
      %v341 = vsel %vm339, 1, 0
      %vm342 = vcmp.eq.s32.totalorder %v340, 1
      %vm343 = vcmp.eq.s32.totalorder %v341, 1
      %344 = vrot.lane.b32.xlu0 %v288, 15
      %v345 = vpop.permute.xlu0 %344
      %346 = vrot.lane.b32.xlu0 %v289, 15
      %v347 = vpop.permute.xlu0 %346
      %348 = vrot.lane.b32.xlu0 %v290, 15
      %v349 = vpop.permute.xlu0 %348
      %vm350 = vcmask 121856
      %v351 = vsel %vm350, %v345, %v347
      %v352 = vsel %vm350, %v347, %v349
      %v355 = vsel %vm342, 0.0, %v351
      %v356 = vsel %vm343, 0.0, %v352
      %357 = vrot.lane.b32.xlu0 %v288, 1
      %v358 = vpop.permute.xlu0 %357
      %359 = vrot.lane.b32.xlu0 %v289, 1
      %v360 = vpop.permute.xlu0 %359
      %361 = vrot.lane.b32.xlu0 %v290, 1
      %v362 = vpop.permute.xlu0 %361
      %vm363 = vcmask 7168
      %v364 = vsel %vm363, %v358, %v360
      %v365 = vsel %vm363, %v360, %v362
      %v368 = vsel %vm320, 0.0, %v364
      %v369 = vsel %vm321, 0.0, %v365
      %371 = vrot.lane.b32.xlu0 %v289, 127
      %v372 = vpop.permute.xlu0 %371
      %373 = vrot.lane.b32.xlu0 %v290, 127
      %v374 = vpop.permute.xlu0 %373
      %375 = vrot.lane.b32.xlu0 %v291, 127
      %v376 = vpop.permute.xlu0 %375
      %vm377 = vcmask 1039360
      %v378 = vsel %vm377, %v372, %v374
      %v379 = vsel %vm377, %v374, %v376
      %v382 = vsel %vm342, 0.0, %v378
      %v383 = vsel %vm343, 0.0, %v379
      %384 = vrot.lane.b32.xlu0 %v289, 113
      %v385 = vpop.permute.xlu0 %384
      %386 = vrot.lane.b32.xlu0 %v290, 113
      %v387 = vpop.permute.xlu0 %386
      %388 = vrot.lane.b32.xlu0 %v291, 113
      %v389 = vpop.permute.xlu0 %388
      %vm390 = vcmask 924672
      %v391 = vsel %vm390, %v385, %v387
      %v392 = vsel %vm390, %v387, %v389
      %v395 = vsel %vm320, 0.0, %v391
      %v396 = vsel %vm321, 0.0, %v392
      %397 = vrot.lane.b32.xlu0 %v289, 111
      %v398 = vpop.permute.xlu0 %397
      %399 = vrot.lane.b32.xlu0 %v290, 111
      %v400 = vpop.permute.xlu0 %399
      %401 = vrot.lane.b32.xlu0 %v291, 111
      %v402 = vpop.permute.xlu0 %401
      %vm403 = vcmask 908288
      %v404 = vsel %vm403, %v398, %v400
      %v405 = vsel %vm403, %v400, %v402
      %v408 = vsel %vm342, 0.0, %v404
      %v409 = vsel %vm343, 0.0, %v405
      %410 = vrot.lane.b32.xlu0 %v288, 16
      %v411 = vpop.permute.xlu0 %410
      %412 = vrot.lane.b32.xlu0 %v289, 16
      %v413 = vpop.permute.xlu0 %412
      %414 = vrot.lane.b32.xlu0 %v290, 16
      %v415 = vpop.permute.xlu0 %414
      %vm416 = vcmask 130048
      %v417 = vsel %vm416, %v411, %v413
      %v418 = vsel %vm416, %v413, %v415
      %421 = vrot.lane.b32.xlu0 %v289, 112
      %v422 = vpop.permute.xlu0 %421
      %423 = vrot.lane.b32.xlu0 %v290, 112
      %v424 = vpop.permute.xlu0 %423
      %425 = vrot.lane.b32.xlu0 %v291, 112
      %v426 = vpop.permute.xlu0 %425
      %vm427 = vcmask 916480
      %v428 = vsel %vm427, %v422, %v424
      %v429 = vsel %vm427, %v424, %v426
      %v432 = vpack.c.bf16 %v417, %v336
      %v433 = vpack.c.bf16 %v418, %v337
      %v434 = vpack.c.bf16 %v368, %v355
      %v435 = vpack.c.bf16 %v369, %v356
      %v436 = vpack.c.bf16 %v382, %v289
      %v437 = vpack.c.bf16 %v383, %v290
      %v438 = vpack.c.bf16 %v428, %v395
      %v439 = vpack.c.bf16 %v429, %v396
      %v440 = vpack.c.bf16 %v408, %v408
      %v441 = vpack.c.bf16 %v409, %v409
      %v442 = vld [vmem:[%s1] sm:$0xf]
      %vm443 = vcmask 588800
      %v445 = vsel %vm443, %v442, 0
      %vm447 = vcmask 1043456
      %v449 = vsel %vm447, %v440, 0
      %v452 = vsel %vm447, %v441, 0
      %454 = vmatprep.subr.bf16.mxu0 0
      %455 = vmatpush1.bf16.msra.mxu0 0
      %456 = vmatprep.subr.bf16.mxu0 0
      %457 = vmatpush1.bf16.msra.mxu0 0
      %458 = vmatprep.subr.bf16.mxu0 0
      %459 = vmatpush1.bf16.msra.mxu0 0
      %460 = vmatprep.subr.bf16.mxu0 %v452
      %461 = vmatpush1.bf16.msra.mxu0 %v449
      %462 = vmatprep.subr.bf16.mxu0 %v439
      %463 = vmatpush1.bf16.msra.mxu0 %v438
      %464 = vmatprep.subr.bf16.mxu0 %v437
      %465 = vmatpush1.bf16.msra.mxu0 %v436
      %466 = vmatprep.subr.bf16.mxu0 %v435
      %467 = vmatpush1.bf16.msra.mxu0 %v434
      %468 = vmatprep.subr.bf16.mxu0 %v433
      %469 = vmatpush1.bf16.msra.mxu0 %v432
      %470 = vmatprep.subr.bf16.mxu0 0
      %471 = vmatpush2.bf16.msra.mxu0 0
      %472 = vmatprep.subr.bf16.mxu0 0
      %473 = vmatpush2.bf16.msra.mxu0 0
      %474 = vmatprep.subr.bf16.mxu0 0
      %475 = vmatpush2.bf16.msra.mxu0 0
      %476 = vmatprep.subr.bf16.mxu0 0
      %477 = vmatpush2.bf16.msra.mxu0 0
      %478 = vmatprep.subr.bf16.mxu0 0
      %479 = vmatpush2.bf16.msra.mxu0 0
      %480 = vmatprep.subr.bf16.mxu0 0
      %481 = vmatpush2.bf16.msra.mxu0 0
      %482 = vmatprep.subr.bf16.mxu0 0
      %483 = vmatpush2.bf16.msra.mxu0 0
      %484 = vmatprep.subr.bf16.mxu0 0
      %485 = vmatpush2.bf16.msra.mxu0 0
      %486 = vmatprep.mubr.bf16.mxu0 0
      %487 = vmatmul.mubr.bf16.gmra.mxu0 %v445
      %v488 = vpop.f32.mrf.mxu0
      %v489 = vadd.f32 0.0, %v488
      %v490 = vpop.f32.mrf.mxu0
      %v491 = vadd.f32 0.0, %v490
      %v492 = vpop.f32.mrf.mxu0
      %v493 = vpop.f32.mrf.mxu0
      %494 = vdwg.mxu0
      %v495 = vadd.f32 %v489, %v491
      %496 = vadd.xlane.f32.xlu0 %v495
      %v497 = vpop.xlane.xlu0 %496
      %v498 = vmul.f32 %v489, %v489
      %v499 = vmul.f32 %v491, %v491
      %v500 = vadd.f32 %v498, %v499
      %501 = vadd.xlane.f32.xlu0 %v500
      %v502 = vpop.xlane.xlu0 %501
      %v503 = vsel %vm363, %v497, %v502
      %vm504 = vcmask 15360
      %505 = vst.msk [vmem:[%s235] sm:$0xff] %vm504, %v503
      %v506 = vpack.c.bf16 %v489, %v489
      %v507 = vpack.c.bf16 %v491, %v491
      %v511 = vunpack.c.l.b16 0
      %v512 = vunpack.c.l.b16 %v506
      %v513 = vunpack.c.l.b16 %v507
      %v514 = vpack.c.b16 %v512, %v511
      %v515 = vpack.c.b16 %v511, %v513
      %518 = vst [vmem:[%s231] sm:$0xff] %v514
      %519 = vst [vmem:[%s231 + $0x8] sm:$0xff] %v515
      %p520 = scmp.lt.s32.totalorder %s17, 1
      %s521 = scalar_select %p520, %s17, 1
      %s522 = smul.addr %s521, 4
      %s523 = smul.addr %s522, 4
      %s524 = scalar_lea.vmem %s4, %s523
      %p525 = scmp.lt.s32.totalorder %s17, 1
      %s526 = scalar_select %p525, %s17, 1
      %s527 = smul.addr %s526, 8
      %s528 = scalar_lea.vmem %s5, %s527
      // Predicated region
      $region37: #{_lambda_.5} parent=35 // pred_check
        %p529 = pneg %p124
      $region38: #{_lambda_.5} parent=35 // pred_check_branch
        %531 = sbr.rel (%p529) target = $region40
      $region39: #{_lambda_.5} parent=35 // pred_region
        _
      $region40: #{_lambda_.5} parent=35 // pred_fallthru
        _
      // Predicated region
      $region41: #{_lambda_.5} parent=35 // pred_check
        %p532 = pneg %p150
      $region42: #{_lambda_.5} parent=35 // pred_check_branch
        %534 = sbr.rel (%p532) target = $region44
      $region43: #{_lambda_.5} parent=35 // pred_region
        _
      $region44: #{_lambda_.5} parent=35 // pred_fallthru
        _
    $region36: #{_lambda_.5} parent=5 // pred_fallthru
      _
    %p535 = scmp.le.s32.totalorder 2, %s12
    // Predicated region
    $region45: #{_lambda_.5} parent=5 // pred_check
      %p536 = pneg %p535
    $region46: #{_lambda_.5} parent=5 // pred_check_branch
      %538 = sbr.rel (%p536) target = $region48
    $region47: #{_lambda_.5} parent=5 // pred_region
      %s539 = ssub.s32 %s12, 2
      // Predicated region
      $region49: #{_lambda_.5} parent=47 // pred_check
        %p540 = pneg %p130
      $region50: #{_lambda_.5} parent=47 // pred_check_branch
        %542 = sbr.rel (%p540) target = $region52
      $region51: #{_lambda_.5} parent=47 // pred_region
        %p543 = scmp.lt.s32.totalorder %s18, 1
        %s544 = scalar_select %p543, %s18, 1
        %s545 = smul.addr %s544, 4
        %s546 = smul.addr %s545, 4
        %s547 = scalar_lea.vmem %s4, %s546
      $region52: #{_lambda_.5} parent=47 // pred_fallthru
        _
      // Predicated region
      $region53: #{_lambda_.5} parent=47 // pred_check
        %p548 = pneg %p156
      $region54: #{_lambda_.5} parent=47 // pred_check_branch
        %550 = sbr.rel (%p548) target = $region56
      $region55: #{_lambda_.5} parent=47 // pred_region
        %p551 = scmp.lt.s32.totalorder %s18, 1
        %s552 = scalar_select %p551, %s18, 1
        %s553 = smul.addr %s552, 8
        %s554 = scalar_lea.vmem %s5, %s553
      $region56: #{_lambda_.5} parent=47 // pred_fallthru
        _
    $region48: #{_lambda_.5} parent=5 // pred_fallthru
      _
  $region6: #{_lambda_.5} parent=0 // loop_footer
    %s16 = sadd.s32 1, %s12
  $region7: #{_lambda_.5} parent=0 // loop_footer_branch
    %11 = sbr.rel target = $region3
  $region8: #{_lambda_.5} parent=0 // loop_exit
    _

// kernel: _lambda_.8
$region0: #{_lambda_.8}
  #allocation0 [shape = 'u32[]', space=smem, size = 0x4, offset = 0x4, fixed_abs, tag = 'smem constant byte address 0x4 - core index']
  #allocation1 [shape = 'u32[144,128]{1,0:T(1,128)}', space=vmem, size = 0x12000, scoped, tag = 'internal scratch']
  %s0 = inlined_call_operand.vmem [shape: bf16[2,8,512], index: 0, kind: input, shape index: {}]
  %s1 = inlined_call_operand.vmem [shape: bf16[8,72], index: 1, kind: input, shape index: {}]
  %s2 = inlined_call_operand.vmem [shape: f32[8,1], index: 2, kind: input, shape index: {}]
  %s3 = inlined_call_operand.vmem [shape: f32[8,1], index: 3, kind: input, shape index: {}]
  %s4 = inlined_call_operand.vmem [shape: bf16[2,8,512], index: 4, kind: output, shape index: {0}]
  %s5 = inlined_call_operand.vmem [shape: f32[2,8,2], index: 5, kind: output, shape index: {1}]
  %6 = xla_tuple %s4, %s5
  %s7 = sld [smem:[#allocation0]]
  $region57: #{_lambda_.8} parent=0
    _
  %s9 = ssub.s32 1, %s7
  %s10 = scalar_select 0, %s9, %s7
  loop: start=0, step=1, limit=4
  $region2: #{_lambda_.8} parent=0 // loop_pre_header
    _
  $region3: #{_lambda_.8} parent=0 // loop_header
    %s12 = sphi 0, %s16
    %p13 = scmp.ge.s32.totalorder %s12, 4
    %s22 = sphi 0, %s24
    %s25 = sphi 0, %s22
    %s26 = sphi 0, %s25
    %s42 = sphi 0, %s26
    %s46 = sphi 0, %s46
    %s48 = sphi 0, %s46
    %s49 = sphi 0, %s48
    %s63 = sphi 0, %s49
    %s67 = sphi 0, %s67
    %s69 = sphi 0, %s67
    %s70 = sphi 0, %s69
    %s84 = sphi 0, %s70
    %s88 = sphi 0, %s88
    %s90 = sphi 0, %s88
    %s91 = sphi 0, %s90
    %s105 = sphi 0, %s91
    %s111 = sphi 0, %s113
    %s114 = sphi 0, %s111
    %s115 = sphi 0, %s114
    %s131 = sphi 0, %s115
    %s137 = sphi 0, %s139
    %s140 = sphi 0, %s137
    %s141 = sphi 0, %s140
    %s157 = sphi 0, %s141
  $region4: #{_lambda_.8} parent=0 // loop_header_branch
    %15 = sbr.rel (%p13) target = $region8
  $region5: #{_lambda_.8} parent=0 // loop_body
    %s17 = ssub.s32 %s12, 1
    %s18 = ssub.s32 %s12, 2
    %s19 = sadd.s32 %s12, 1
    %s20 = ssub.s32 %s12, %s19
    %p21 = scmp.eq.s32.totalorder %s20, 0
    %s23 = sadd.s32 %s22, 1
    %s24 = scalar_select %p21, %s22, %s23
    %p27 = pneg %p21
    %p28 = scmp.eq.s32.totalorder %s12, 1
    %p29 = por %p27, %p28
    %p30 = scmp.ne.s32.totalorder %s22, %s25
    %p31 = scmp.eq.s32.totalorder %s12, 0
    %p32 = por %p30, %p31
    %p33 = scmp.ne.s32.totalorder %s22, %s25
    %p34 = scmp.eq.s32.totalorder %s17, 1
    %p35 = por %p33, %p34
    %p36 = scmp.ne.s32.totalorder %s25, %s26
    %p37 = scmp.eq.s32.totalorder %s17, 0
    %p38 = por %p36, %p37
    %p39 = scmp.ne.s32.totalorder %s25, %s26
    %p40 = scmp.eq.s32.totalorder %s18, 1
    %p41 = por %p39, %p40
    %p43 = scmp.ne.s32.totalorder %s26, %s42
    %p44 = scmp.eq.s32.totalorder %s18, 0
    %p45 = por %p43, %p44
    %s47 = sadd.s32 %s46, 1
    %p50 = scmp.eq.s32.totalorder %s12, 1
    %p51 = scmp.ne.s32.totalorder %s46, %s48
    %p52 = scmp.eq.s32.totalorder %s12, 0
    %p53 = por %p51, %p52
    %p54 = scmp.ne.s32.totalorder %s46, %s48
    %p55 = scmp.eq.s32.totalorder %s17, 1
    %p56 = por %p54, %p55
    %p57 = scmp.ne.s32.totalorder %s48, %s49
    %p58 = scmp.eq.s32.totalorder %s17, 0
    %p59 = por %p57, %p58
    %p60 = scmp.ne.s32.totalorder %s48, %s49
    %p61 = scmp.eq.s32.totalorder %s18, 1
    %p62 = por %p60, %p61
    %p64 = scmp.ne.s32.totalorder %s49, %s63
    %p65 = scmp.eq.s32.totalorder %s18, 0
    %p66 = por %p64, %p65
    %s68 = sadd.s32 %s67, 1
    %p71 = scmp.eq.s32.totalorder %s12, 1
    %p72 = scmp.ne.s32.totalorder %s67, %s69
    %p73 = scmp.eq.s32.totalorder %s12, 0
    %p74 = por %p72, %p73
    %p75 = scmp.ne.s32.totalorder %s67, %s69
    %p76 = scmp.eq.s32.totalorder %s17, 1
    %p77 = por %p75, %p76
    %p78 = scmp.ne.s32.totalorder %s69, %s70
    %p79 = scmp.eq.s32.totalorder %s17, 0
    %p80 = por %p78, %p79
    %p81 = scmp.ne.s32.totalorder %s69, %s70
    %p82 = scmp.eq.s32.totalorder %s18, 1
    %p83 = por %p81, %p82
    %p85 = scmp.ne.s32.totalorder %s70, %s84
    %p86 = scmp.eq.s32.totalorder %s18, 0
    %p87 = por %p85, %p86
    %s89 = sadd.s32 %s88, 1
    %p92 = scmp.eq.s32.totalorder %s12, 1
    %p93 = scmp.ne.s32.totalorder %s88, %s90
    %p94 = scmp.eq.s32.totalorder %s12, 0
    %p95 = por %p93, %p94
    %p96 = scmp.ne.s32.totalorder %s88, %s90
    %p97 = scmp.eq.s32.totalorder %s17, 1
    %p98 = por %p96, %p97
    %p99 = scmp.ne.s32.totalorder %s90, %s91
    %p100 = scmp.eq.s32.totalorder %s17, 0
    %p101 = por %p99, %p100
    %p102 = scmp.ne.s32.totalorder %s90, %s91
    %p103 = scmp.eq.s32.totalorder %s18, 1
    %p104 = por %p102, %p103
    %p106 = scmp.ne.s32.totalorder %s91, %s105
    %p107 = scmp.eq.s32.totalorder %s18, 0
    %p108 = por %p106, %p107
    %s109 = ssub.s32 %s12, %s19
    %p110 = scmp.eq.s32.totalorder %s109, 0
    %s112 = sadd.s32 %s111, 1
    %s113 = scalar_select %p110, %s111, %s112
    %p116 = pneg %p110
    %p117 = scmp.eq.s32.totalorder %s12, 1
    %p118 = por %p116, %p117
    %p119 = scmp.ne.s32.totalorder %s111, %s114
    %p120 = scmp.eq.s32.totalorder %s12, 0
    %p121 = por %p119, %p120
    %p122 = scmp.ne.s32.totalorder %s111, %s114
    %p123 = scmp.eq.s32.totalorder %s17, 1
    %p124 = por %p122, %p123
    %p125 = scmp.ne.s32.totalorder %s114, %s115
    %p126 = scmp.eq.s32.totalorder %s17, 0
    %p127 = por %p125, %p126
    %p128 = scmp.ne.s32.totalorder %s114, %s115
    %p129 = scmp.eq.s32.totalorder %s18, 1
    %p130 = por %p128, %p129
    %p132 = scmp.ne.s32.totalorder %s115, %s131
    %p133 = scmp.eq.s32.totalorder %s18, 0
    %p134 = por %p132, %p133
    %s135 = ssub.s32 %s12, %s19
    %p136 = scmp.eq.s32.totalorder %s135, 0
    %s138 = sadd.s32 %s137, 1
    %s139 = scalar_select %p136, %s137, %s138
    %p142 = pneg %p136
    %p143 = scmp.eq.s32.totalorder %s12, 1
    %p144 = por %p142, %p143
    %p145 = scmp.ne.s32.totalorder %s137, %s140
    %p146 = scmp.eq.s32.totalorder %s12, 0
    %p147 = por %p145, %p146
    %p148 = scmp.ne.s32.totalorder %s137, %s140
    %p149 = scmp.eq.s32.totalorder %s17, 1
    %p150 = por %p148, %p149
    %p151 = scmp.ne.s32.totalorder %s140, %s141
    %p152 = scmp.eq.s32.totalorder %s17, 0
    %p153 = por %p151, %p152
    %p154 = scmp.ne.s32.totalorder %s140, %s141
    %p155 = scmp.eq.s32.totalorder %s18, 1
    %p156 = por %p154, %p155
    %p158 = scmp.ne.s32.totalorder %s141, %s157
    %p159 = scmp.eq.s32.totalorder %s18, 0
    %p160 = por %p158, %p159
    %p161 = scmp.le.s32.totalorder 1, %s12
    %p162 = scmp.lt.s32.totalorder %s12, 3
    %p163 = pnand %p161, %p162
    %p164 = pneg %p163
    // Predicated region
    $region9: #{_lambda_.8} parent=5 // pred_check
      _
    $region10: #{_lambda_.8} parent=5 // pred_check_branch
      %166 = sbr.rel (%p163) target = $region12
    $region11: #{_lambda_.8} parent=5 // pred_region
      %s167 = ssub.s32 %s12, 1
      // Predicated region
      $region13: #{_lambda_.8} parent=11 // pred_check
        %p168 = pneg %p59
      $region14: #{_lambda_.8} parent=11 // pred_check_branch
        %170 = sbr.rel (%p168) target = $region16
      $region15: #{_lambda_.8} parent=11 // pred_region
        _
      $region16: #{_lambda_.8} parent=11 // pred_fallthru
        _
      // Predicated region
      $region17: #{_lambda_.8} parent=11 // pred_check
        %p171 = pneg %p80
      $region18: #{_lambda_.8} parent=11 // pred_check_branch
        %173 = sbr.rel (%p171) target = $region20
      $region19: #{_lambda_.8} parent=11 // pred_region
        _
      $region20: #{_lambda_.8} parent=11 // pred_fallthru
        _
      // Predicated region
      $region21: #{_lambda_.8} parent=11 // pred_check
        %p174 = pneg %p101
      $region22: #{_lambda_.8} parent=11 // pred_check_branch
        %176 = sbr.rel (%p174) target = $region24
      $region23: #{_lambda_.8} parent=11 // pred_region
        _
      $region24: #{_lambda_.8} parent=11 // pred_fallthru
        _
    $region12: #{_lambda_.8} parent=5 // pred_fallthru
      _
    %p177 = scmp.lt.s32.totalorder %s12, 2
    // Predicated region
    $region25: #{_lambda_.8} parent=5 // pred_check
      %p178 = pneg %p177
    $region26: #{_lambda_.8} parent=5 // pred_check_branch
      %180 = sbr.rel (%p178) target = $region28
    $region27: #{_lambda_.8} parent=5 // pred_region
      // Predicated region
      $region29: #{_lambda_.8} parent=27 // pred_check
        %p181 = pneg %p32
      $region30: #{_lambda_.8} parent=27 // pred_check_branch
        %183 = sbr.rel (%p181) target = $region32
      $region31: #{_lambda_.8} parent=27 // pred_region
        %p184 = scmp.lt.s32.totalorder %s12, 1
        %s185 = scalar_select %p184, %s12, 1
        %s186 = smul.addr %s185, 4
        %s187 = smul.addr %s186, 4
        %s188 = scalar_lea.vmem %s0, %s187
      $region32: #{_lambda_.8} parent=27 // pred_fallthru
        _
    $region28: #{_lambda_.8} parent=5 // pred_fallthru
      _
    %p189 = scmp.le.s32.totalorder 1, %s12
    %p190 = scmp.lt.s32.totalorder %s12, 3
    %p191 = pnand %p189, %p190
    %p192 = pneg %p191
    // Predicated region
    $region33: #{_lambda_.8} parent=5 // pred_check
      _
    $region34: #{_lambda_.8} parent=5 // pred_check_branch
      %194 = sbr.rel (%p191) target = $region36
    $region35: #{_lambda_.8} parent=5 // pred_region
      %s195 = ssub.s32 %s12, 1
      %p196 = scmp.lt.s32.totalorder %s17, 1
      %s197 = scalar_select %p196, %s17, 1
      %s198 = smul.addr %s197, 4
      %s199 = smul.addr %s198, 4
      %s200 = scalar_lea.vmem %s0, %s199
      %p201 = pneg %p38
      %p202 = pneg %p35
      %p203 = pneg %p59
      %p204 = pneg %p56
      %p205 = pneg %p80
      %p206 = pneg %p77
      %p207 = pneg %p101
      %p208 = pneg %p98
      %p209 = pneg %p127
      %p210 = pneg %p124
      %p211 = scmp.lt.s32.totalorder %s17, 1
      %s212 = scalar_select %p211, %s17, 1
      %s213 = smul.addr %s212, 4
      %s214 = smul.addr %s213, 4
      %s215 = scalar_lea.vmem %s4, %s214
      %p216 = pneg %p153
      %p217 = pneg %p150
      %p218 = scmp.lt.s32.totalorder %s17, 1
      %s219 = scalar_select %p218, %s17, 1
      %s220 = smul.addr %s219, 8
      %s221 = scalar_lea.vmem %s5, %s220
      %p222 = scmp.lt.s32.totalorder %s17, 1
      %s223 = scalar_select %p222, %s17, 1
      %s224 = smul.addr %s223, 4
      %s225 = smul.addr %s224, 4
      %s226 = scalar_lea.vmem %s0, %s225
      %p227 = scmp.lt.s32.totalorder %s17, 1
      %s228 = scalar_select %p227, %s17, 1
      %s229 = smul.addr %s228, 4
      %s230 = smul.addr %s229, 4
      %s231 = scalar_lea.vmem %s4, %s230
      %p232 = scmp.lt.s32.totalorder %s17, 1
      %s233 = scalar_select %p232, %s17, 1
      %s234 = smul.addr %s233, 8
      %s235 = scalar_lea.vmem %s5, %s234
      %v237 = vld [vmem:[%s226] sm:$0xff]
      %v238 = vld [vmem:[%s226 + $0x8] sm:$0xff]
      %v239 = vunpack.c.l.bf16 %v237
      %v240 = vunpack.c.h.bf16 %v237
      %v241 = vunpack.c.l.bf16 %v238
      %v242 = vunpack.c.h.bf16 %v238
      %v243 = vld [vmem:[%s2] sm:$0xff]
      %245 = vset.pattern.permute.xlu0 0
      %246 = vperm.xlu0 %245, %v243
      %v247 = vpop.permute.xlu0 %246
      %v249 = vmul.f32 %v239, %v247
      %v250 = vmul.f32 %v240, %v247
      %v251 = vmul.f32 %v241, %v247
      %v252 = vmul.f32 %v242, %v247
      %v253 = vld [vmem:[%s3] sm:$0xff]
      %255 = vset.pattern.permute.xlu0 0
      %256 = vperm.xlu0 %255, %v253
      %v257 = vpop.permute.xlu0 %256
      %v259 = vadd.f32 %v249, %v257
      %v260 = vadd.f32 %v250, %v257
      %v261 = vadd.f32 %v251, %v257
      %v262 = vadd.f32 %v252, %v257
      %v263 = vmax.f32 %v259, 0.0
      %v264 = vmax.f32 %v260, 0.0
      %v265 = vmax.f32 %v261, 0.0
      %v266 = vmax.f32 %v262, 0.0
      %v267 = vlaneseq
      %v268 = vand.u32 %v267, 127
      %v269 = vadd.s32 %v268, 128
      %v270 = vadd.s32 %v268, 256
      %v271 = vadd.s32 %v268, 384
      %vm272 = vcmp.ge.s32.totalorder %v268, 128
      %vm273 = vcmp.ge.s32.totalorder %v269, 128
      %vm274 = vcmp.ge.s32.totalorder %v270, 128
      %vm275 = vcmp.ge.s32.totalorder %v271, 128
      %vm276 = vcmp.lt.s32.totalorder %v268, 384
      %vm277 = vcmp.lt.s32.totalorder %v269, 384
      %vm278 = vcmp.lt.s32.totalorder %v270, 384
      %vm279 = vcmp.lt.s32.totalorder %v271, 384
      %vm280 = vmand %vm272, %vm276
      %vm281 = vmand %vm273, %vm277
      %vm282 = vmand %vm274, %vm278
      %vm283 = vmand %vm275, %vm279
      %v284 = vsel %vm280, 1, 0
      %v285 = vsel %vm281, 1, 0
      %v286 = vsel %vm282, 1, 0
      %v287 = vsel %vm283, 1, 0
      %vm288 = vcmp.eq.s32.totalorder %v284, 1
      %vm289 = vcmp.eq.s32.totalorder %v285, 1
      %vm290 = vcmp.eq.s32.totalorder %v286, 1
      %vm291 = vcmp.eq.s32.totalorder %v287, 1
      %v292 = vsel %vm288, %v263, 0.0
      %v293 = vsel %vm289, %v264, 0.0
      %v294 = vsel %vm290, %v265, 0.0
      %v295 = vsel %vm291, %v266, 0.0
      %vm296 = vcmp.lt.s32.totalorder %v268, 0
      %v297 = vsub.s32 0, %v268
      %v298 = vsel %vm296, %v297, %v268
      %v299 = vshrl.u32 %v298, 4
      %v300 = vand.u32 %v298, 15
      %v301 = vsub.s32 0, %v300
      %v302 = vsel %vm296, %v301, %v300
      %vm303 = vcmp.lt.s32.totalorder %v269, 0
      %v304 = vsub.s32 0, %v269
      %v305 = vsel %vm303, %v304, %v269
      %v306 = vshrl.u32 %v305, 4
      %v307 = vand.u32 %v305, 15
      %v308 = vsub.s32 0, %v307
      %v309 = vsel %vm303, %v308, %v307
      %vm310 = vcmp.ne.s32.totalorder %v302, 0
      %vm311 = vcmp.ne.s32.totalorder %v309, 0
      %vm312 = vcmp.lt.s32.totalorder %v302, 0
      %vm313 = vcmp.lt.s32.totalorder %v309, 0
      %vm314 = vmand %vm312, %vm310
      %vm315 = vmand %vm313, %vm311
      %v316 = vadd.s32 %v302, 16
      %v317 = vadd.s32 %v309, 16
      %v318 = vsel %vm314, %v316, %v302
      %v319 = vsel %vm315, %v317, %v309
      %vm320 = vcmp.eq.s32.totalorder %v318, 0
      %vm321 = vcmp.eq.s32.totalorder %v319, 0
      %v322 = vsel %vm320, 1, 0
      %v323 = vsel %vm321, 1, 0
      %vm324 = vcmp.eq.s32.totalorder %v322, 1
      %vm325 = vcmp.eq.s32.totalorder %v323, 1
      %329 = vrot.lane.b32.xlu0 %v292, 17
      %v330 = vpop.permute.xlu0 %329
      %331 = vrot.lane.b32.xlu0 %v293, 17
      %v332 = vpop.permute.xlu0 %331
      %333 = vrot.lane.b32.xlu0 %v294, 17
      %v334 = vpop.permute.xlu0 %333
      %vm335 = vcmask 138240
      %v336 = vsel %vm335, %v330, %v332
      %v337 = vsel %vm335, %v332, %v334
      %v340 = vsel %vm324, 0.0, %v336
      %v341 = vsel %vm325, 0.0, %v337
      %vm342 = vcmp.eq.s32.totalorder %v318, 15
      %vm343 = vcmp.eq.s32.totalorder %v319, 15
      %v344 = vsel %vm342, 1, 0
      %v345 = vsel %vm343, 1, 0
      %vm346 = vcmp.eq.s32.totalorder %v344, 1
      %vm347 = vcmp.eq.s32.totalorder %v345, 1
      %348 = vrot.lane.b32.xlu0 %v292, 15
      %v349 = vpop.permute.xlu0 %348
      %350 = vrot.lane.b32.xlu0 %v293, 15
      %v351 = vpop.permute.xlu0 %350
      %352 = vrot.lane.b32.xlu0 %v294, 15
      %v353 = vpop.permute.xlu0 %352
      %vm354 = vcmask 121856
      %v355 = vsel %vm354, %v349, %v351
      %v356 = vsel %vm354, %v351, %v353
      %v359 = vsel %vm346, 0.0, %v355
      %v360 = vsel %vm347, 0.0, %v356
      %361 = vrot.lane.b32.xlu0 %v292, 1
      %v362 = vpop.permute.xlu0 %361
      %363 = vrot.lane.b32.xlu0 %v293, 1
      %v364 = vpop.permute.xlu0 %363
      %365 = vrot.lane.b32.xlu0 %v294, 1
      %v366 = vpop.permute.xlu0 %365
      %vm367 = vcmask 7168
      %v368 = vsel %vm367, %v362, %v364
      %v369 = vsel %vm367, %v364, %v366
      %v372 = vsel %vm324, 0.0, %v368
      %v373 = vsel %vm325, 0.0, %v369
      %375 = vrot.lane.b32.xlu0 %v293, 127
      %v376 = vpop.permute.xlu0 %375
      %377 = vrot.lane.b32.xlu0 %v294, 127
      %v378 = vpop.permute.xlu0 %377
      %379 = vrot.lane.b32.xlu0 %v295, 127
      %v380 = vpop.permute.xlu0 %379
      %vm381 = vcmask 1039360
      %v382 = vsel %vm381, %v376, %v378
      %v383 = vsel %vm381, %v378, %v380
      %v386 = vsel %vm346, 0.0, %v382
      %v387 = vsel %vm347, 0.0, %v383
      %388 = vrot.lane.b32.xlu0 %v293, 113
      %v389 = vpop.permute.xlu0 %388
      %390 = vrot.lane.b32.xlu0 %v294, 113
      %v391 = vpop.permute.xlu0 %390
      %392 = vrot.lane.b32.xlu0 %v295, 113
      %v393 = vpop.permute.xlu0 %392
      %vm394 = vcmask 924672
      %v395 = vsel %vm394, %v389, %v391
      %v396 = vsel %vm394, %v391, %v393
      %v399 = vsel %vm324, 0.0, %v395
      %v400 = vsel %vm325, 0.0, %v396
      %401 = vrot.lane.b32.xlu0 %v293, 111
      %v402 = vpop.permute.xlu0 %401
      %403 = vrot.lane.b32.xlu0 %v294, 111
      %v404 = vpop.permute.xlu0 %403
      %405 = vrot.lane.b32.xlu0 %v295, 111
      %v406 = vpop.permute.xlu0 %405
      %vm407 = vcmask 908288
      %v408 = vsel %vm407, %v402, %v404
      %v409 = vsel %vm407, %v404, %v406
      %v412 = vsel %vm346, 0.0, %v408
      %v413 = vsel %vm347, 0.0, %v409
      %414 = vrot.lane.b32.xlu0 %v292, 16
      %v415 = vpop.permute.xlu0 %414
      %416 = vrot.lane.b32.xlu0 %v293, 16
      %v417 = vpop.permute.xlu0 %416
      %418 = vrot.lane.b32.xlu0 %v294, 16
      %v419 = vpop.permute.xlu0 %418
      %vm420 = vcmask 130048
      %v421 = vsel %vm420, %v415, %v417
      %v422 = vsel %vm420, %v417, %v419
      %425 = vrot.lane.b32.xlu0 %v293, 112
      %v426 = vpop.permute.xlu0 %425
      %427 = vrot.lane.b32.xlu0 %v294, 112
      %v428 = vpop.permute.xlu0 %427
      %429 = vrot.lane.b32.xlu0 %v295, 112
      %v430 = vpop.permute.xlu0 %429
      %vm431 = vcmask 916480
      %v432 = vsel %vm431, %v426, %v428
      %v433 = vsel %vm431, %v428, %v430
      %v436 = vpack.c.bf16 %v421, %v340
      %v437 = vpack.c.bf16 %v422, %v341
      %v438 = vpack.c.bf16 %v372, %v359
      %v439 = vpack.c.bf16 %v373, %v360
      %v440 = vpack.c.bf16 %v386, %v293
      %v441 = vpack.c.bf16 %v387, %v294
      %v442 = vpack.c.bf16 %v432, %v399
      %v443 = vpack.c.bf16 %v433, %v400
      %v444 = vpack.c.bf16 %v412, %v412
      %v445 = vpack.c.bf16 %v413, %v413
      %v446 = vld [vmem:[%s1] sm:$0xf]
      %vm447 = vcmask 588800
      %v449 = vsel %vm447, %v446, 0
      %vm451 = vcmask 1043456
      %v453 = vsel %vm451, %v444, 0
      %v456 = vsel %vm451, %v445, 0
      %458 = vmatprep.subr.bf16.mxu0 0
      %459 = vmatpush1.bf16.msra.mxu0 0
      %460 = vmatprep.subr.bf16.mxu0 0
      %461 = vmatpush1.bf16.msra.mxu0 0
      %462 = vmatprep.subr.bf16.mxu0 0
      %463 = vmatpush1.bf16.msra.mxu0 0
      %464 = vmatprep.subr.bf16.mxu0 %v456
      %465 = vmatpush1.bf16.msra.mxu0 %v453
      %466 = vmatprep.subr.bf16.mxu0 %v443
      %467 = vmatpush1.bf16.msra.mxu0 %v442
      %468 = vmatprep.subr.bf16.mxu0 %v441
      %469 = vmatpush1.bf16.msra.mxu0 %v440
      %470 = vmatprep.subr.bf16.mxu0 %v439
      %471 = vmatpush1.bf16.msra.mxu0 %v438
      %472 = vmatprep.subr.bf16.mxu0 %v437
      %473 = vmatpush1.bf16.msra.mxu0 %v436
      %474 = vmatprep.subr.bf16.mxu0 0
      %475 = vmatpush2.bf16.msra.mxu0 0
      %476 = vmatprep.subr.bf16.mxu0 0
      %477 = vmatpush2.bf16.msra.mxu0 0
      %478 = vmatprep.subr.bf16.mxu0 0
      %479 = vmatpush2.bf16.msra.mxu0 0
      %480 = vmatprep.subr.bf16.mxu0 0
      %481 = vmatpush2.bf16.msra.mxu0 0
      %482 = vmatprep.subr.bf16.mxu0 0
      %483 = vmatpush2.bf16.msra.mxu0 0
      %484 = vmatprep.subr.bf16.mxu0 0
      %485 = vmatpush2.bf16.msra.mxu0 0
      %486 = vmatprep.subr.bf16.mxu0 0
      %487 = vmatpush2.bf16.msra.mxu0 0
      %488 = vmatprep.subr.bf16.mxu0 0
      %489 = vmatpush2.bf16.msra.mxu0 0
      %490 = vmatprep.mubr.bf16.mxu0 0
      %491 = vmatmul.mubr.bf16.gmra.mxu0 %v449
      %v492 = vpop.f32.mrf.mxu0
      %v493 = vadd.f32 0.0, %v492
      %v494 = vpop.f32.mrf.mxu0
      %v495 = vadd.f32 0.0, %v494
      %v496 = vpop.f32.mrf.mxu0
      %v497 = vpop.f32.mrf.mxu0
      %498 = vdwg.mxu0
      %v499 = vadd.f32 %v493, %v495
      %500 = vadd.xlane.f32.xlu0 %v499
      %v501 = vpop.xlane.xlu0 %500
      %v502 = vmul.f32 %v493, %v493
      %v503 = vmul.f32 %v495, %v495
      %v504 = vadd.f32 %v502, %v503
      %505 = vadd.xlane.f32.xlu0 %v504
      %v506 = vpop.xlane.xlu0 %505
      %v507 = vsel %vm367, %v501, %v506
      %vm508 = vcmask 15360
      %509 = vst.msk [vmem:[%s235] sm:$0xff] %vm508, %v507
      %v510 = vpack.c.bf16 %v493, %v493
      %v511 = vpack.c.bf16 %v495, %v495
      %v515 = vunpack.c.l.b16 0
      %v516 = vunpack.c.l.b16 %v510
      %v517 = vunpack.c.l.b16 %v511
      %v518 = vpack.c.b16 %v516, %v515
      %v519 = vpack.c.b16 %v515, %v517
      %522 = vst [vmem:[%s231] sm:$0xff] %v518
      %523 = vst [vmem:[%s231 + $0x8] sm:$0xff] %v519
      %p524 = scmp.lt.s32.totalorder %s17, 1
      %s525 = scalar_select %p524, %s17, 1
      %s526 = smul.addr %s525, 4
      %s527 = smul.addr %s526, 4
      %s528 = scalar_lea.vmem %s4, %s527
      %p529 = scmp.lt.s32.totalorder %s17, 1
      %s530 = scalar_select %p529, %s17, 1
      %s531 = smul.addr %s530, 8
      %s532 = scalar_lea.vmem %s5, %s531
      // Predicated region
      $region37: #{_lambda_.8} parent=35 // pred_check
        %p533 = pneg %p124
      $region38: #{_lambda_.8} parent=35 // pred_check_branch
        %535 = sbr.rel (%p533) target = $region40
      $region39: #{_lambda_.8} parent=35 // pred_region
        _
      $region40: #{_lambda_.8} parent=35 // pred_fallthru
        _
      // Predicated region
      $region41: #{_lambda_.8} parent=35 // pred_check
        %p536 = pneg %p150
      $region42: #{_lambda_.8} parent=35 // pred_check_branch
        %538 = sbr.rel (%p536) target = $region44
      $region43: #{_lambda_.8} parent=35 // pred_region
        _
      $region44: #{_lambda_.8} parent=35 // pred_fallthru
        _
    $region36: #{_lambda_.8} parent=5 // pred_fallthru
      _
    %p539 = scmp.le.s32.totalorder 2, %s12
    // Predicated region
    $region45: #{_lambda_.8} parent=5 // pred_check
      %p540 = pneg %p539
    $region46: #{_lambda_.8} parent=5 // pred_check_branch
      %542 = sbr.rel (%p540) target = $region48
    $region47: #{_lambda_.8} parent=5 // pred_region
      %s543 = ssub.s32 %s12, 2
      // Predicated region
      $region49: #{_lambda_.8} parent=47 // pred_check
        %p544 = pneg %p130
      $region50: #{_lambda_.8} parent=47 // pred_check_branch
        %546 = sbr.rel (%p544) target = $region52
      $region51: #{_lambda_.8} parent=47 // pred_region
        %p547 = scmp.lt.s32.totalorder %s18, 1
        %s548 = scalar_select %p547, %s18, 1
        %s549 = smul.addr %s548, 4
        %s550 = smul.addr %s549, 4
        %s551 = scalar_lea.vmem %s4, %s550
      $region52: #{_lambda_.8} parent=47 // pred_fallthru
        _
      // Predicated region
      $region53: #{_lambda_.8} parent=47 // pred_check
        %p552 = pneg %p156
      $region54: #{_lambda_.8} parent=47 // pred_check_branch
        %554 = sbr.rel (%p552) target = $region56
      $region55: #{_lambda_.8} parent=47 // pred_region
        %p555 = scmp.lt.s32.totalorder %s18, 1
        %s556 = scalar_select %p555, %s18, 1
        %s557 = smul.addr %s556, 8
        %s558 = scalar_lea.vmem %s5, %s557
      $region56: #{_lambda_.8} parent=47 // pred_fallthru
        _
    $region48: #{_lambda_.8} parent=5 // pred_fallthru
      _
  $region6: #{_lambda_.8} parent=0 // loop_footer
    %s16 = sadd.s32 1, %s12
  $region7: #{_lambda_.8} parent=0 // loop_footer_branch
    %11 = sbr.rel target = $region3
  $region8: #{_lambda_.8} parent=0 // loop_exit
    _

// kernel: _lambda_.7
$region0: #{_lambda_.7}
  #allocation0 [shape = 'u32[]', space=smem, size = 0x4, offset = 0x4, fixed_abs, tag = 'smem constant byte address 0x4 - core index']
  #allocation1 [shape = 'u32[144,128]{1,0:T(1,128)}', space=vmem, size = 0x12000, scoped, tag = 'internal scratch']
  %s0 = inlined_call_operand.vmem [shape: bf16[2,16,512], index: 0, kind: input, shape index: {}]
  %s1 = inlined_call_operand.vmem [shape: bf16[8,144], index: 1, kind: input, shape index: {}]
  %s2 = inlined_call_operand.vmem [shape: f32[16,1], index: 2, kind: input, shape index: {}]
  %s3 = inlined_call_operand.vmem [shape: f32[16,1], index: 3, kind: input, shape index: {}]
  %s4 = inlined_call_operand.vmem [shape: bf16[2,8,512], index: 4, kind: output, shape index: {0}]
  %s5 = inlined_call_operand.vmem [shape: f32[2,8,2], index: 5, kind: output, shape index: {1}]
  %6 = xla_tuple %s4, %s5
  %s7 = sld [smem:[#allocation0]]
  $region57: #{_lambda_.7} parent=0
    _
  %s9 = ssub.s32 1, %s7
  %s10 = scalar_select 0, %s9, %s7
  loop: start=0, step=1, limit=4
  $region2: #{_lambda_.7} parent=0 // loop_pre_header
    _
  $region3: #{_lambda_.7} parent=0 // loop_header
    %s12 = sphi 0, %s16
    %p13 = scmp.ge.s32.totalorder %s12, 4
    %s22 = sphi 0, %s24
    %s25 = sphi 0, %s22
    %s26 = sphi 0, %s25
    %s42 = sphi 0, %s26
    %s46 = sphi 0, %s46
    %s48 = sphi 0, %s46
    %s49 = sphi 0, %s48
    %s63 = sphi 0, %s49
    %s67 = sphi 0, %s67
    %s69 = sphi 0, %s67
    %s70 = sphi 0, %s69
    %s84 = sphi 0, %s70
    %s88 = sphi 0, %s88
    %s90 = sphi 0, %s88
    %s91 = sphi 0, %s90
    %s105 = sphi 0, %s91
    %s111 = sphi 0, %s113
    %s114 = sphi 0, %s111
    %s115 = sphi 0, %s114
    %s131 = sphi 0, %s115
    %s137 = sphi 0, %s139
    %s140 = sphi 0, %s137
    %s141 = sphi 0, %s140
    %s157 = sphi 0, %s141
  $region4: #{_lambda_.7} parent=0 // loop_header_branch
    %15 = sbr.rel (%p13) target = $region8
  $region5: #{_lambda_.7} parent=0 // loop_body
    %s17 = ssub.s32 %s12, 1
    %s18 = ssub.s32 %s12, 2
    %s19 = sadd.s32 %s12, 1
    %s20 = ssub.s32 %s12, %s19
    %p21 = scmp.eq.s32.totalorder %s20, 0
    %s23 = sadd.s32 %s22, 1
    %s24 = scalar_select %p21, %s22, %s23
    %p27 = pneg %p21
    %p28 = scmp.eq.s32.totalorder %s12, 1
    %p29 = por %p27, %p28
    %p30 = scmp.ne.s32.totalorder %s22, %s25
    %p31 = scmp.eq.s32.totalorder %s12, 0
    %p32 = por %p30, %p31
    %p33 = scmp.ne.s32.totalorder %s22, %s25
    %p34 = scmp.eq.s32.totalorder %s17, 1
    %p35 = por %p33, %p34
    %p36 = scmp.ne.s32.totalorder %s25, %s26
    %p37 = scmp.eq.s32.totalorder %s17, 0
    %p38 = por %p36, %p37
    %p39 = scmp.ne.s32.totalorder %s25, %s26
    %p40 = scmp.eq.s32.totalorder %s18, 1
    %p41 = por %p39, %p40
    %p43 = scmp.ne.s32.totalorder %s26, %s42
    %p44 = scmp.eq.s32.totalorder %s18, 0
    %p45 = por %p43, %p44
    %s47 = sadd.s32 %s46, 1
    %p50 = scmp.eq.s32.totalorder %s12, 1
    %p51 = scmp.ne.s32.totalorder %s46, %s48
    %p52 = scmp.eq.s32.totalorder %s12, 0
    %p53 = por %p51, %p52
    %p54 = scmp.ne.s32.totalorder %s46, %s48
    %p55 = scmp.eq.s32.totalorder %s17, 1
    %p56 = por %p54, %p55
    %p57 = scmp.ne.s32.totalorder %s48, %s49
    %p58 = scmp.eq.s32.totalorder %s17, 0
    %p59 = por %p57, %p58
    %p60 = scmp.ne.s32.totalorder %s48, %s49
    %p61 = scmp.eq.s32.totalorder %s18, 1
    %p62 = por %p60, %p61
    %p64 = scmp.ne.s32.totalorder %s49, %s63
    %p65 = scmp.eq.s32.totalorder %s18, 0
    %p66 = por %p64, %p65
    %s68 = sadd.s32 %s67, 1
    %p71 = scmp.eq.s32.totalorder %s12, 1
    %p72 = scmp.ne.s32.totalorder %s67, %s69
    %p73 = scmp.eq.s32.totalorder %s12, 0
    %p74 = por %p72, %p73
    %p75 = scmp.ne.s32.totalorder %s67, %s69
    %p76 = scmp.eq.s32.totalorder %s17, 1
    %p77 = por %p75, %p76
    %p78 = scmp.ne.s32.totalorder %s69, %s70
    %p79 = scmp.eq.s32.totalorder %s17, 0
    %p80 = por %p78, %p79
    %p81 = scmp.ne.s32.totalorder %s69, %s70
    %p82 = scmp.eq.s32.totalorder %s18, 1
    %p83 = por %p81, %p82
    %p85 = scmp.ne.s32.totalorder %s70, %s84
    %p86 = scmp.eq.s32.totalorder %s18, 0
    %p87 = por %p85, %p86
    %s89 = sadd.s32 %s88, 1
    %p92 = scmp.eq.s32.totalorder %s12, 1
    %p93 = scmp.ne.s32.totalorder %s88, %s90
    %p94 = scmp.eq.s32.totalorder %s12, 0
    %p95 = por %p93, %p94
    %p96 = scmp.ne.s32.totalorder %s88, %s90
    %p97 = scmp.eq.s32.totalorder %s17, 1
    %p98 = por %p96, %p97
    %p99 = scmp.ne.s32.totalorder %s90, %s91
    %p100 = scmp.eq.s32.totalorder %s17, 0
    %p101 = por %p99, %p100
    %p102 = scmp.ne.s32.totalorder %s90, %s91
    %p103 = scmp.eq.s32.totalorder %s18, 1
    %p104 = por %p102, %p103
    %p106 = scmp.ne.s32.totalorder %s91, %s105
    %p107 = scmp.eq.s32.totalorder %s18, 0
    %p108 = por %p106, %p107
    %s109 = ssub.s32 %s12, %s19
    %p110 = scmp.eq.s32.totalorder %s109, 0
    %s112 = sadd.s32 %s111, 1
    %s113 = scalar_select %p110, %s111, %s112
    %p116 = pneg %p110
    %p117 = scmp.eq.s32.totalorder %s12, 1
    %p118 = por %p116, %p117
    %p119 = scmp.ne.s32.totalorder %s111, %s114
    %p120 = scmp.eq.s32.totalorder %s12, 0
    %p121 = por %p119, %p120
    %p122 = scmp.ne.s32.totalorder %s111, %s114
    %p123 = scmp.eq.s32.totalorder %s17, 1
    %p124 = por %p122, %p123
    %p125 = scmp.ne.s32.totalorder %s114, %s115
    %p126 = scmp.eq.s32.totalorder %s17, 0
    %p127 = por %p125, %p126
    %p128 = scmp.ne.s32.totalorder %s114, %s115
    %p129 = scmp.eq.s32.totalorder %s18, 1
    %p130 = por %p128, %p129
    %p132 = scmp.ne.s32.totalorder %s115, %s131
    %p133 = scmp.eq.s32.totalorder %s18, 0
    %p134 = por %p132, %p133
    %s135 = ssub.s32 %s12, %s19
    %p136 = scmp.eq.s32.totalorder %s135, 0
    %s138 = sadd.s32 %s137, 1
    %s139 = scalar_select %p136, %s137, %s138
    %p142 = pneg %p136
    %p143 = scmp.eq.s32.totalorder %s12, 1
    %p144 = por %p142, %p143
    %p145 = scmp.ne.s32.totalorder %s137, %s140
    %p146 = scmp.eq.s32.totalorder %s12, 0
    %p147 = por %p145, %p146
    %p148 = scmp.ne.s32.totalorder %s137, %s140
    %p149 = scmp.eq.s32.totalorder %s17, 1
    %p150 = por %p148, %p149
    %p151 = scmp.ne.s32.totalorder %s140, %s141
    %p152 = scmp.eq.s32.totalorder %s17, 0
    %p153 = por %p151, %p152
    %p154 = scmp.ne.s32.totalorder %s140, %s141
    %p155 = scmp.eq.s32.totalorder %s18, 1
    %p156 = por %p154, %p155
    %p158 = scmp.ne.s32.totalorder %s141, %s157
    %p159 = scmp.eq.s32.totalorder %s18, 0
    %p160 = por %p158, %p159
    %p161 = scmp.le.s32.totalorder 1, %s12
    %p162 = scmp.lt.s32.totalorder %s12, 3
    %p163 = pnand %p161, %p162
    %p164 = pneg %p163
    // Predicated region
    $region9: #{_lambda_.7} parent=5 // pred_check
      _
    $region10: #{_lambda_.7} parent=5 // pred_check_branch
      %166 = sbr.rel (%p163) target = $region12
    $region11: #{_lambda_.7} parent=5 // pred_region
      %s167 = ssub.s32 %s12, 1
      // Predicated region
      $region13: #{_lambda_.7} parent=11 // pred_check
        %p168 = pneg %p59
      $region14: #{_lambda_.7} parent=11 // pred_check_branch
        %170 = sbr.rel (%p168) target = $region16
      $region15: #{_lambda_.7} parent=11 // pred_region
        _
      $region16: #{_lambda_.7} parent=11 // pred_fallthru
        _
      // Predicated region
      $region17: #{_lambda_.7} parent=11 // pred_check
        %p171 = pneg %p80
      $region18: #{_lambda_.7} parent=11 // pred_check_branch
        %173 = sbr.rel (%p171) target = $region20
      $region19: #{_lambda_.7} parent=11 // pred_region
        _
      $region20: #{_lambda_.7} parent=11 // pred_fallthru
        _
      // Predicated region
      $region21: #{_lambda_.7} parent=11 // pred_check
        %p174 = pneg %p101
      $region22: #{_lambda_.7} parent=11 // pred_check_branch
        %176 = sbr.rel (%p174) target = $region24
      $region23: #{_lambda_.7} parent=11 // pred_region
        _
      $region24: #{_lambda_.7} parent=11 // pred_fallthru
        _
    $region12: #{_lambda_.7} parent=5 // pred_fallthru
      _
    %p177 = scmp.lt.s32.totalorder %s12, 2
    // Predicated region
    $region25: #{_lambda_.7} parent=5 // pred_check
      %p178 = pneg %p177
    $region26: #{_lambda_.7} parent=5 // pred_check_branch
      %180 = sbr.rel (%p178) target = $region28
    $region27: #{_lambda_.7} parent=5 // pred_region
      // Predicated region
      $region29: #{_lambda_.7} parent=27 // pred_check
        %p181 = pneg %p32
      $region30: #{_lambda_.7} parent=27 // pred_check_branch
        %183 = sbr.rel (%p181) target = $region32
      $region31: #{_lambda_.7} parent=27 // pred_region
        %p184 = scmp.lt.s32.totalorder %s12, 1
        %s185 = scalar_select %p184, %s12, 1
        %s186 = smul.addr %s185, 8
        %s187 = smul.addr %s186, 4
        %s188 = scalar_lea.vmem %s0, %s187
      $region32: #{_lambda_.7} parent=27 // pred_fallthru
        _
    $region28: #{_lambda_.7} parent=5 // pred_fallthru
      _
    %p189 = scmp.le.s32.totalorder 1, %s12
    %p190 = scmp.lt.s32.totalorder %s12, 3
    %p191 = pnand %p189, %p190
    %p192 = pneg %p191
    // Predicated region
    $region33: #{_lambda_.7} parent=5 // pred_check
      _
    $region34: #{_lambda_.7} parent=5 // pred_check_branch
      %194 = sbr.rel (%p191) target = $region36
    $region35: #{_lambda_.7} parent=5 // pred_region
      %s195 = ssub.s32 %s12, 1
      %p196 = scmp.lt.s32.totalorder %s17, 1
      %s197 = scalar_select %p196, %s17, 1
      %s198 = smul.addr %s197, 8
      %s199 = smul.addr %s198, 4
      %s200 = scalar_lea.vmem %s0, %s199
      %p201 = pneg %p38
      %p202 = pneg %p35
      %p203 = pneg %p59
      %p204 = pneg %p56
      %p205 = pneg %p80
      %p206 = pneg %p77
      %p207 = pneg %p101
      %p208 = pneg %p98
      %p209 = pneg %p127
      %p210 = pneg %p124
      %p211 = scmp.lt.s32.totalorder %s17, 1
      %s212 = scalar_select %p211, %s17, 1
      %s213 = smul.addr %s212, 4
      %s214 = smul.addr %s213, 4
      %s215 = scalar_lea.vmem %s4, %s214
      %p216 = pneg %p153
      %p217 = pneg %p150
      %p218 = scmp.lt.s32.totalorder %s17, 1
      %s219 = scalar_select %p218, %s17, 1
      %s220 = smul.addr %s219, 8
      %s221 = scalar_lea.vmem %s5, %s220
      %p222 = scmp.lt.s32.totalorder %s17, 1
      %s223 = scalar_select %p222, %s17, 1
      %s224 = smul.addr %s223, 8
      %s225 = smul.addr %s224, 4
      %s226 = scalar_lea.vmem %s0, %s225
      %p227 = scmp.lt.s32.totalorder %s17, 1
      %s228 = scalar_select %p227, %s17, 1
      %s229 = smul.addr %s228, 4
      %s230 = smul.addr %s229, 4
      %s231 = scalar_lea.vmem %s4, %s230
      %p232 = scmp.lt.s32.totalorder %s17, 1
      %s233 = scalar_select %p232, %s17, 1
      %s234 = smul.addr %s233, 8
      %s235 = scalar_lea.vmem %s5, %s234
      %v237 = vld [vmem:[%s226] sm:$0xff]
      %v238 = vld [vmem:[%s226 + $0x8] sm:$0xff]
      %v239 = vld [vmem:[%s226 + $0x10] sm:$0xff]
      %v240 = vld [vmem:[%s226 + $0x18] sm:$0xff]
      %v241 = vunpack.c.l.bf16 %v237
      %v242 = vunpack.c.h.bf16 %v237
      %v243 = vunpack.c.l.bf16 %v238
      %v244 = vunpack.c.h.bf16 %v238
      %v245 = vunpack.c.l.bf16 %v239
      %v246 = vunpack.c.h.bf16 %v239
      %v247 = vunpack.c.l.bf16 %v240
      %v248 = vunpack.c.h.bf16 %v240
      %v249 = vld [vmem:[%s2] sm:$0xff]
      %v250 = vld [vmem:[%s2 + $0x8] sm:$0xff]
      %252 = vset.pattern.permute.xlu0 0
      %253 = vperm.xlu0 %252, %v249
      %v254 = vpop.permute.xlu0 %253
      %257 = vset.pattern.permute.xlu0 0
      %258 = vperm.xlu0 %257, %v250
      %v259 = vpop.permute.xlu0 %258
      %v261 = vmul.f32 %v241, %v254
      %v262 = vmul.f32 %v242, %v254
      %v263 = vmul.f32 %v243, %v254
      %v264 = vmul.f32 %v244, %v254
      %v265 = vmul.f32 %v245, %v259
      %v266 = vmul.f32 %v246, %v259
      %v267 = vmul.f32 %v247, %v259
      %v268 = vmul.f32 %v248, %v259
      %v269 = vld [vmem:[%s3] sm:$0xff]
      %v270 = vld [vmem:[%s3 + $0x8] sm:$0xff]
      %272 = vset.pattern.permute.xlu0 0
      %273 = vperm.xlu0 %272, %v269
      %v274 = vpop.permute.xlu0 %273
      %277 = vset.pattern.permute.xlu0 0
      %278 = vperm.xlu0 %277, %v270
      %v279 = vpop.permute.xlu0 %278
      %v281 = vadd.f32 %v261, %v274
      %v282 = vadd.f32 %v262, %v274
      %v283 = vadd.f32 %v263, %v274
      %v284 = vadd.f32 %v264, %v274
      %v285 = vadd.f32 %v265, %v279
      %v286 = vadd.f32 %v266, %v279
      %v287 = vadd.f32 %v267, %v279
      %v288 = vadd.f32 %v268, %v279
      %v289 = vmax.f32 %v281, 0.0
      %v290 = vmax.f32 %v282, 0.0
      %v291 = vmax.f32 %v283, 0.0
      %v292 = vmax.f32 %v284, 0.0
      %v293 = vmax.f32 %v285, 0.0
      %v294 = vmax.f32 %v286, 0.0
      %v295 = vmax.f32 %v287, 0.0
      %v296 = vmax.f32 %v288, 0.0
      %v297 = vlaneseq
      %v298 = vand.u32 %v297, 127
      %v299 = vadd.s32 %v298, 128
      %v300 = vadd.s32 %v298, 256
      %v301 = vadd.s32 %v298, 384
      %vm302 = vcmp.ge.s32.totalorder %v298, 128
      %vm303 = vcmp.ge.s32.totalorder %v299, 128
      %vm304 = vcmp.ge.s32.totalorder %v300, 128
      %vm305 = vcmp.ge.s32.totalorder %v301, 128
      %vm306 = vcmp.lt.s32.totalorder %v298, 384
      %vm307 = vcmp.lt.s32.totalorder %v299, 384
      %vm308 = vcmp.lt.s32.totalorder %v300, 384
      %vm309 = vcmp.lt.s32.totalorder %v301, 384
      %vm310 = vmand %vm302, %vm306
      %vm311 = vmand %vm303, %vm307
      %vm312 = vmand %vm304, %vm308
      %vm313 = vmand %vm305, %vm309
      %v314 = vsel %vm310, 1, 0
      %v315 = vsel %vm311, 1, 0
      %v316 = vsel %vm312, 1, 0
      %v317 = vsel %vm313, 1, 0
      %vm318 = vcmp.eq.s32.totalorder %v314, 1
      %vm319 = vcmp.eq.s32.totalorder %v315, 1
      %vm320 = vcmp.eq.s32.totalorder %v316, 1
      %vm321 = vcmp.eq.s32.totalorder %v317, 1
      %v322 = vsel %vm318, %v289, 0.0
      %v323 = vsel %vm319, %v290, 0.0
      %v324 = vsel %vm320, %v291, 0.0
      %v325 = vsel %vm321, %v292, 0.0
      %v326 = vsel %vm318, %v293, 0.0
      %v327 = vsel %vm319, %v294, 0.0
      %v328 = vsel %vm320, %v295, 0.0
      %v329 = vsel %vm321, %v296, 0.0
      %vm330 = vcmp.lt.s32.totalorder %v298, 0
      %v331 = vsub.s32 0, %v298
      %v332 = vsel %vm330, %v331, %v298
      %v333 = vshrl.u32 %v332, 4
      %v334 = vand.u32 %v332, 15
      %v335 = vsub.s32 0, %v334
      %v336 = vsel %vm330, %v335, %v334
      %vm337 = vcmp.lt.s32.totalorder %v299, 0
      %v338 = vsub.s32 0, %v299
      %v339 = vsel %vm337, %v338, %v299
      %v340 = vshrl.u32 %v339, 4
      %v341 = vand.u32 %v339, 15
      %v342 = vsub.s32 0, %v341
      %v343 = vsel %vm337, %v342, %v341
      %vm344 = vcmp.ne.s32.totalorder %v336, 0
      %vm345 = vcmp.ne.s32.totalorder %v343, 0
      %vm346 = vcmp.lt.s32.totalorder %v336, 0
      %vm347 = vcmp.lt.s32.totalorder %v343, 0
      %vm348 = vmand %vm346, %vm344
      %vm349 = vmand %vm347, %vm345
      %v350 = vadd.s32 %v336, 16
      %v351 = vadd.s32 %v343, 16
      %v352 = vsel %vm348, %v350, %v336
      %v353 = vsel %vm349, %v351, %v343
      %vm354 = vcmp.eq.s32.totalorder %v352, 0
      %vm355 = vcmp.eq.s32.totalorder %v353, 0
      %v356 = vsel %vm354, 1, 0
      %v357 = vsel %vm355, 1, 0
      %vm358 = vcmp.eq.s32.totalorder %v356, 1
      %vm359 = vcmp.eq.s32.totalorder %v357, 1
      %366 = vrot.lane.b32.xlu0 %v322, 17
      %v367 = vpop.permute.xlu0 %366
      %368 = vrot.lane.b32.xlu0 %v323, 17
      %v369 = vpop.permute.xlu0 %368
      %370 = vrot.lane.b32.xlu0 %v324, 17
      %v371 = vpop.permute.xlu0 %370
      %372 = vrot.lane.b32.xlu0 %v326, 17
      %v373 = vpop.permute.xlu0 %372
      %374 = vrot.lane.b32.xlu0 %v327, 17
      %v375 = vpop.permute.xlu0 %374
      %376 = vrot.lane.b32.xlu0 %v328, 17
      %v377 = vpop.permute.xlu0 %376
      %vm378 = vcmask 138240
      %v379 = vsel %vm378, %v367, %v369
      %v380 = vsel %vm378, %v369, %v371
      %v381 = vsel %vm378, %v373, %v375
      %v382 = vsel %vm378, %v375, %v377
      %v387 = vsel %vm358, 0.0, %v379
      %v388 = vsel %vm359, 0.0, %v380
      %v389 = vsel %vm358, 0.0, %v381
      %v390 = vsel %vm359, 0.0, %v382
      %vm391 = vcmp.eq.s32.totalorder %v352, 15
      %vm392 = vcmp.eq.s32.totalorder %v353, 15
      %v393 = vsel %vm391, 1, 0
      %v394 = vsel %vm392, 1, 0
      %vm395 = vcmp.eq.s32.totalorder %v393, 1
      %vm396 = vcmp.eq.s32.totalorder %v394, 1
      %397 = vrot.lane.b32.xlu0 %v322, 15
      %v398 = vpop.permute.xlu0 %397
      %399 = vrot.lane.b32.xlu0 %v323, 15
      %v400 = vpop.permute.xlu0 %399
      %401 = vrot.lane.b32.xlu0 %v324, 15
      %v402 = vpop.permute.xlu0 %401
      %403 = vrot.lane.b32.xlu0 %v326, 15
      %v404 = vpop.permute.xlu0 %403
      %405 = vrot.lane.b32.xlu0 %v327, 15
      %v406 = vpop.permute.xlu0 %405
      %407 = vrot.lane.b32.xlu0 %v328, 15
      %v408 = vpop.permute.xlu0 %407
      %vm409 = vcmask 121856
      %v410 = vsel %vm409, %v398, %v400
      %v411 = vsel %vm409, %v400, %v402
      %v412 = vsel %vm409, %v404, %v406
      %v413 = vsel %vm409, %v406, %v408
      %v418 = vsel %vm395, 0.0, %v410
      %v419 = vsel %vm396, 0.0, %v411
      %v420 = vsel %vm395, 0.0, %v412
      %v421 = vsel %vm396, 0.0, %v413
      %422 = vrot.lane.b32.xlu0 %v322, 1
      %v423 = vpop.permute.xlu0 %422
      %424 = vrot.lane.b32.xlu0 %v323, 1
      %v425 = vpop.permute.xlu0 %424
      %426 = vrot.lane.b32.xlu0 %v324, 1
      %v427 = vpop.permute.xlu0 %426
      %428 = vrot.lane.b32.xlu0 %v326, 1
      %v429 = vpop.permute.xlu0 %428
      %430 = vrot.lane.b32.xlu0 %v327, 1
      %v431 = vpop.permute.xlu0 %430
      %432 = vrot.lane.b32.xlu0 %v328, 1
      %v433 = vpop.permute.xlu0 %432
      %vm434 = vcmask 7168
      %v435 = vsel %vm434, %v423, %v425
      %v436 = vsel %vm434, %v425, %v427
      %v437 = vsel %vm434, %v429, %v431
      %v438 = vsel %vm434, %v431, %v433
      %v443 = vsel %vm358, 0.0, %v435
      %v444 = vsel %vm359, 0.0, %v436
      %v445 = vsel %vm358, 0.0, %v437
      %v446 = vsel %vm359, 0.0, %v438
      %449 = vrot.lane.b32.xlu0 %v323, 127
      %v450 = vpop.permute.xlu0 %449
      %451 = vrot.lane.b32.xlu0 %v324, 127
      %v452 = vpop.permute.xlu0 %451
      %453 = vrot.lane.b32.xlu0 %v325, 127
      %v454 = vpop.permute.xlu0 %453
      %455 = vrot.lane.b32.xlu0 %v327, 127
      %v456 = vpop.permute.xlu0 %455
      %457 = vrot.lane.b32.xlu0 %v328, 127
      %v458 = vpop.permute.xlu0 %457
      %459 = vrot.lane.b32.xlu0 %v329, 127
      %v460 = vpop.permute.xlu0 %459
      %vm461 = vcmask 1039360
      %v462 = vsel %vm461, %v450, %v452
      %v463 = vsel %vm461, %v452, %v454
      %v464 = vsel %vm461, %v456, %v458
      %v465 = vsel %vm461, %v458, %v460
      %v470 = vsel %vm395, 0.0, %v462
      %v471 = vsel %vm396, 0.0, %v463
      %v472 = vsel %vm395, 0.0, %v464
      %v473 = vsel %vm396, 0.0, %v465
      %474 = vrot.lane.b32.xlu0 %v323, 113
      %v475 = vpop.permute.xlu0 %474
      %476 = vrot.lane.b32.xlu0 %v324, 113
      %v477 = vpop.permute.xlu0 %476
      %478 = vrot.lane.b32.xlu0 %v325, 113
      %v479 = vpop.permute.xlu0 %478
      %480 = vrot.lane.b32.xlu0 %v327, 113
      %v481 = vpop.permute.xlu0 %480
      %482 = vrot.lane.b32.xlu0 %v328, 113
      %v483 = vpop.permute.xlu0 %482
      %484 = vrot.lane.b32.xlu0 %v329, 113
      %v485 = vpop.permute.xlu0 %484
      %vm486 = vcmask 924672
      %v487 = vsel %vm486, %v475, %v477
      %v488 = vsel %vm486, %v477, %v479
      %v489 = vsel %vm486, %v481, %v483
      %v490 = vsel %vm486, %v483, %v485
      %v495 = vsel %vm358, 0.0, %v487
      %v496 = vsel %vm359, 0.0, %v488
      %v497 = vsel %vm358, 0.0, %v489
      %v498 = vsel %vm359, 0.0, %v490
      %499 = vrot.lane.b32.xlu0 %v323, 111
      %v500 = vpop.permute.xlu0 %499
      %501 = vrot.lane.b32.xlu0 %v324, 111
      %v502 = vpop.permute.xlu0 %501
      %503 = vrot.lane.b32.xlu0 %v325, 111
      %v504 = vpop.permute.xlu0 %503
      %505 = vrot.lane.b32.xlu0 %v327, 111
      %v506 = vpop.permute.xlu0 %505
      %507 = vrot.lane.b32.xlu0 %v328, 111
      %v508 = vpop.permute.xlu0 %507
      %509 = vrot.lane.b32.xlu0 %v329, 111
      %v510 = vpop.permute.xlu0 %509
      %vm511 = vcmask 908288
      %v512 = vsel %vm511, %v500, %v502
      %v513 = vsel %vm511, %v502, %v504
      %v514 = vsel %vm511, %v506, %v508
      %v515 = vsel %vm511, %v508, %v510
      %v520 = vsel %vm395, 0.0, %v512
      %v521 = vsel %vm396, 0.0, %v513
      %v522 = vsel %vm395, 0.0, %v514
      %v523 = vsel %vm396, 0.0, %v515
      %524 = vrot.lane.b32.xlu0 %v322, 16
      %v525 = vpop.permute.xlu0 %524
      %526 = vrot.lane.b32.xlu0 %v323, 16
      %v527 = vpop.permute.xlu0 %526
      %528 = vrot.lane.b32.xlu0 %v324, 16
      %v529 = vpop.permute.xlu0 %528
      %530 = vrot.lane.b32.xlu0 %v326, 16
      %v531 = vpop.permute.xlu0 %530
      %532 = vrot.lane.b32.xlu0 %v327, 16
      %v533 = vpop.permute.xlu0 %532
      %534 = vrot.lane.b32.xlu0 %v328, 16
      %v535 = vpop.permute.xlu0 %534
      %vm536 = vcmask 130048
      %v537 = vsel %vm536, %v525, %v527
      %v538 = vsel %vm536, %v527, %v529
      %v539 = vsel %vm536, %v531, %v533
      %v540 = vsel %vm536, %v533, %v535
      %545 = vrot.lane.b32.xlu0 %v323, 112
      %v546 = vpop.permute.xlu0 %545
      %547 = vrot.lane.b32.xlu0 %v324, 112
      %v548 = vpop.permute.xlu0 %547
      %549 = vrot.lane.b32.xlu0 %v325, 112
      %v550 = vpop.permute.xlu0 %549
      %551 = vrot.lane.b32.xlu0 %v327, 112
      %v552 = vpop.permute.xlu0 %551
      %553 = vrot.lane.b32.xlu0 %v328, 112
      %v554 = vpop.permute.xlu0 %553
      %555 = vrot.lane.b32.xlu0 %v329, 112
      %v556 = vpop.permute.xlu0 %555
      %vm557 = vcmask 916480
      %v558 = vsel %vm557, %v546, %v548
      %v559 = vsel %vm557, %v548, %v550
      %v560 = vsel %vm557, %v552, %v554
      %v561 = vsel %vm557, %v554, %v556
      %v566 = vpack.c.bf16 %v389, %v387
      %v567 = vpack.c.bf16 %v390, %v388
      %v568 = vpack.c.bf16 %v539, %v537
      %v569 = vpack.c.bf16 %v540, %v538
      %v570 = vpack.c.bf16 %v420, %v418
      %v571 = vpack.c.bf16 %v421, %v419
      %v572 = vpack.c.bf16 %v445, %v443
      %v573 = vpack.c.bf16 %v446, %v444
      %v574 = vpack.c.bf16 %v327, %v323
      %v575 = vpack.c.bf16 %v328, %v324
      %v576 = vpack.c.bf16 %v472, %v470
      %v577 = vpack.c.bf16 %v473, %v471
      %v578 = vpack.c.bf16 %v497, %v495
      %v579 = vpack.c.bf16 %v498, %v496
      %v580 = vpack.c.bf16 %v560, %v558
      %v581 = vpack.c.bf16 %v561, %v559
      %v582 = vpack.c.bf16 %v522, %v520
      %v583 = vpack.c.bf16 %v523, %v521
      %v584 = vld [vmem:[%s1] sm:$0xff]
      %v586 = vunpack.c.l.b16 %v584
      %v587 = vunpack.c.h.b16 %v584
      %v588 = vpack.c.b16 %v586, %v586
      %v589 = vpack.c.b16 %v587, %v587
      %v592 = vsel %vm536, %v589, 0
      %594 = vmatprep.subr.bf16.mxu0 %v581
      %595 = vmatpush1.bf16.msra.mxu0 %v580
      %596 = vmatprep.subr.bf16.mxu0 %v579
      %597 = vmatpush1.bf16.msra.mxu0 %v578
      %598 = vmatprep.subr.bf16.mxu0 %v577
      %599 = vmatpush1.bf16.msra.mxu0 %v576
      %600 = vmatprep.subr.bf16.mxu0 %v575
      %601 = vmatpush1.bf16.msra.mxu0 %v574
      %602 = vmatprep.subr.bf16.mxu0 %v573
      %603 = vmatpush1.bf16.msra.mxu0 %v572
      %604 = vmatprep.subr.bf16.mxu0 %v571
      %605 = vmatpush1.bf16.msra.mxu0 %v570
      %606 = vmatprep.subr.bf16.mxu0 %v569
      %607 = vmatpush1.bf16.msra.mxu0 %v568
      %608 = vmatprep.subr.bf16.mxu0 %v567
      %609 = vmatpush1.bf16.msra.mxu0 %v566
      %610 = vmatprep.subr.bf16.mxu0 0
      %611 = vmatpush2.bf16.msra.mxu0 0
      %612 = vmatprep.subr.bf16.mxu0 0
      %613 = vmatpush2.bf16.msra.mxu0 0
      %614 = vmatprep.subr.bf16.mxu0 0
      %615 = vmatpush2.bf16.msra.mxu0 0
      %616 = vmatprep.subr.bf16.mxu0 0
      %617 = vmatpush2.bf16.msra.mxu0 0
      %618 = vmatprep.subr.bf16.mxu0 0
      %619 = vmatpush2.bf16.msra.mxu0 0
      %620 = vmatprep.subr.bf16.mxu0 0
      %621 = vmatpush2.bf16.msra.mxu0 0
      %622 = vmatprep.subr.bf16.mxu0 0
      %623 = vmatpush2.bf16.msra.mxu0 0
      %624 = vmatprep.subr.bf16.mxu0 %v583
      %625 = vmatpush2.bf16.msra.mxu0 %v582
      %626 = vmatprep.mubr.bf16.mxu0 %v592
      %627 = vmatmul.mubr.bf16.gmra.mxu0 %v588
      %v628 = vpop.f32.mrf.mxu0
      %v629 = vadd.f32 0.0, %v628
      %v630 = vpop.f32.mrf.mxu0
      %v631 = vadd.f32 0.0, %v630
      %v632 = vpop.f32.mrf.mxu0
      %v633 = vpop.f32.mrf.mxu0
      %634 = vdwg.mxu0
      %v635 = vadd.f32 %v629, %v631
      %636 = vadd.xlane.f32.xlu0 %v635
      %v637 = vpop.xlane.xlu0 %636
      %v638 = vmul.f32 %v629, %v629
      %v639 = vmul.f32 %v631, %v631
      %v640 = vadd.f32 %v638, %v639
      %641 = vadd.xlane.f32.xlu0 %v640
      %v642 = vpop.xlane.xlu0 %641
      %v643 = vsel %vm434, %v637, %v642
      %vm644 = vcmask 15360
      %645 = vst.msk [vmem:[%s235] sm:$0xff] %vm644, %v643
      %v646 = vpack.c.bf16 %v629, %v629
      %v647 = vpack.c.bf16 %v631, %v631
      %v651 = vunpack.c.l.b16 0
      %v652 = vunpack.c.l.b16 %v646
      %v653 = vunpack.c.l.b16 %v647
      %v654 = vpack.c.b16 %v652, %v651
      %v655 = vpack.c.b16 %v651, %v653
      %658 = vst [vmem:[%s231] sm:$0xff] %v654
      %659 = vst [vmem:[%s231 + $0x8] sm:$0xff] %v655
      %p660 = scmp.lt.s32.totalorder %s17, 1
      %s661 = scalar_select %p660, %s17, 1
      %s662 = smul.addr %s661, 4
      %s663 = smul.addr %s662, 4
      %s664 = scalar_lea.vmem %s4, %s663
      %p665 = scmp.lt.s32.totalorder %s17, 1
      %s666 = scalar_select %p665, %s17, 1
      %s667 = smul.addr %s666, 8
      %s668 = scalar_lea.vmem %s5, %s667
      // Predicated region
      $region37: #{_lambda_.7} parent=35 // pred_check
        %p669 = pneg %p124
      $region38: #{_lambda_.7} parent=35 // pred_check_branch
        %671 = sbr.rel (%p669) target = $region40
      $region39: #{_lambda_.7} parent=35 // pred_region
        _
      $region40: #{_lambda_.7} parent=35 // pred_fallthru
        _
      // Predicated region
      $region41: #{_lambda_.7} parent=35 // pred_check
        %p672 = pneg %p150
      $region42: #{_lambda_.7} parent=35 // pred_check_branch
        %674 = sbr.rel (%p672) target = $region44
      $region43: #{_lambda_.7} parent=35 // pred_region
        _
      $region44: #{_lambda_.7} parent=35 // pred_fallthru
        _
    $region36: #{_lambda_.7} parent=5 // pred_fallthru
      _
    %p675 = scmp.le.s32.totalorder 2, %s12
    // Predicated region
    $region45: #{_lambda_.7} parent=5 // pred_check
      %p676 = pneg %p675
    $region46: #{_lambda_.7} parent=5 // pred_check_branch
      %678 = sbr.rel (%p676) target = $region48
    $region47: #{_lambda_.7} parent=5 // pred_region
      %s679 = ssub.s32 %s12, 2
      // Predicated region
      $region49: #{_lambda_.7} parent=47 // pred_check
        %p680 = pneg %p130
      $region50: #{_lambda_.7} parent=47 // pred_check_branch
        %682 = sbr.rel (%p680) target = $region52
      $region51: #{_lambda_.7} parent=47 // pred_region
        %p683 = scmp.lt.s32.totalorder %s18, 1
        %s684 = scalar_select %p683, %s18, 1
        %s685 = smul.addr %s684, 4
        %s686 = smul.addr %s685, 4
        %s687 = scalar_lea.vmem %s4, %s686
      $region52: #{_lambda_.7} parent=47 // pred_fallthru
        _
      // Predicated region
      $region53: #{_lambda_.7} parent=47 // pred_check
        %p688 = pneg %p156
      $region54: #{_lambda_.7} parent=47 // pred_check_branch
        %690 = sbr.rel (%p688) target = $region56
      $region55: #{_lambda_.7} parent=47 // pred_region
        %p691 = scmp.lt.s32.totalorder %s18, 1
        %s692 = scalar_select %p691, %s18, 1
        %s693 = smul.addr %s692, 8
        %s694 = scalar_lea.vmem %s5, %s693
      $region56: #{_lambda_.7} parent=47 // pred_fallthru
        _
    $region48: #{_lambda_.7} parent=5 // pred_fallthru
      _
  $region6: #{_lambda_.7} parent=0 // loop_footer
    %s16 = sadd.s32 1, %s12
  $region7: #{_lambda_.7} parent=0 // loop_footer_branch
    %11 = sbr.rel target = $region3
  $region8: #{_lambda_.7} parent=0 // loop_exit
    _

// kernel: _lambda_.9
$region0: #{_lambda_.9}
  #allocation0 [shape = 'u32[]', space=smem, size = 0x4, offset = 0x4, fixed_abs, tag = 'smem constant byte address 0x4 - core index']
  #allocation1 [shape = 'u32[144,128]{1,0:T(1,128)}', space=vmem, size = 0x12000, scoped, tag = 'internal scratch']
  %s0 = inlined_call_operand.vmem [shape: bf16[2,8,512], index: 0, kind: input, shape index: {}]
  %s1 = inlined_call_operand.vmem [shape: f32[8,1], index: 1, kind: input, shape index: {}]
  %s2 = inlined_call_operand.vmem [shape: f32[8,1], index: 2, kind: input, shape index: {}]
  %s3 = inlined_call_operand.vmem [shape: f32[2,8,256], index: 3, kind: output, shape index: {}]
  %s4 = sld [smem:[#allocation0]]
  $region45: #{_lambda_.9} parent=0
    _
  %s6 = ssub.s32 1, %s4
  %s7 = scalar_select 0, %s6, %s4
  loop: start=0, step=1, limit=4
  $region2: #{_lambda_.9} parent=0 // loop_pre_header
    _
  $region3: #{_lambda_.9} parent=0 // loop_header
    %s9 = sphi 0, %s13
    %p10 = scmp.ge.s32.totalorder %s9, 4
    %s19 = sphi 0, %s21
    %s22 = sphi 0, %s19
    %s23 = sphi 0, %s22
    %s39 = sphi 0, %s23
    %s43 = sphi 0, %s43
    %s45 = sphi 0, %s43
    %s46 = sphi 0, %s45
    %s60 = sphi 0, %s46
    %s64 = sphi 0, %s64
    %s66 = sphi 0, %s64
    %s67 = sphi 0, %s66
    %s81 = sphi 0, %s67
    %s87 = sphi 0, %s89
    %s90 = sphi 0, %s87
    %s91 = sphi 0, %s90
    %s107 = sphi 0, %s91
  $region4: #{_lambda_.9} parent=0 // loop_header_branch
    %12 = sbr.rel (%p10) target = $region8
  $region5: #{_lambda_.9} parent=0 // loop_body
    %s14 = ssub.s32 %s9, 1
    %s15 = ssub.s32 %s9, 2
    %s16 = sadd.s32 %s9, 1
    %s17 = ssub.s32 %s9, %s16
    %p18 = scmp.eq.s32.totalorder %s17, 0
    %s20 = sadd.s32 %s19, 1
    %s21 = scalar_select %p18, %s19, %s20
    %p24 = pneg %p18
    %p25 = scmp.eq.s32.totalorder %s9, 1
    %p26 = por %p24, %p25
    %p27 = scmp.ne.s32.totalorder %s19, %s22
    %p28 = scmp.eq.s32.totalorder %s9, 0
    %p29 = por %p27, %p28
    %p30 = scmp.ne.s32.totalorder %s19, %s22
    %p31 = scmp.eq.s32.totalorder %s14, 1
    %p32 = por %p30, %p31
    %p33 = scmp.ne.s32.totalorder %s22, %s23
    %p34 = scmp.eq.s32.totalorder %s14, 0
    %p35 = por %p33, %p34
    %p36 = scmp.ne.s32.totalorder %s22, %s23
    %p37 = scmp.eq.s32.totalorder %s15, 1
    %p38 = por %p36, %p37
    %p40 = scmp.ne.s32.totalorder %s23, %s39
    %p41 = scmp.eq.s32.totalorder %s15, 0
    %p42 = por %p40, %p41
    %s44 = sadd.s32 %s43, 1
    %p47 = scmp.eq.s32.totalorder %s9, 1
    %p48 = scmp.ne.s32.totalorder %s43, %s45
    %p49 = scmp.eq.s32.totalorder %s9, 0
    %p50 = por %p48, %p49
    %p51 = scmp.ne.s32.totalorder %s43, %s45
    %p52 = scmp.eq.s32.totalorder %s14, 1
    %p53 = por %p51, %p52
    %p54 = scmp.ne.s32.totalorder %s45, %s46
    %p55 = scmp.eq.s32.totalorder %s14, 0
    %p56 = por %p54, %p55
    %p57 = scmp.ne.s32.totalorder %s45, %s46
    %p58 = scmp.eq.s32.totalorder %s15, 1
    %p59 = por %p57, %p58
    %p61 = scmp.ne.s32.totalorder %s46, %s60
    %p62 = scmp.eq.s32.totalorder %s15, 0
    %p63 = por %p61, %p62
    %s65 = sadd.s32 %s64, 1
    %p68 = scmp.eq.s32.totalorder %s9, 1
    %p69 = scmp.ne.s32.totalorder %s64, %s66
    %p70 = scmp.eq.s32.totalorder %s9, 0
    %p71 = por %p69, %p70
    %p72 = scmp.ne.s32.totalorder %s64, %s66
    %p73 = scmp.eq.s32.totalorder %s14, 1
    %p74 = por %p72, %p73
    %p75 = scmp.ne.s32.totalorder %s66, %s67
    %p76 = scmp.eq.s32.totalorder %s14, 0
    %p77 = por %p75, %p76
    %p78 = scmp.ne.s32.totalorder %s66, %s67
    %p79 = scmp.eq.s32.totalorder %s15, 1
    %p80 = por %p78, %p79
    %p82 = scmp.ne.s32.totalorder %s67, %s81
    %p83 = scmp.eq.s32.totalorder %s15, 0
    %p84 = por %p82, %p83
    %s85 = ssub.s32 %s9, %s16
    %p86 = scmp.eq.s32.totalorder %s85, 0
    %s88 = sadd.s32 %s87, 1
    %s89 = scalar_select %p86, %s87, %s88
    %p92 = pneg %p86
    %p93 = scmp.eq.s32.totalorder %s9, 1
    %p94 = por %p92, %p93
    %p95 = scmp.ne.s32.totalorder %s87, %s90
    %p96 = scmp.eq.s32.totalorder %s9, 0
    %p97 = por %p95, %p96
    %p98 = scmp.ne.s32.totalorder %s87, %s90
    %p99 = scmp.eq.s32.totalorder %s14, 1
    %p100 = por %p98, %p99
    %p101 = scmp.ne.s32.totalorder %s90, %s91
    %p102 = scmp.eq.s32.totalorder %s14, 0
    %p103 = por %p101, %p102
    %p104 = scmp.ne.s32.totalorder %s90, %s91
    %p105 = scmp.eq.s32.totalorder %s15, 1
    %p106 = por %p104, %p105
    %p108 = scmp.ne.s32.totalorder %s91, %s107
    %p109 = scmp.eq.s32.totalorder %s15, 0
    %p110 = por %p108, %p109
    %p111 = scmp.le.s32.totalorder 1, %s9
    %p112 = scmp.lt.s32.totalorder %s9, 3
    %p113 = pnand %p111, %p112
    %p114 = pneg %p113
    // Predicated region
    $region9: #{_lambda_.9} parent=5 // pred_check
      _
    $region10: #{_lambda_.9} parent=5 // pred_check_branch
      %116 = sbr.rel (%p113) target = $region12
    $region11: #{_lambda_.9} parent=5 // pred_region
      %s117 = ssub.s32 %s9, 1
      // Predicated region
      $region13: #{_lambda_.9} parent=11 // pred_check
        %p118 = pneg %p56
      $region14: #{_lambda_.9} parent=11 // pred_check_branch
        %120 = sbr.rel (%p118) target = $region16
      $region15: #{_lambda_.9} parent=11 // pred_region
        _
      $region16: #{_lambda_.9} parent=11 // pred_fallthru
        _
      // Predicated region
      $region17: #{_lambda_.9} parent=11 // pred_check
        %p121 = pneg %p77
      $region18: #{_lambda_.9} parent=11 // pred_check_branch
        %123 = sbr.rel (%p121) target = $region20
      $region19: #{_lambda_.9} parent=11 // pred_region
        _
      $region20: #{_lambda_.9} parent=11 // pred_fallthru
        _
    $region12: #{_lambda_.9} parent=5 // pred_fallthru
      _
    %p124 = scmp.lt.s32.totalorder %s9, 2
    // Predicated region
    $region21: #{_lambda_.9} parent=5 // pred_check
      %p125 = pneg %p124
    $region22: #{_lambda_.9} parent=5 // pred_check_branch
      %127 = sbr.rel (%p125) target = $region24
    $region23: #{_lambda_.9} parent=5 // pred_region
      // Predicated region
      $region25: #{_lambda_.9} parent=23 // pred_check
        %p128 = pneg %p29
      $region26: #{_lambda_.9} parent=23 // pred_check_branch
        %130 = sbr.rel (%p128) target = $region28
      $region27: #{_lambda_.9} parent=23 // pred_region
        %p131 = scmp.lt.s32.totalorder %s9, 1
        %s132 = scalar_select %p131, %s9, 1
        %s133 = smul.addr %s132, 4
        %s134 = smul.addr %s133, 4
        %s135 = scalar_lea.vmem %s0, %s134
      $region28: #{_lambda_.9} parent=23 // pred_fallthru
        _
    $region24: #{_lambda_.9} parent=5 // pred_fallthru
      _
    %p136 = scmp.le.s32.totalorder 1, %s9
    %p137 = scmp.lt.s32.totalorder %s9, 3
    %p138 = pnand %p136, %p137
    %p139 = pneg %p138
    // Predicated region
    $region29: #{_lambda_.9} parent=5 // pred_check
      _
    $region30: #{_lambda_.9} parent=5 // pred_check_branch
      %141 = sbr.rel (%p138) target = $region32
    $region31: #{_lambda_.9} parent=5 // pred_region
      %s142 = ssub.s32 %s9, 1
      %p143 = scmp.lt.s32.totalorder %s14, 1
      %s144 = scalar_select %p143, %s14, 1
      %s145 = smul.addr %s144, 4
      %s146 = smul.addr %s145, 4
      %s147 = scalar_lea.vmem %s0, %s146
      %p148 = pneg %p35
      %p149 = pneg %p32
      %p150 = pneg %p56
      %p151 = pneg %p53
      %p152 = pneg %p77
      %p153 = pneg %p74
      %p154 = pneg %p103
      %p155 = pneg %p100
      %p156 = scmp.lt.s32.totalorder %s14, 1
      %s157 = scalar_select %p156, %s14, 1
      %s158 = smul.addr %s157, 2
      %s159 = smul.addr %s158, 8
      %s160 = scalar_lea.vmem %s3, %s159
      %p161 = scmp.lt.s32.totalorder %s14, 1
      %s162 = scalar_select %p161, %s14, 1
      %s163 = smul.addr %s162, 4
      %s164 = smul.addr %s163, 4
      %s165 = scalar_lea.vmem %s0, %s164
      %p166 = scmp.lt.s32.totalorder %s14, 1
      %s167 = scalar_select %p166, %s14, 1
      %s168 = smul.addr %s167, 2
      %s169 = smul.addr %s168, 8
      %s170 = scalar_lea.vmem %s3, %s169
      %v171 = vld [vmem:[%s165] sm:$0xff]
      %v172 = vld [vmem:[%s165 + $0x8] sm:$0xff]
      %v173 = vunpack.c.h.bf16 %v171
      %v174 = vunpack.c.l.bf16 %v172
      %v175 = vld [vmem:[%s1] sm:$0xff]
      %177 = vset.pattern.permute.xlu0 0
      %178 = vperm.xlu0 %177, %v175
      %v179 = vpop.permute.xlu0 %178
      %v181 = vmul.f32 %v173, %v179
      %v182 = vmul.f32 %v174, %v179
      %v183 = vld [vmem:[%s2] sm:$0xff]
      %185 = vset.pattern.permute.xlu0 0
      %186 = vperm.xlu0 %185, %v183
      %v187 = vpop.permute.xlu0 %186
      %v189 = vadd.f32 %v181, %v187
      %v190 = vadd.f32 %v182, %v187
      %v191 = vmax.f32 %v189, 0.0
      %v192 = vmax.f32 %v190, 0.0
      %193 = vst [vmem:[%s170] sm:$0xff] %v191
      %194 = vst [vmem:[%s170 + $0x8] sm:$0xff] %v192
      %p195 = scmp.lt.s32.totalorder %s14, 1
      %s196 = scalar_select %p195, %s14, 1
      %s197 = smul.addr %s196, 2
      %s198 = smul.addr %s197, 8
      %s199 = scalar_lea.vmem %s3, %s198
      // Predicated region
      $region33: #{_lambda_.9} parent=31 // pred_check
        %p200 = pneg %p100
      $region34: #{_lambda_.9} parent=31 // pred_check_branch
        %202 = sbr.rel (%p200) target = $region36
      $region35: #{_lambda_.9} parent=31 // pred_region
        _
      $region36: #{_lambda_.9} parent=31 // pred_fallthru
        _
    $region32: #{_lambda_.9} parent=5 // pred_fallthru
      _
    %p203 = scmp.le.s32.totalorder 2, %s9
    // Predicated region
    $region37: #{_lambda_.9} parent=5 // pred_check
      %p204 = pneg %p203
    $region38: #{_lambda_.9} parent=5 // pred_check_branch
      %206 = sbr.rel (%p204) target = $region40
    $region39: #{_lambda_.9} parent=5 // pred_region
      %s207 = ssub.s32 %s9, 2
      // Predicated region
      $region41: #{_lambda_.9} parent=39 // pred_check
        %p208 = pneg %p106
      $region42: #{_lambda_.9} parent=39 // pred_check_branch
        %210 = sbr.rel (%p208) target = $region44
      $region43: #{_lambda_.9} parent=39 // pred_region
        %p211 = scmp.lt.s32.totalorder %s15, 1
        %s212 = scalar_select %p211, %s15, 1
        %s213 = smul.addr %s212, 2
        %s214 = smul.addr %s213, 8
        %s215 = scalar_lea.vmem %s3, %s214
      $region44: #{_lambda_.9} parent=39 // pred_fallthru
        _
    $region40: #{_lambda_.9} parent=5 // pred_fallthru
      _
  $region6: #{_lambda_.9} parent=0 // loop_footer
    %s13 = sadd.s32 1, %s9
  $region7: #{_lambda_.9} parent=0 // loop_footer_branch
    %8 = sbr.rel target = $region3
  $region8: #{_lambda_.9} parent=0 // loop_exit
    _

</llo_original>
